<compile_context>
chip_gen: v7x
topology: tpu7x:2x2x1
jax: 0.10.0
libtpu: 0.0.40
codegen_flags: <defaults>
</compile_context>

<pallas_src>
import functools
import math

import jax
import jax.numpy as jnp
from jax import lax
from jax.experimental import pallas as pl
from jax.experimental.pallas import tpu as pltpu

BN_EPS = 1e-5


# ------------------------------ fused kernel -------------------------------

def _bottleneck_kernel(x_ref, w1_ref, b1_ref,
                       w2_ref, b2_ref,
                       w3_ref, b3_ref,
                       wd_ref, bd_ref,
                       sew1_ref, seb1_ref, sew2_ref, seb2_ref,
                       o_ref, y1p_ref, acc_ref, *, use_downsample):
    """Entire bottleneck block for one batch element (one grid step).

    BN scales are already folded into the (bf16) conv weights; only the folded
    biases are applied here.
    """
    _, H, W, Cin = x_ref.shape
    mid = w2_ref.shape[2]
    Cout = w3_ref.shape[1]
    cdt = w1_ref.dtype  # matmul compute dtype (bf16); accumulation is f32

    x2 = x_ref[0].reshape(H * W, Cin)                        # (HW, Cin) f32

    # ---- conv1 (1x1) + bias + ReLU -> padded VMEM scratch ----
    y1 = jnp.dot(x2.astype(cdt), w1_ref[...],
                 preferred_element_type=jnp.float32)
    y1 = jnp.maximum(y1 + b1_ref[...], 0.0)                  # (HW, mid)
    y1p_ref[...] = jnp.zeros_like(y1p_ref)                   # zero halo ring
    y1p_ref[1:H + 1, 1:W + 1, :] = y1.reshape(H, W, mid)

    # ---- conv2 (3x3, pad=1) + bias + ReLU: 9 taps into a VMEM accumulator ----
    acc_ref[...] = jnp.zeros_like(acc_ref)
    for dh in range(3):
        for dw in range(3):
            tap = y1p_ref[dh:dh + H, dw:dw + W, :].reshape(H * W, mid)
            acc_ref[...] += jnp.dot(tap.astype(cdt), w2_ref[dh * 3 + dw],
                                    preferred_element_type=jnp.float32)
    y2 = jnp.maximum(acc_ref[...] + b2_ref[...], 0.0)

    # ---- conv3 (1x1) + bias ----
    y3 = jnp.dot(y2.astype(cdt), w3_ref[...],
                 preferred_element_type=jnp.float32)
    y3 = y3 + b3_ref[...]                                    # (HW, Cout)

    # ---- squeeze-excite gate (global avg pool over this image) ----
    pooled = jnp.sum(y3, axis=0, keepdims=True) * (1.0 / (H * W))  # (1, Cout)
    h = jnp.maximum(
        jnp.dot(pooled.astype(cdt), sew1_ref[...],
                preferred_element_type=jnp.float32) + seb1_ref[...], 0.0)
    z = jnp.dot(h.astype(cdt), sew2_ref[...],
                preferred_element_type=jnp.float32) + seb2_ref[...]
    gate = 1.0 / (1.0 + jnp.exp(-z))                         # sigmoid, (1, Cout)

    # ---- fused downsample / identity + residual add + final ReLU ----
    if use_downsample:
        idn = jnp.dot(x2.astype(cdt), wd_ref[...],
                      preferred_element_type=jnp.float32)
        idn = idn + bd_ref[...]
    else:
        idn = x2                                             # Cin == Cout here
    out = jnp.maximum(y3 * gate + idn, 0.0)
    o_ref[...] = out.reshape(1, H, W, Cout).astype(o_ref.dtype)


# ------------------------- parameter initialization ------------------------

def _folded_bn(key, c):
    k1, k2, k3, k4 = jax.random.split(key, 4)
    gamma = 1.0 + 0.1 * jax.random.normal(k1, (c,), jnp.float32)
    beta = 0.1 * jax.random.normal(k2, (c,), jnp.float32)
    mean = 0.1 * jax.random.normal(k3, (c,), jnp.float32)
    var = 1.0 + 0.1 * jnp.abs(jax.random.normal(k4, (c,), jnp.float32))
    scale = gamma / jnp.sqrt(var + BN_EPS)
    bias = beta - mean * scale
    return scale.reshape(1, c), bias.reshape(1, c)


def init_bottleneck_params(key, in_channels, out_channels):
    mid = out_channels // 4
    se_mid = max(1, out_channels // 4)   # SE reduction = 4 (see TODO above)
    ks = jax.random.split(key, 12)
    p = {}
    p['w1'] = 0.1 * jax.random.normal(ks[0], (in_channels, mid), jnp.float32)
    p['bn1_scale'], p['bn1_bias'] = _folded_bn(ks[1], mid)
    p['w2'] = 0.1 * jax.random.normal(ks[2], (9, mid, mid), jnp.float32)
    p['bn2_scale'], p['bn2_bias'] = _folded_bn(ks[3], mid)
    p['w3'] = 0.1 * jax.random.normal(ks[4], (mid, out_channels), jnp.float32)
    p['bn3_scale'], p['bn3_bias'] = _folded_bn(ks[5], out_channels)
    p['wd'] = 0.1 * jax.random.normal(ks[6], (in_channels, out_channels), jnp.float32)
    p['bnd_scale'], p['bnd_bias'] = _folded_bn(ks[7], out_channels)
    p['se_w1'] = 0.1 * jax.random.normal(ks[8], (out_channels, se_mid), jnp.float32)
    p['se_b1'] = 0.1 * jax.random.normal(ks[9], (1, se_mid), jnp.float32)
    p['se_w2'] = 0.1 * jax.random.normal(ks[10], (se_mid, out_channels), jnp.float32)
    p['se_b2'] = 0.1 * jax.random.normal(ks[11], (1, out_channels), jnp.float32)
    return p


# -------------------------------- forward ----------------------------------

def bottleneck_forward(x_nchw, params, stride=1):
    p = params
    x = jnp.transpose(x_nchw, (0, 2, 3, 1)).astype(jnp.float32)  # NCHW -> NHWC
    N, H, W, Cin = x.shape
    mid = p['w2'].shape[1]
    out_c = p['w3'].shape[1]

    if stride != 1:
        # TODO(synk): fold the stride into a spatial-tile index_map for large
        # production shapes; at test sizes this one-off slice is cheap glue.
        x = x[:, ::stride, ::stride, :]
    Hs, Ws = x.shape[1], x.shape[2]
    use_downsample = (Cin != out_c) or (Hs, Ws) != (H, W)

    # bf16 matmul operands (native MXU dtype on v6e/v7x); BN per-channel scale
    # folded into the weights in f32 *before* the bf16 cast; biases stay f32.
    cdt = jnp.bfloat16
    w1 = (p['w1'] * p['bn1_scale']).astype(cdt)              # (Cin, mid)
    w2 = (p['w2'] * p['bn2_scale'][None]).astype(cdt)        # (9, mid, mid)
    w3 = (p['w3'] * p['bn3_scale']).astype(cdt)              # (mid, out_c)
    wd = (p['wd'] * p['bnd_scale']).astype(cdt)              # (Cin, out_c)

    ins = (x,
           w1, p['bn1_bias'],
           w2, p['bn2_bias'],
           w3, p['bn3_bias'],
           wd, p['bnd_bias'],
           p['se_w1'].astype(cdt), p['se_b1'],
           p['se_w2'].astype(cdt), p['se_b2'])

    def _full(a):
        return pl.BlockSpec(a.shape, lambda n, _nd=a.ndim: (0,) * _nd)

    in_specs = [pl.BlockSpec((1, Hs, Ws, Cin), lambda n: (n, 0, 0, 0))]
    in_specs += [_full(a) for a in ins[1:]]
    out_specs = pl.BlockSpec((1, Hs, Ws, out_c), lambda n: (n, 0, 0, 0))

    scratch_shapes = [pltpu.VMEM((Hs + 2, Ws + 2, mid), jnp.float32),  # padded y1
                      pltpu.VMEM((Hs * Ws, mid), jnp.float32)]         # conv2 acc

    # VMEM budget: double-buffered per-step blocks + scratch + compiler temps.
    def _nbytes(a):
        return math.prod(a.shape) * jnp.dtype(a.dtype).itemsize
    step_bytes = (Hs * Ws * Cin * 4 + Hs * Ws * out_c * 4
                  + sum(_nbytes(a) for a in ins[1:]))
    scratch_bytes = ((Hs + 2) * (Ws + 2) * mid + Hs * Ws * mid) * 4
    temp_bytes = Hs * Ws * (3 * mid + 3 * out_c) * 4
    est = 2 * step_bytes + scratch_bytes + temp_bytes
    vmem_limit = int(min(max(4 * est, 16 * 1024 * 1024), 48 * 1024 * 1024))

    out = pl.pallas_call(
        functools.partial(_bottleneck_kernel, use_downsample=use_downsample),
        out_shape=jax.ShapeDtypeStruct((N, Hs, Ws, out_c), jnp.float32),
        grid=(N,),
        in_specs=in_specs,
        out_specs=out_specs,
        scratch_shapes=scratch_shapes,
        compiler_params=pltpu.CompilerParams(
            dimension_semantics=("parallel",),   # batch -> TCs on multi-TC parts
            vmem_limit_bytes=vmem_limit),
    )(*ins)
    return jnp.transpose(out, (0, 3, 1, 2))  # NHWC -> NCHW


# --------------------------- pure-JAX reference -----------------------------

def bottleneck_reference(x_nchw, p, stride=1):
    x = jnp.transpose(x_nchw, (0, 2, 3, 1)).astype(jnp.float32)
    mid = p['w2'].shape[1]
    out_c = p['w3'].shape[1]

    def conv2d(xi, w_hwio, s, pad):
        return lax.conv_general_dilated(
            xi, w_hwio, (s, s), [(pad, pad), (pad, pad)],
            dimension_numbers=('NHWC', 'HWIO', 'NHWC'),
            precision=lax.Precision.HIGHEST)

    y = conv2d(x, p['w1'].reshape(1, 1, -1, mid), stride, 0)
    y = jnp.maximum(y * p['bn1_scale'] + p['bn1_bias'], 0.0)
    y = conv2d(y, p['w2'].reshape(3, 3, mid, mid), 1, 1)
    y = jnp.maximum(y * p['bn2_scale'] + p['bn2_bias'], 0.0)
    y = conv2d(y, p['w3'].reshape(1, 1, mid, out_c), 1, 0)
    y = y * p['bn3_scale'] + p['bn3_bias']

    pooled = jnp.mean(y, axis=(1, 2))
    h = jnp.maximum(pooled @ p['se_w1'] + p['se_b1'], 0.0)
    s = jax.nn.sigmoid(h @ p['se_w2'] + p['se_b2'])
    y = y * s[:, None, None, :]

    if y.shape != x.shape:
        identity = conv2d(x, p['wd'].reshape(1, 1, -1, out_c), stride, 0)
        identity = identity * p['bnd_scale'] + p['bnd_bias']
    else:
        identity = x
    y = jnp.maximum(y + identity, 0.0)
    return jnp.transpose(y, (0, 3, 1, 2))


# ----------------------------------- main -----------------------------------

if __name__ == "__main__":
    key = jax.random.PRNGKey(0)
    N, H, W = 2, 16, 16
    # (in_channels, out_channels, stride): downsample path and identity path.
    configs = [(4, 8, 1), (8, 8, 1)]

    for in_channels, out_channels, stride in configs:
        kx, kp, key = jax.random.split(key, 3)
        x = jax.random.normal(kx, (N, in_channels, H, W), jnp.float32)
        params = init_bottleneck_params(kp, in_channels, out_channels)

        out = jax.block_until_ready(bottleneck_forward(x, params, stride=stride))
        ref = bottleneck_reference(x, params, stride=stride)

        assert out.shape == ref.shape, (out.shape, ref.shape)
        # bf16 MXU operands vs f32 HIGHEST reference -> loosened tolerance.
        if not jnp.allclose(out, ref, atol=2e-2, rtol=2e-2):
            max_err = float(jnp.max(jnp.abs(out - ref)))
            raise AssertionError(
                f"config {(in_channels, out_channels, stride)} mismatch vs "
                f"reference, max abs err = {max_err}")

    print("KERNEL_OK")
</pallas_src>

<mosaic_0001>
module attributes {stable_mosaic.version = 11 : i64} {
  func.func @_bottleneck_kernel(%arg0: i32, %arg1: memref<1x16x16x4xf32, #tpu.memory_space<vmem>>, %arg2: memref<4x2xbf16, #tpu.memory_space<vmem>>, %arg3: memref<1x2xf32, #tpu.memory_space<vmem>>, %arg4: memref<9x2x2xbf16, #tpu.memory_space<vmem>>, %arg5: memref<1x2xf32, #tpu.memory_space<vmem>>, %arg6: memref<2x8xbf16, #tpu.memory_space<vmem>>, %arg7: memref<1x8xf32, #tpu.memory_space<vmem>>, %arg8: memref<4x8xbf16, #tpu.memory_space<vmem>>, %arg9: memref<1x8xf32, #tpu.memory_space<vmem>>, %arg10: memref<8x2xbf16, #tpu.memory_space<vmem>>, %arg11: memref<1x2xf32, #tpu.memory_space<vmem>>, %arg12: memref<2x8xbf16, #tpu.memory_space<vmem>>, %arg13: memref<1x8xf32, #tpu.memory_space<vmem>>, %arg14: memref<1x16x16x8xf32, #tpu.memory_space<vmem>>, %arg15: memref<18x18x2xf32, #tpu.memory_space<vmem>>, %arg16: memref<256x2xf32, #tpu.memory_space<vmem>>) attributes {dimension_semantics = [#tpu.dimension_semantics<parallel>], iteration_bounds = array<i64: 2>, scalar_prefetch = 0 : i64, scratch_operands = 2 : i64, tpu.core_type = #tpu.core_type<tc>, window_params = [{transform_indices = @transform_0, window_bounds = array<i64: 1, 16, 16, 4>}, {pipeline_mode = #tpu.pipeline_mode<synchronous>, transform_indices = @transform_1, window_bounds = array<i64: 4, 2>}, {pipeline_mode = #tpu.pipeline_mode<synchronous>, transform_indices = @transform_2, window_bounds = array<i64: 1, 2>}, {pipeline_mode = #tpu.pipeline_mode<synchronous>, transform_indices = @transform_3, window_bounds = array<i64: 9, 2, 2>}, {pipeline_mode = #tpu.pipeline_mode<synchronous>, transform_indices = @transform_4, window_bounds = array<i64: 1, 2>}, {pipeline_mode = #tpu.pipeline_mode<synchronous>, transform_indices = @transform_5, window_bounds = array<i64: 2, 8>}, {pipeline_mode = #tpu.pipeline_mode<synchronous>, transform_indices = @transform_6, window_bounds = array<i64: 1, 8>}, {pipeline_mode = #tpu.pipeline_mode<synchronous>, transform_indices = @transform_7, window_bounds = array<i64: 4, 8>}, {pipeline_mode = #tpu.pipeline_mode<synchronous>, transform_indices = @transform_8, window_bounds = array<i64: 1, 8>}, {pipeline_mode = #tpu.pipeline_mode<synchronous>, transform_indices = @transform_9, window_bounds = array<i64: 8, 2>}, {pipeline_mode = #tpu.pipeline_mode<synchronous>, transform_indices = @transform_10, window_bounds = array<i64: 1, 2>}, {pipeline_mode = #tpu.pipeline_mode<synchronous>, transform_indices = @transform_11, window_bounds = array<i64: 2, 8>}, {pipeline_mode = #tpu.pipeline_mode<synchronous>, transform_indices = @transform_12, window_bounds = array<i64: 1, 8>}, {transform_indices = @transform_13, window_bounds = array<i64: 1, 16, 16, 8>}]} {
    %c0 = arith.constant 0 : index
    %c0_0 = arith.constant 0 : index
    %c0_1 = arith.constant 0 : index
    %c0_2 = arith.constant 0 : index
    %0 = vector.load %arg1[%c0, %c0_0, %c0_1, %c0_2] : memref<1x16x16x4xf32, #tpu.memory_space<vmem>>, vector<1x16x16x4xf32>
    %1 = vector.shape_cast %0 : vector<1x16x16x4xf32> to vector<16x16x4xf32>
    %2 = vector.shape_cast %1 : vector<16x16x4xf32> to vector<256x4xf32>
    %3 = arith.truncf %2 : vector<256x4xf32> to vector<256x4xbf16>
    %c0_3 = arith.constant 0 : index
    %c0_4 = arith.constant 0 : index
    %4 = vector.load %arg2[%c0_3, %c0_4] : memref<4x2xbf16, #tpu.memory_space<vmem>>, vector<4x2xbf16>
    %cst = arith.constant dense<0.000000e+00> : vector<256x2xf32>
    %5 = tpu.matmul %3, %4, %cst {dimension_numbers = #tpu.dot_dimension_numbers<[1], [0], [0], [1], [0, 0, 1, 1], [], []>} : vector<256x4xbf16>, vector<4x2xbf16>, vector<256x2xf32> -> vector<256x2xf32>
    %c0_5 = arith.constant 0 : index
    %c0_6 = arith.constant 0 : index
    %6 = vector.load %arg3[%c0_5, %c0_6] : memref<1x2xf32, #tpu.memory_space<vmem>>, vector<1x2xf32>
    %7 = vector.broadcast %6 : vector<1x2xf32> to vector<256x2xf32>
    %8 = arith.addf %5, %7 : vector<256x2xf32>
    %cst_7 = arith.constant 0.000000e+00 : f32
    %9 = vector.broadcast %cst_7 : f32 to vector<256x2xf32>
    %10 = arith.maximumf %8, %9 : vector<256x2xf32>
    %cst_8 = arith.constant 0.000000e+00 : f32
    %11 = vector.broadcast %cst_8 : f32 to vector<18x18x2xf32>
    %c0_9 = arith.constant 0 : index
    %c0_10 = arith.constant 0 : index
    %c0_11 = arith.constant 0 : index
    %12 = vector.load %arg15[%c0_9, %c0_10, %c0_11] : memref<18x18x2xf32, #tpu.memory_space<vmem>>, vector<18x18x2xf32>
    tpu.vector_store %arg15[%c0_9, %c0_10, %c0_11], %11 {strides = array<i32>} : memref<18x18x2xf32, #tpu.memory_space<vmem>>, vector<18x18x2xf32>,
    %13 = vector.shape_cast %10 : vector<256x2xf32> to vector<16x16x2xf32>
    %c1 = arith.constant 1 : index
    %c1_12 = arith.constant 1 : index
    %c0_13 = arith.constant 0 : index
    %14 = vector.load %arg15[%c1, %c1_12, %c0_13] : memref<18x18x2xf32, #tpu.memory_space<vmem>>, vector<16x16x2xf32>
    tpu.vector_store %arg15[%c1, %c1_12, %c0_13], %13 {strides = array<i32>} : memref<18x18x2xf32, #tpu.memory_space<vmem>>, vector<16x16x2xf32>,
    %cst_14 = arith.constant 0.000000e+00 : f32
    %15 = vector.broadcast %cst_14 : f32 to vector<256x2xf32>
    %c0_15 = arith.constant 0 : index
    %c0_16 = arith.constant 0 : index
    %16 = vector.load %arg16[%c0_15, %c0_16] : memref<256x2xf32, #tpu.memory_space<vmem>>, vector<256x2xf32>
    tpu.vector_store %arg16[%c0_15, %c0_16], %15 {strides = array<i32>} : memref<256x2xf32, #tpu.memory_space<vmem>>, vector<256x2xf32>,
    %c0_17 = arith.constant 0 : index
    %c0_18 = arith.constant 0 : index
    %c0_19 = arith.constant 0 : index
    %17 = vector.load %arg15[%c0_17, %c0_18, %c0_19] : memref<18x18x2xf32, #tpu.memory_space<vmem>>, vector<16x16x2xf32>
    %18 = vector.shape_cast %17 : vector<16x16x2xf32> to vector<256x2xf32>
    %c0_20 = arith.constant 0 : index
    %c0_21 = arith.constant 0 : index
    %19 = vector.load %arg16[%c0_20, %c0_21] : memref<256x2xf32, #tpu.memory_space<vmem>>, vector<256x2xf32>
    %20 = arith.truncf %18 : vector<256x2xf32> to vector<256x2xbf16>
    %c0_22 = arith.constant 0 : index
    %c0_23 = arith.constant 0 : index
    %c0_24 = arith.constant 0 : index
    %21 = vector.load %arg4[%c0_22, %c0_23, %c0_24] : memref<9x2x2xbf16, #tpu.memory_space<vmem>>, vector<1x2x2xbf16>
    %22 = vector.shape_cast %21 : vector<1x2x2xbf16> to vector<2x2xbf16>
    %cst_25 = arith.constant dense<0.000000e+00> : vector<256x2xf32>
    %23 = tpu.matmul %20, %22, %cst_25 {dimension_numbers = #tpu.dot_dimension_numbers<[1], [0], [0], [1], [0, 0, 1, 1], [], []>} : vector<256x2xbf16>, vector<2x2xbf16>, vector<256x2xf32> -> vector<256x2xf32>
    %24 = arith.addf %19, %23 : vector<256x2xf32>
    %c0_26 = arith.constant 0 : index
    %c0_27 = arith.constant 0 : index
    %25 = vector.load %arg16[%c0_26, %c0_27] : memref<256x2xf32, #tpu.memory_space<vmem>>, vector<256x2xf32>
    tpu.vector_store %arg16[%c0_26, %c0_27], %24 {strides = array<i32>} : memref<256x2xf32, #tpu.memory_space<vmem>>, vector<256x2xf32>,
    %c0_28 = arith.constant 0 : index
    %c1_29 = arith.constant 1 : index
    %c0_30 = arith.constant 0 : index
    %26 = vector.load %arg15[%c0_28, %c1_29, %c0_30] : memref<18x18x2xf32, #tpu.memory_space<vmem>>, vector<16x16x2xf32>
    %27 = vector.shape_cast %26 : vector<16x16x2xf32> to vector<256x2xf32>
    %c0_31 = arith.constant 0 : index
    %c0_32 = arith.constant 0 : index
    %28 = vector.load %arg16[%c0_31, %c0_32] : memref<256x2xf32, #tpu.memory_space<vmem>>, vector<256x2xf32>
    %29 = arith.truncf %27 : vector<256x2xf32> to vector<256x2xbf16>
    %c1_33 = arith.constant 1 : index
    %c0_34 = arith.constant 0 : index
    %c0_35 = arith.constant 0 : index
    %30 = vector.load %arg4[%c1_33, %c0_34, %c0_35] : memref<9x2x2xbf16, #tpu.memory_space<vmem>>, vector<1x2x2xbf16>
    %31 = vector.shape_cast %30 : vector<1x2x2xbf16> to vector<2x2xbf16>
    %cst_36 = arith.constant dense<0.000000e+00> : vector<256x2xf32>
    %32 = tpu.matmul %29, %31, %cst_36 {dimension_numbers = #tpu.dot_dimension_numbers<[1], [0], [0], [1], [0, 0, 1, 1], [], []>} : vector<256x2xbf16>, vector<2x2xbf16>, vector<256x2xf32> -> vector<256x2xf32>
    %33 = arith.addf %28, %32 : vector<256x2xf32>
    %c0_37 = arith.constant 0 : index
    %c0_38 = arith.constant 0 : index
    %34 = vector.load %arg16[%c0_37, %c0_38] : memref<256x2xf32, #tpu.memory_space<vmem>>, vector<256x2xf32>
    tpu.vector_store %arg16[%c0_37, %c0_38], %33 {strides = array<i32>} : memref<256x2xf32, #tpu.memory_space<vmem>>, vector<256x2xf32>,
    %c0_39 = arith.constant 0 : index
    %c2 = arith.constant 2 : index
    %c0_40 = arith.constant 0 : index
    %35 = vector.load %arg15[%c0_39, %c2, %c0_40] : memref<18x18x2xf32, #tpu.memory_space<vmem>>, vector<16x16x2xf32>
    %36 = vector.shape_cast %35 : vector<16x16x2xf32> to vector<256x2xf32>
    %c0_41 = arith.constant 0 : index
    %c0_42 = arith.constant 0 : index
    %37 = vector.load %arg16[%c0_41, %c0_42] : memref<256x2xf32, #tpu.memory_space<vmem>>, vector<256x2xf32>
    %38 = arith.truncf %36 : vector<256x2xf32> to vector<256x2xbf16>
    %c2_43 = arith.constant 2 : index
    %c0_44 = arith.constant 0 : index
    %c0_45 = arith.constant 0 : index
    %39 = vector.load %arg4[%c2_43, %c0_44, %c0_45] : memref<9x2x2xbf16, #tpu.memory_space<vmem>>, vector<1x2x2xbf16>
    %40 = vector.shape_cast %39 : vector<1x2x2xbf16> to vector<2x2xbf16>
    %cst_46 = arith.constant dense<0.000000e+00> : vector<256x2xf32>
    %41 = tpu.matmul %38, %40, %cst_46 {dimension_numbers = #tpu.dot_dimension_numbers<[1], [0], [0], [1], [0, 0, 1, 1], [], []>} : vector<256x2xbf16>, vector<2x2xbf16>, vector<256x2xf32> -> vector<256x2xf32>
    %42 = arith.addf %37, %41 : vector<256x2xf32>
    %c0_47 = arith.constant 0 : index
    %c0_48 = arith.constant 0 : index
    %43 = vector.load %arg16[%c0_47, %c0_48] : memref<256x2xf32, #tpu.memory_space<vmem>>, vector<256x2xf32>
    tpu.vector_store %arg16[%c0_47, %c0_48], %42 {strides = array<i32>} : memref<256x2xf32, #tpu.memory_space<vmem>>, vector<256x2xf32>,
    %c1_49 = arith.constant 1 : index
    %c0_50 = arith.constant 0 : index
    %c0_51 = arith.constant 0 : index
    %44 = vector.load %arg15[%c1_49, %c0_50, %c0_51] : memref<18x18x2xf32, #tpu.memory_space<vmem>>, vector<16x16x2xf32>
    %45 = vector.shape_cast %44 : vector<16x16x2xf32> to vector<256x2xf32>
    %c0_52 = arith.constant 0 : index
    %c0_53 = arith.constant 0 : index
    %46 = vector.load %arg16[%c0_52, %c0_53] : memref<256x2xf32, #tpu.memory_space<vmem>>, vector<256x2xf32>
    %47 = arith.truncf %45 : vector<256x2xf32> to vector<256x2xbf16>
    %c3 = arith.constant 3 : index
    %c0_54 = arith.constant 0 : index
    %c0_55 = arith.constant 0 : index
    %48 = vector.load %arg4[%c3, %c0_54, %c0_55] : memref<9x2x2xbf16, #tpu.memory_space<vmem>>, vector<1x2x2xbf16>
    %49 = vector.shape_cast %48 : vector<1x2x2xbf16> to vector<2x2xbf16>
    %cst_56 = arith.constant dense<0.000000e+00> : vector<256x2xf32>
    %50 = tpu.matmul %47, %49, %cst_56 {dimension_numbers = #tpu.dot_dimension_numbers<[1], [0], [0], [1], [0, 0, 1, 1], [], []>} : vector<256x2xbf16>, vector<2x2xbf16>, vector<256x2xf32> -> vector<256x2xf32>
    %51 = arith.addf %46, %50 : vector<256x2xf32>
    %c0_57 = arith.constant 0 : index
    %c0_58 = arith.constant 0 : index
    %52 = vector.load %arg16[%c0_57, %c0_58] : memref<256x2xf32, #tpu.memory_space<vmem>>, vector<256x2xf32>
    tpu.vector_store %arg16[%c0_57, %c0_58], %51 {strides = array<i32>} : memref<256x2xf32, #tpu.memory_space<vmem>>, vector<256x2xf32>,
    %c1_59 = arith.constant 1 : index
    %c1_60 = arith.constant 1 : index
    %c0_61 = arith.constant 0 : index
    %53 = vector.load %arg15[%c1_59, %c1_60, %c0_61] : memref<18x18x2xf32, #tpu.memory_space<vmem>>, vector<16x16x2xf32>
    %54 = vector.shape_cast %53 : vector<16x16x2xf32> to vector<256x2xf32>
    %c0_62 = arith.constant 0 : index
    %c0_63 = arith.constant 0 : index
    %55 = vector.load %arg16[%c0_62, %c0_63] : memref<256x2xf32, #tpu.memory_space<vmem>>, vector<256x2xf32>
    %56 = arith.truncf %54 : vector<256x2xf32> to vector<256x2xbf16>
    %c4 = arith.constant 4 : index
    %c0_64 = arith.constant 0 : index
    %c0_65 = arith.constant 0 : index
    %57 = vector.load %arg4[%c4, %c0_64, %c0_65] : memref<9x2x2xbf16, #tpu.memory_space<vmem>>, vector<1x2x2xbf16>
    %58 = vector.shape_cast %57 : vector<1x2x2xbf16> to vector<2x2xbf16>
    %cst_66 = arith.constant dense<0.000000e+00> : vector<256x2xf32>
    %59 = tpu.matmul %56, %58, %cst_66 {dimension_numbers = #tpu.dot_dimension_numbers<[1], [0], [0], [1], [0, 0, 1, 1], [], []>} : vector<256x2xbf16>, vector<2x2xbf16>, vector<256x2xf32> -> vector<256x2xf32>
    %60 = arith.addf %55, %59 : vector<256x2xf32>
    %c0_67 = arith.constant 0 : index
    %c0_68 = arith.constant 0 : index
    %61 = vector.load %arg16[%c0_67, %c0_68] : memref<256x2xf32, #tpu.memory_space<vmem>>, vector<256x2xf32>
    tpu.vector_store %arg16[%c0_67, %c0_68], %60 {strides = array<i32>} : memref<256x2xf32, #tpu.memory_space<vmem>>, vector<256x2xf32>,
    %c1_69 = arith.constant 1 : index
    %c2_70 = arith.constant 2 : index
    %c0_71 = arith.constant 0 : index
    %62 = vector.load %arg15[%c1_69, %c2_70, %c0_71] : memref<18x18x2xf32, #tpu.memory_space<vmem>>, vector<16x16x2xf32>
    %63 = vector.shape_cast %62 : vector<16x16x2xf32> to vector<256x2xf32>
    %c0_72 = arith.constant 0 : index
    %c0_73 = arith.constant 0 : index
    %64 = vector.load %arg16[%c0_72, %c0_73] : memref<256x2xf32, #tpu.memory_space<vmem>>, vector<256x2xf32>
    %65 = arith.truncf %63 : vector<256x2xf32> to vector<256x2xbf16>
    %c5 = arith.constant 5 : index
    %c0_74 = arith.constant 0 : index
    %c0_75 = arith.constant 0 : index
    %66 = vector.load %arg4[%c5, %c0_74, %c0_75] : memref<9x2x2xbf16, #tpu.memory_space<vmem>>, vector<1x2x2xbf16>
    %67 = vector.shape_cast %66 : vector<1x2x2xbf16> to vector<2x2xbf16>
    %cst_76 = arith.constant dense<0.000000e+00> : vector<256x2xf32>
    %68 = tpu.matmul %65, %67, %cst_76 {dimension_numbers = #tpu.dot_dimension_numbers<[1], [0], [0], [1], [0, 0, 1, 1], [], []>} : vector<256x2xbf16>, vector<2x2xbf16>, vector<256x2xf32> -> vector<256x2xf32>
    %69 = arith.addf %64, %68 : vector<256x2xf32>
    %c0_77 = arith.constant 0 : index
    %c0_78 = arith.constant 0 : index
    %70 = vector.load %arg16[%c0_77, %c0_78] : memref<256x2xf32, #tpu.memory_space<vmem>>, vector<256x2xf32>
    tpu.vector_store %arg16[%c0_77, %c0_78], %69 {strides = array<i32>} : memref<256x2xf32, #tpu.memory_space<vmem>>, vector<256x2xf32>,
    %c2_79 = arith.constant 2 : index
    %c0_80 = arith.constant 0 : index
    %c0_81 = arith.constant 0 : index
    %71 = vector.load %arg15[%c2_79, %c0_80, %c0_81] : memref<18x18x2xf32, #tpu.memory_space<vmem>>, vector<16x16x2xf32>
    %72 = vector.shape_cast %71 : vector<16x16x2xf32> to vector<256x2xf32>
    %c0_82 = arith.constant 0 : index
    %c0_83 = arith.constant 0 : index
    %73 = vector.load %arg16[%c0_82, %c0_83] : memref<256x2xf32, #tpu.memory_space<vmem>>, vector<256x2xf32>
    %74 = arith.truncf %72 : vector<256x2xf32> to vector<256x2xbf16>
    %c6 = arith.constant 6 : index
    %c0_84 = arith.constant 0 : index
    %c0_85 = arith.constant 0 : index
    %75 = vector.load %arg4[%c6, %c0_84, %c0_85] : memref<9x2x2xbf16, #tpu.memory_space<vmem>>, vector<1x2x2xbf16>
    %76 = vector.shape_cast %75 : vector<1x2x2xbf16> to vector<2x2xbf16>
    %cst_86 = arith.constant dense<0.000000e+00> : vector<256x2xf32>
    %77 = tpu.matmul %74, %76, %cst_86 {dimension_numbers = #tpu.dot_dimension_numbers<[1], [0], [0], [1], [0, 0, 1, 1], [], []>} : vector<256x2xbf16>, vector<2x2xbf16>, vector<256x2xf32> -> vector<256x2xf32>
    %78 = arith.addf %73, %77 : vector<256x2xf32>
    %c0_87 = arith.constant 0 : index
    %c0_88 = arith.constant 0 : index
    %79 = vector.load %arg16[%c0_87, %c0_88] : memref<256x2xf32, #tpu.memory_space<vmem>>, vector<256x2xf32>
    tpu.vector_store %arg16[%c0_87, %c0_88], %78 {strides = array<i32>} : memref<256x2xf32, #tpu.memory_space<vmem>>, vector<256x2xf32>,
    %c2_89 = arith.constant 2 : index
    %c1_90 = arith.constant 1 : index
    %c0_91 = arith.constant 0 : index
    %80 = vector.load %arg15[%c2_89, %c1_90, %c0_91] : memref<18x18x2xf32, #tpu.memory_space<vmem>>, vector<16x16x2xf32>
    %81 = vector.shape_cast %80 : vector<16x16x2xf32> to vector<256x2xf32>
    %c0_92 = arith.constant 0 : index
    %c0_93 = arith.constant 0 : index
    %82 = vector.load %arg16[%c0_92, %c0_93] : memref<256x2xf32, #tpu.memory_space<vmem>>, vector<256x2xf32>
    %83 = arith.truncf %81 : vector<256x2xf32> to vector<256x2xbf16>
    %c7 = arith.constant 7 : index
    %c0_94 = arith.constant 0 : index
    %c0_95 = arith.constant 0 : index
    %84 = vector.load %arg4[%c7, %c0_94, %c0_95] : memref<9x2x2xbf16, #tpu.memory_space<vmem>>, vector<1x2x2xbf16>
    %85 = vector.shape_cast %84 : vector<1x2x2xbf16> to vector<2x2xbf16>
    %cst_96 = arith.constant dense<0.000000e+00> : vector<256x2xf32>
    %86 = tpu.matmul %83, %85, %cst_96 {dimension_numbers = #tpu.dot_dimension_numbers<[1], [0], [0], [1], [0, 0, 1, 1], [], []>} : vector<256x2xbf16>, vector<2x2xbf16>, vector<256x2xf32> -> vector<256x2xf32>
    %87 = arith.addf %82, %86 : vector<256x2xf32>
    %c0_97 = arith.constant 0 : index
    %c0_98 = arith.constant 0 : index
    %88 = vector.load %arg16[%c0_97, %c0_98] : memref<256x2xf32, #tpu.memory_space<vmem>>, vector<256x2xf32>
    tpu.vector_store %arg16[%c0_97, %c0_98], %87 {strides = array<i32>} : memref<256x2xf32, #tpu.memory_space<vmem>>, vector<256x2xf32>,
    %c2_99 = arith.constant 2 : index
    %c2_100 = arith.constant 2 : index
    %c0_101 = arith.constant 0 : index
    %89 = vector.load %arg15[%c2_99, %c2_100, %c0_101] : memref<18x18x2xf32, #tpu.memory_space<vmem>>, vector<16x16x2xf32>
    %90 = vector.shape_cast %89 : vector<16x16x2xf32> to vector<256x2xf32>
    %c0_102 = arith.constant 0 : index
    %c0_103 = arith.constant 0 : index
    %91 = vector.load %arg16[%c0_102, %c0_103] : memref<256x2xf32, #tpu.memory_space<vmem>>, vector<256x2xf32>
    %92 = arith.truncf %90 : vector<256x2xf32> to vector<256x2xbf16>
    %c8 = arith.constant 8 : index
    %c0_104 = arith.constant 0 : index
    %c0_105 = arith.constant 0 : index
    %93 = vector.load %arg4[%c8, %c0_104, %c0_105] : memref<9x2x2xbf16, #tpu.memory_space<vmem>>, vector<1x2x2xbf16>
    %94 = vector.shape_cast %93 : vector<1x2x2xbf16> to vector<2x2xbf16>
    %cst_106 = arith.constant dense<0.000000e+00> : vector<256x2xf32>
    %95 = tpu.matmul %92, %94, %cst_106 {dimension_numbers = #tpu.dot_dimension_numbers<[1], [0], [0], [1], [0, 0, 1, 1], [], []>} : vector<256x2xbf16>, vector<2x2xbf16>, vector<256x2xf32> -> vector<256x2xf32>
    %96 = arith.addf %91, %95 : vector<256x2xf32>
    %c0_107 = arith.constant 0 : index
    %c0_108 = arith.constant 0 : index
    %97 = vector.load %arg16[%c0_107, %c0_108] : memref<256x2xf32, #tpu.memory_space<vmem>>, vector<256x2xf32>
    tpu.vector_store %arg16[%c0_107, %c0_108], %96 {strides = array<i32>} : memref<256x2xf32, #tpu.memory_space<vmem>>, vector<256x2xf32>,
    %c0_109 = arith.constant 0 : index
    %c0_110 = arith.constant 0 : index
    %98 = vector.load %arg16[%c0_109, %c0_110] : memref<256x2xf32, #tpu.memory_space<vmem>>, vector<256x2xf32>
    %c0_111 = arith.constant 0 : index
    %c0_112 = arith.constant 0 : index
    %99 = vector.load %arg5[%c0_111, %c0_112] : memref<1x2xf32, #tpu.memory_space<vmem>>, vector<1x2xf32>
    %100 = vector.broadcast %99 : vector<1x2xf32> to vector<256x2xf32>
    %101 = arith.addf %98, %100 : vector<256x2xf32>
    %cst_113 = arith.constant 0.000000e+00 : f32
    %102 = vector.broadcast %cst_113 : f32 to vector<256x2xf32>
    %103 = arith.maximumf %101, %102 : vector<256x2xf32>
    %104 = arith.truncf %103 : vector<256x2xf32> to vector<256x2xbf16>
    %c0_114 = arith.constant 0 : index
    %c0_115 = arith.constant 0 : index
    %105 = vector.load %arg6[%c0_114, %c0_115] : memref<2x8xbf16, #tpu.memory_space<vmem>>, vector<2x8xbf16>
    %cst_116 = arith.constant dense<0.000000e+00> : vector<256x8xf32>
    %106 = tpu.matmul %104, %105, %cst_116 {dimension_numbers = #tpu.dot_dimension_numbers<[1], [0], [0], [1], [0, 0, 1, 1], [], []>} : vector<256x2xbf16>, vector<2x8xbf16>, vector<256x8xf32> -> vector<256x8xf32>
    %c0_117 = arith.constant 0 : index
    %c0_118 = arith.constant 0 : index
    %107 = vector.load %arg7[%c0_117, %c0_118] : memref<1x8xf32, #tpu.memory_space<vmem>>, vector<1x8xf32>
    %108 = vector.broadcast %107 : vector<1x8xf32> to vector<256x8xf32>
    %109 = arith.addf %106, %108 : vector<256x8xf32>
    %cst_119 = arith.constant dense<0.000000e+00> : vector<8xf32>
    %110 = vector.multi_reduction <add>, %109, %cst_119 [0] : vector<256x8xf32> to vector<8xf32>
    %111 = vector.shape_cast %110 : vector<8xf32> to vector<1x8xf32>
    %cst_120 = arith.constant 3.906250e-03 : f32
    %112 = vector.broadcast %cst_120 : f32 to vector<1x8xf32>
    %113 = arith.mulf %111, %112 : vector<1x8xf32>
    %114 = arith.truncf %113 : vector<1x8xf32> to vector<1x8xbf16>
    %c0_121 = arith.constant 0 : index
    %c0_122 = arith.constant 0 : index
    %115 = vector.load %arg10[%c0_121, %c0_122] : memref<8x2xbf16, #tpu.memory_space<vmem>>, vector<8x2xbf16>
    %cst_123 = arith.constant dense<0.000000e+00> : vector<1x2xf32>
    %116 = tpu.matmul %114, %115, %cst_123 {dimension_numbers = #tpu.dot_dimension_numbers<[1], [0], [0], [1], [0, 0, 1, 1], [], []>} : vector<1x8xbf16>, vector<8x2xbf16>, vector<1x2xf32> -> vector<1x2xf32>
    %c0_124 = arith.constant 0 : index
    %c0_125 = arith.constant 0 : index
    %117 = vector.load %arg11[%c0_124, %c0_125] : memref<1x2xf32, #tpu.memory_space<vmem>>, vector<1x2xf32>
    %118 = arith.addf %116, %117 : vector<1x2xf32>
    %cst_126 = arith.constant 0.000000e+00 : f32
    %119 = vector.broadcast %cst_126 : f32 to vector<1x2xf32>
    %120 = arith.maximumf %118, %119 : vector<1x2xf32>
    %121 = arith.truncf %120 : vector<1x2xf32> to vector<1x2xbf16>
    %c0_127 = arith.constant 0 : index
    %c0_128 = arith.constant 0 : index
    %122 = vector.load %arg12[%c0_127, %c0_128] : memref<2x8xbf16, #tpu.memory_space<vmem>>, vector<2x8xbf16>
    %cst_129 = arith.constant dense<0.000000e+00> : vector<1x8xf32>
    %123 = tpu.matmul %121, %122, %cst_129 {dimension_numbers = #tpu.dot_dimension_numbers<[1], [0], [0], [1], [0, 0, 1, 1], [], []>} : vector<1x2xbf16>, vector<2x8xbf16>, vector<1x8xf32> -> vector<1x8xf32>
    %c0_130 = arith.constant 0 : index
    %c0_131 = arith.constant 0 : index
    %124 = vector.load %arg13[%c0_130, %c0_131] : memref<1x8xf32, #tpu.memory_space<vmem>>, vector<1x8xf32>
    %125 = arith.addf %123, %124 : vector<1x8xf32>
    %cst_132 = arith.constant 0.000000e+00 : f32
    %126 = vector.broadcast %cst_132 : f32 to vector<1x8xf32>
    %127 = arith.subf %126, %125 : vector<1x8xf32>
    %128 = math.exp %127 : vector<1x8xf32>
    %cst_133 = arith.constant 1.000000e+00 : f32
    %129 = vector.broadcast %cst_133 : f32 to vector<1x8xf32>
    %130 = arith.addf %129, %128 : vector<1x8xf32>
    %cst_134 = arith.constant 1.000000e+00 : f32
    %131 = vector.broadcast %cst_134 : f32 to vector<1x8xf32>
    %132 = arith.divf %131, %130 : vector<1x8xf32>
    %133 = arith.truncf %2 : vector<256x4xf32> to vector<256x4xbf16>
    %c0_135 = arith.constant 0 : index
    %c0_136 = arith.constant 0 : index
    %134 = vector.load %arg8[%c0_135, %c0_136] : memref<4x8xbf16, #tpu.memory_space<vmem>>, vector<4x8xbf16>
    %cst_137 = arith.constant dense<0.000000e+00> : vector<256x8xf32>
    %135 = tpu.matmul %133, %134, %cst_137 {dimension_numbers = #tpu.dot_dimension_numbers<[1], [0], [0], [1], [0, 0, 1, 1], [], []>} : vector<256x4xbf16>, vector<4x8xbf16>, vector<256x8xf32> -> vector<256x8xf32>
    %c0_138 = arith.constant 0 : index
    %c0_139 = arith.constant 0 : index
    %136 = vector.load %arg9[%c0_138, %c0_139] : memref<1x8xf32, #tpu.memory_space<vmem>>, vector<1x8xf32>
    %137 = vector.broadcast %136 : vector<1x8xf32> to vector<256x8xf32>
    %138 = arith.addf %135, %137 : vector<256x8xf32>
    %139 = vector.broadcast %132 : vector<1x8xf32> to vector<256x8xf32>
    %140 = arith.mulf %109, %139 : vector<256x8xf32>
    %141 = arith.addf %140, %138 : vector<256x8xf32>
    %cst_140 = arith.constant 0.000000e+00 : f32
    %142 = vector.broadcast %cst_140 : f32 to vector<256x8xf32>
    %143 = arith.maximumf %141, %142 : vector<256x8xf32>
    %144 = vector.shape_cast %143 : vector<256x8xf32> to vector<1x16x16x8xf32>
    %c0_141 = arith.constant 0 : index
    %c0_142 = arith.constant 0 : index
    %c0_143 = arith.constant 0 : index
    %c0_144 = arith.constant 0 : index
    %145 = vector.load %arg14[%c0_141, %c0_142, %c0_143, %c0_144] : memref<1x16x16x8xf32, #tpu.memory_space<vmem>>, vector<1x16x16x8xf32>
    tpu.vector_store %arg14[%c0_141, %c0_142, %c0_143, %c0_144], %144 {strides = array<i32>} : memref<1x16x16x8xf32, #tpu.memory_space<vmem>>, vector<1x16x16x8xf32>,
    return
  }
  func.func @transform_0(%arg0: i32) -> (i32, i32, i32, i32) {
    %c0_i32 = arith.constant 0 : i32
    %c0_i32_0 = arith.constant 0 : i32
    %c0_i32_1 = arith.constant 0 : i32
    %c0_i32_2 = arith.constant 0 : i32
    return %arg0, %c0_i32, %c0_i32_0, %c0_i32_1 : i32, i32, i32, i32
  }
  func.func @transform_1(%arg0: i32) -> (i32, i32) {
    %c0_i32 = arith.constant 0 : i32
    %c0_i32_0 = arith.constant 0 : i32
    %c0_i32_1 = arith.constant 0 : i32
    return %c0_i32, %c0_i32_0 : i32, i32
  }
  func.func @transform_2(%arg0: i32) -> (i32, i32) {
    %c0_i32 = arith.constant 0 : i32
    %c0_i32_0 = arith.constant 0 : i32
    %c0_i32_1 = arith.constant 0 : i32
    return %c0_i32, %c0_i32_0 : i32, i32
  }
  func.func @transform_3(%arg0: i32) -> (i32, i32, i32) {
    %c0_i32 = arith.constant 0 : i32
    %c0_i32_0 = arith.constant 0 : i32
    %c0_i32_1 = arith.constant 0 : i32
    %c0_i32_2 = arith.constant 0 : i32
    return %c0_i32, %c0_i32_0, %c0_i32_1 : i32, i32, i32
  }
  func.func @transform_4(%arg0: i32) -> (i32, i32) {
    %c0_i32 = arith.constant 0 : i32
    %c0_i32_0 = arith.constant 0 : i32
    %c0_i32_1 = arith.constant 0 : i32
    return %c0_i32, %c0_i32_0 : i32, i32
  }
  func.func @transform_5(%arg0: i32) -> (i32, i32) {
    %c0_i32 = arith.constant 0 : i32
    %c0_i32_0 = arith.constant 0 : i32
    %c0_i32_1 = arith.constant 0 : i32
    return %c0_i32, %c0_i32_0 : i32, i32
  }
  func.func @transform_6(%arg0: i32) -> (i32, i32) {
    %c0_i32 = arith.constant 0 : i32
    %c0_i32_0 = arith.constant 0 : i32
    %c0_i32_1 = arith.constant 0 : i32
    return %c0_i32, %c0_i32_0 : i32, i32
  }
  func.func @transform_7(%arg0: i32) -> (i32, i32) {
    %c0_i32 = arith.constant 0 : i32
    %c0_i32_0 = arith.constant 0 : i32
    %c0_i32_1 = arith.constant 0 : i32
    return %c0_i32, %c0_i32_0 : i32, i32
  }
  func.func @transform_8(%arg0: i32) -> (i32, i32) {
    %c0_i32 = arith.constant 0 : i32
    %c0_i32_0 = arith.constant 0 : i32
    %c0_i32_1 = arith.constant 0 : i32
    return %c0_i32, %c0_i32_0 : i32, i32
  }
  func.func @transform_9(%arg0: i32) -> (i32, i32) {
    %c0_i32 = arith.constant 0 : i32
    %c0_i32_0 = arith.constant 0 : i32
    %c0_i32_1 = arith.constant 0 : i32
    return %c0_i32, %c0_i32_0 : i32, i32
  }
  func.func @transform_10(%arg0: i32) -> (i32, i32) {
    %c0_i32 = arith.constant 0 : i32
    %c0_i32_0 = arith.constant 0 : i32
    %c0_i32_1 = arith.constant 0 : i32
    return %c0_i32, %c0_i32_0 : i32, i32
  }
  func.func @transform_11(%arg0: i32) -> (i32, i32) {
    %c0_i32 = arith.constant 0 : i32
    %c0_i32_0 = arith.constant 0 : i32
    %c0_i32_1 = arith.constant 0 : i32
    return %c0_i32, %c0_i32_0 : i32, i32
  }
  func.func @transform_12(%arg0: i32) -> (i32, i32) {
    %c0_i32 = arith.constant 0 : i32
    %c0_i32_0 = arith.constant 0 : i32
    %c0_i32_1 = arith.constant 0 : i32
    return %c0_i32, %c0_i32_0 : i32, i32
  }
  func.func @transform_13(%arg0: i32) -> (i32, i32, i32, i32) {
    %c0_i32 = arith.constant 0 : i32
    %c0_i32_0 = arith.constant 0 : i32
    %c0_i32_1 = arith.constant 0 : i32
    %c0_i32_2 = arith.constant 0 : i32
    return %arg0, %c0_i32, %c0_i32_0, %c0_i32_1 : i32, i32, i32, i32
  }
}

</mosaic_0001>

<llo_original>
// kernel: tpu_custom_call.1
$region0: #{tpu_custom_call.1}
  #allocation0 [shape = 'u32[]', space=smem, size = 0x4, offset = 0x4, fixed_abs, tag = 'smem constant byte address 0x4 - core index']
  #allocation1 [shape = 'u32[144,128]{1,0:T(1,128)}', space=vmem, size = 0x12000, scoped, tag = 'internal scratch']
  #allocation2 [shape = 'f32[18,18,2]{2,1,0:T(8,128)}', space=vmem, size = 0x36000, scoped, tag = 'scratch operand']
  #allocation3 [shape = 'f32[256,2]{1,0:T(8,128)}', space=vmem, size = 0x20000, scoped, tag = 'scratch operand']
  %s0 = inlined_call_operand.vmem [shape: f32[2,16,16,4], index: 0, kind: input, shape index: {}]
  %s1 = inlined_call_operand.vmem [shape: bf16[4,2], index: 1, kind: input, shape index: {}]
  %s2 = inlined_call_operand.vmem [shape: f32[1,2], index: 2, kind: input, shape index: {}]
  %s3 = inlined_call_operand.vmem [shape: bf16[9,2,2], index: 3, kind: input, shape index: {}]
  %s4 = inlined_call_operand.vmem [shape: f32[1,2], index: 4, kind: input, shape index: {}]
  %s5 = inlined_call_operand.vmem [shape: bf16[2,8], index: 5, kind: input, shape index: {}]
  %s6 = inlined_call_operand.vmem [shape: f32[1,8], index: 6, kind: input, shape index: {}]
  %s7 = inlined_call_operand.vmem [shape: bf16[4,8], index: 7, kind: input, shape index: {}]
  %s8 = inlined_call_operand.vmem [shape: f32[1,8], index: 8, kind: input, shape index: {}]
  %s9 = inlined_call_operand.vmem [shape: bf16[8,2], index: 9, kind: input, shape index: {}]
  %s10 = inlined_call_operand.vmem [shape: f32[1,2], index: 10, kind: input, shape index: {}]
  %s11 = inlined_call_operand.vmem [shape: bf16[2,8], index: 11, kind: input, shape index: {}]
  %s12 = inlined_call_operand.vmem [shape: f32[1,8], index: 12, kind: input, shape index: {}]
  %s13 = inlined_call_operand.vmem [shape: f32[2,16,16,8], index: 13, kind: output, shape index: {}]
  %s14 = sld [smem:[#allocation0]]
  $region85: #{tpu_custom_call.1} parent=0
    _
  %s16 = ssub.s32 1, %s14
  %s17 = scalar_select 0, %s16, %s14
  loop: start=0, step=1, limit=4
  $region2: #{tpu_custom_call.1} parent=0 // loop_pre_header
    _
  $region3: #{tpu_custom_call.1} parent=0 // loop_header
    %s19 = sphi 0, %s23
    %p20 = scmp.ge.s32.totalorder %s19, 4
    %s29 = sphi 0, %s31
    %s32 = sphi 0, %s29
    %s33 = sphi 0, %s32
    %s49 = sphi 0, %s33
    %s53 = sphi 0, %s53
    %s55 = sphi 0, %s53
    %s56 = sphi 0, %s55
    %s70 = sphi 0, %s56
    %s74 = sphi 0, %s74
    %s76 = sphi 0, %s74
    %s77 = sphi 0, %s76
    %s91 = sphi 0, %s77
    %s95 = sphi 0, %s95
    %s97 = sphi 0, %s95
    %s98 = sphi 0, %s97
    %s112 = sphi 0, %s98
    %s116 = sphi 0, %s116
    %s118 = sphi 0, %s116
    %s119 = sphi 0, %s118
    %s133 = sphi 0, %s119
    %s137 = sphi 0, %s137
    %s139 = sphi 0, %s137
    %s140 = sphi 0, %s139
    %s154 = sphi 0, %s140
    %s158 = sphi 0, %s158
    %s160 = sphi 0, %s158
    %s161 = sphi 0, %s160
    %s175 = sphi 0, %s161
    %s179 = sphi 0, %s179
    %s181 = sphi 0, %s179
    %s182 = sphi 0, %s181
    %s196 = sphi 0, %s182
    %s200 = sphi 0, %s200
    %s202 = sphi 0, %s200
    %s203 = sphi 0, %s202
    %s217 = sphi 0, %s203
    %s221 = sphi 0, %s221
    %s223 = sphi 0, %s221
    %s224 = sphi 0, %s223
    %s238 = sphi 0, %s224
    %s242 = sphi 0, %s242
    %s244 = sphi 0, %s242
    %s245 = sphi 0, %s244
    %s259 = sphi 0, %s245
    %s263 = sphi 0, %s263
    %s265 = sphi 0, %s263
    %s266 = sphi 0, %s265
    %s280 = sphi 0, %s266
    %s284 = sphi 0, %s284
    %s286 = sphi 0, %s284
    %s287 = sphi 0, %s286
    %s301 = sphi 0, %s287
    %s307 = sphi 0, %s309
    %s310 = sphi 0, %s307
    %s311 = sphi 0, %s310
    %s327 = sphi 0, %s311
  $region4: #{tpu_custom_call.1} parent=0 // loop_header_branch
    %22 = sbr.rel (%p20) target = $region8
  $region5: #{tpu_custom_call.1} parent=0 // loop_body
    %s24 = ssub.s32 %s19, 1
    %s25 = ssub.s32 %s19, 2
    %s26 = sadd.s32 %s19, 1
    %s27 = ssub.s32 %s19, %s26
    %p28 = scmp.eq.s32.totalorder %s27, 0
    %s30 = sadd.s32 %s29, 1
    %s31 = scalar_select %p28, %s29, %s30
    %p34 = pneg %p28
    %p35 = scmp.eq.s32.totalorder %s19, 1
    %p36 = por %p34, %p35
    %p37 = scmp.ne.s32.totalorder %s29, %s32
    %p38 = scmp.eq.s32.totalorder %s19, 0
    %p39 = por %p37, %p38
    %p40 = scmp.ne.s32.totalorder %s29, %s32
    %p41 = scmp.eq.s32.totalorder %s24, 1
    %p42 = por %p40, %p41
    %p43 = scmp.ne.s32.totalorder %s32, %s33
    %p44 = scmp.eq.s32.totalorder %s24, 0
    %p45 = por %p43, %p44
    %p46 = scmp.ne.s32.totalorder %s32, %s33
    %p47 = scmp.eq.s32.totalorder %s25, 1
    %p48 = por %p46, %p47
    %p50 = scmp.ne.s32.totalorder %s33, %s49
    %p51 = scmp.eq.s32.totalorder %s25, 0
    %p52 = por %p50, %p51
    %s54 = sadd.s32 %s53, 1
    %p57 = scmp.eq.s32.totalorder %s19, 1
    %p58 = scmp.ne.s32.totalorder %s53, %s55
    %p59 = scmp.eq.s32.totalorder %s19, 0
    %p60 = por %p58, %p59
    %p61 = scmp.ne.s32.totalorder %s53, %s55
    %p62 = scmp.eq.s32.totalorder %s24, 1
    %p63 = por %p61, %p62
    %p64 = scmp.ne.s32.totalorder %s55, %s56
    %p65 = scmp.eq.s32.totalorder %s24, 0
    %p66 = por %p64, %p65
    %p67 = scmp.ne.s32.totalorder %s55, %s56
    %p68 = scmp.eq.s32.totalorder %s25, 1
    %p69 = por %p67, %p68
    %p71 = scmp.ne.s32.totalorder %s56, %s70
    %p72 = scmp.eq.s32.totalorder %s25, 0
    %p73 = por %p71, %p72
    %s75 = sadd.s32 %s74, 1
    %p78 = scmp.eq.s32.totalorder %s19, 1
    %p79 = scmp.ne.s32.totalorder %s74, %s76
    %p80 = scmp.eq.s32.totalorder %s19, 0
    %p81 = por %p79, %p80
    %p82 = scmp.ne.s32.totalorder %s74, %s76
    %p83 = scmp.eq.s32.totalorder %s24, 1
    %p84 = por %p82, %p83
    %p85 = scmp.ne.s32.totalorder %s76, %s77
    %p86 = scmp.eq.s32.totalorder %s24, 0
    %p87 = por %p85, %p86
    %p88 = scmp.ne.s32.totalorder %s76, %s77
    %p89 = scmp.eq.s32.totalorder %s25, 1
    %p90 = por %p88, %p89
    %p92 = scmp.ne.s32.totalorder %s77, %s91
    %p93 = scmp.eq.s32.totalorder %s25, 0
    %p94 = por %p92, %p93
    %s96 = sadd.s32 %s95, 1
    %p99 = scmp.eq.s32.totalorder %s19, 1
    %p100 = scmp.ne.s32.totalorder %s95, %s97
    %p101 = scmp.eq.s32.totalorder %s19, 0
    %p102 = por %p100, %p101
    %p103 = scmp.ne.s32.totalorder %s95, %s97
    %p104 = scmp.eq.s32.totalorder %s24, 1
    %p105 = por %p103, %p104
    %p106 = scmp.ne.s32.totalorder %s97, %s98
    %p107 = scmp.eq.s32.totalorder %s24, 0
    %p108 = por %p106, %p107
    %p109 = scmp.ne.s32.totalorder %s97, %s98
    %p110 = scmp.eq.s32.totalorder %s25, 1
    %p111 = por %p109, %p110
    %p113 = scmp.ne.s32.totalorder %s98, %s112
    %p114 = scmp.eq.s32.totalorder %s25, 0
    %p115 = por %p113, %p114
    %s117 = sadd.s32 %s116, 1
    %p120 = scmp.eq.s32.totalorder %s19, 1
    %p121 = scmp.ne.s32.totalorder %s116, %s118
    %p122 = scmp.eq.s32.totalorder %s19, 0
    %p123 = por %p121, %p122
    %p124 = scmp.ne.s32.totalorder %s116, %s118
    %p125 = scmp.eq.s32.totalorder %s24, 1
    %p126 = por %p124, %p125
    %p127 = scmp.ne.s32.totalorder %s118, %s119
    %p128 = scmp.eq.s32.totalorder %s24, 0
    %p129 = por %p127, %p128
    %p130 = scmp.ne.s32.totalorder %s118, %s119
    %p131 = scmp.eq.s32.totalorder %s25, 1
    %p132 = por %p130, %p131
    %p134 = scmp.ne.s32.totalorder %s119, %s133
    %p135 = scmp.eq.s32.totalorder %s25, 0
    %p136 = por %p134, %p135
    %s138 = sadd.s32 %s137, 1
    %p141 = scmp.eq.s32.totalorder %s19, 1
    %p142 = scmp.ne.s32.totalorder %s137, %s139
    %p143 = scmp.eq.s32.totalorder %s19, 0
    %p144 = por %p142, %p143
    %p145 = scmp.ne.s32.totalorder %s137, %s139
    %p146 = scmp.eq.s32.totalorder %s24, 1
    %p147 = por %p145, %p146
    %p148 = scmp.ne.s32.totalorder %s139, %s140
    %p149 = scmp.eq.s32.totalorder %s24, 0
    %p150 = por %p148, %p149
    %p151 = scmp.ne.s32.totalorder %s139, %s140
    %p152 = scmp.eq.s32.totalorder %s25, 1
    %p153 = por %p151, %p152
    %p155 = scmp.ne.s32.totalorder %s140, %s154
    %p156 = scmp.eq.s32.totalorder %s25, 0
    %p157 = por %p155, %p156
    %s159 = sadd.s32 %s158, 1
    %p162 = scmp.eq.s32.totalorder %s19, 1
    %p163 = scmp.ne.s32.totalorder %s158, %s160
    %p164 = scmp.eq.s32.totalorder %s19, 0
    %p165 = por %p163, %p164
    %p166 = scmp.ne.s32.totalorder %s158, %s160
    %p167 = scmp.eq.s32.totalorder %s24, 1
    %p168 = por %p166, %p167
    %p169 = scmp.ne.s32.totalorder %s160, %s161
    %p170 = scmp.eq.s32.totalorder %s24, 0
    %p171 = por %p169, %p170
    %p172 = scmp.ne.s32.totalorder %s160, %s161
    %p173 = scmp.eq.s32.totalorder %s25, 1
    %p174 = por %p172, %p173
    %p176 = scmp.ne.s32.totalorder %s161, %s175
    %p177 = scmp.eq.s32.totalorder %s25, 0
    %p178 = por %p176, %p177
    %s180 = sadd.s32 %s179, 1
    %p183 = scmp.eq.s32.totalorder %s19, 1
    %p184 = scmp.ne.s32.totalorder %s179, %s181
    %p185 = scmp.eq.s32.totalorder %s19, 0
    %p186 = por %p184, %p185
    %p187 = scmp.ne.s32.totalorder %s179, %s181
    %p188 = scmp.eq.s32.totalorder %s24, 1
    %p189 = por %p187, %p188
    %p190 = scmp.ne.s32.totalorder %s181, %s182
    %p191 = scmp.eq.s32.totalorder %s24, 0
    %p192 = por %p190, %p191
    %p193 = scmp.ne.s32.totalorder %s181, %s182
    %p194 = scmp.eq.s32.totalorder %s25, 1
    %p195 = por %p193, %p194
    %p197 = scmp.ne.s32.totalorder %s182, %s196
    %p198 = scmp.eq.s32.totalorder %s25, 0
    %p199 = por %p197, %p198
    %s201 = sadd.s32 %s200, 1
    %p204 = scmp.eq.s32.totalorder %s19, 1
    %p205 = scmp.ne.s32.totalorder %s200, %s202
    %p206 = scmp.eq.s32.totalorder %s19, 0
    %p207 = por %p205, %p206
    %p208 = scmp.ne.s32.totalorder %s200, %s202
    %p209 = scmp.eq.s32.totalorder %s24, 1
    %p210 = por %p208, %p209
    %p211 = scmp.ne.s32.totalorder %s202, %s203
    %p212 = scmp.eq.s32.totalorder %s24, 0
    %p213 = por %p211, %p212
    %p214 = scmp.ne.s32.totalorder %s202, %s203
    %p215 = scmp.eq.s32.totalorder %s25, 1
    %p216 = por %p214, %p215
    %p218 = scmp.ne.s32.totalorder %s203, %s217
    %p219 = scmp.eq.s32.totalorder %s25, 0
    %p220 = por %p218, %p219
    %s222 = sadd.s32 %s221, 1
    %p225 = scmp.eq.s32.totalorder %s19, 1
    %p226 = scmp.ne.s32.totalorder %s221, %s223
    %p227 = scmp.eq.s32.totalorder %s19, 0
    %p228 = por %p226, %p227
    %p229 = scmp.ne.s32.totalorder %s221, %s223
    %p230 = scmp.eq.s32.totalorder %s24, 1
    %p231 = por %p229, %p230
    %p232 = scmp.ne.s32.totalorder %s223, %s224
    %p233 = scmp.eq.s32.totalorder %s24, 0
    %p234 = por %p232, %p233
    %p235 = scmp.ne.s32.totalorder %s223, %s224
    %p236 = scmp.eq.s32.totalorder %s25, 1
    %p237 = por %p235, %p236
    %p239 = scmp.ne.s32.totalorder %s224, %s238
    %p240 = scmp.eq.s32.totalorder %s25, 0
    %p241 = por %p239, %p240
    %s243 = sadd.s32 %s242, 1
    %p246 = scmp.eq.s32.totalorder %s19, 1
    %p247 = scmp.ne.s32.totalorder %s242, %s244
    %p248 = scmp.eq.s32.totalorder %s19, 0
    %p249 = por %p247, %p248
    %p250 = scmp.ne.s32.totalorder %s242, %s244
    %p251 = scmp.eq.s32.totalorder %s24, 1
    %p252 = por %p250, %p251
    %p253 = scmp.ne.s32.totalorder %s244, %s245
    %p254 = scmp.eq.s32.totalorder %s24, 0
    %p255 = por %p253, %p254
    %p256 = scmp.ne.s32.totalorder %s244, %s245
    %p257 = scmp.eq.s32.totalorder %s25, 1
    %p258 = por %p256, %p257
    %p260 = scmp.ne.s32.totalorder %s245, %s259
    %p261 = scmp.eq.s32.totalorder %s25, 0
    %p262 = por %p260, %p261
    %s264 = sadd.s32 %s263, 1
    %p267 = scmp.eq.s32.totalorder %s19, 1
    %p268 = scmp.ne.s32.totalorder %s263, %s265
    %p269 = scmp.eq.s32.totalorder %s19, 0
    %p270 = por %p268, %p269
    %p271 = scmp.ne.s32.totalorder %s263, %s265
    %p272 = scmp.eq.s32.totalorder %s24, 1
    %p273 = por %p271, %p272
    %p274 = scmp.ne.s32.totalorder %s265, %s266
    %p275 = scmp.eq.s32.totalorder %s24, 0
    %p276 = por %p274, %p275
    %p277 = scmp.ne.s32.totalorder %s265, %s266
    %p278 = scmp.eq.s32.totalorder %s25, 1
    %p279 = por %p277, %p278
    %p281 = scmp.ne.s32.totalorder %s266, %s280
    %p282 = scmp.eq.s32.totalorder %s25, 0
    %p283 = por %p281, %p282
    %s285 = sadd.s32 %s284, 1
    %p288 = scmp.eq.s32.totalorder %s19, 1
    %p289 = scmp.ne.s32.totalorder %s284, %s286
    %p290 = scmp.eq.s32.totalorder %s19, 0
    %p291 = por %p289, %p290
    %p292 = scmp.ne.s32.totalorder %s284, %s286
    %p293 = scmp.eq.s32.totalorder %s24, 1
    %p294 = por %p292, %p293
    %p295 = scmp.ne.s32.totalorder %s286, %s287
    %p296 = scmp.eq.s32.totalorder %s24, 0
    %p297 = por %p295, %p296
    %p298 = scmp.ne.s32.totalorder %s286, %s287
    %p299 = scmp.eq.s32.totalorder %s25, 1
    %p300 = por %p298, %p299
    %p302 = scmp.ne.s32.totalorder %s287, %s301
    %p303 = scmp.eq.s32.totalorder %s25, 0
    %p304 = por %p302, %p303
    %s305 = ssub.s32 %s19, %s26
    %p306 = scmp.eq.s32.totalorder %s305, 0
    %s308 = sadd.s32 %s307, 1
    %s309 = scalar_select %p306, %s307, %s308
    %p312 = pneg %p306
    %p313 = scmp.eq.s32.totalorder %s19, 1
    %p314 = por %p312, %p313
    %p315 = scmp.ne.s32.totalorder %s307, %s310
    %p316 = scmp.eq.s32.totalorder %s19, 0
    %p317 = por %p315, %p316
    %p318 = scmp.ne.s32.totalorder %s307, %s310
    %p319 = scmp.eq.s32.totalorder %s24, 1
    %p320 = por %p318, %p319
    %p321 = scmp.ne.s32.totalorder %s310, %s311
    %p322 = scmp.eq.s32.totalorder %s24, 0
    %p323 = por %p321, %p322
    %p324 = scmp.ne.s32.totalorder %s310, %s311
    %p325 = scmp.eq.s32.totalorder %s25, 1
    %p326 = por %p324, %p325
    %p328 = scmp.ne.s32.totalorder %s311, %s327
    %p329 = scmp.eq.s32.totalorder %s25, 0
    %p330 = por %p328, %p329
    %p331 = scmp.le.s32.totalorder 1, %s19
    %p332 = scmp.lt.s32.totalorder %s19, 3
    %p333 = pnand %p331, %p332
    %p334 = pneg %p333
    // Predicated region
    $region9: #{tpu_custom_call.1} parent=5 // pred_check
      _
    $region10: #{tpu_custom_call.1} parent=5 // pred_check_branch
      %336 = sbr.rel (%p333) target = $region12
    $region11: #{tpu_custom_call.1} parent=5 // pred_region
      %s337 = ssub.s32 %s19, 1
      // Predicated region
      $region13: #{tpu_custom_call.1} parent=11 // pred_check
        %p338 = pneg %p66
      $region14: #{tpu_custom_call.1} parent=11 // pred_check_branch
        %340 = sbr.rel (%p338) target = $region16
      $region15: #{tpu_custom_call.1} parent=11 // pred_region
        _
      $region16: #{tpu_custom_call.1} parent=11 // pred_fallthru
        _
      // Predicated region
      $region17: #{tpu_custom_call.1} parent=11 // pred_check
        %p341 = pneg %p87
      $region18: #{tpu_custom_call.1} parent=11 // pred_check_branch
        %343 = sbr.rel (%p341) target = $region20
      $region19: #{tpu_custom_call.1} parent=11 // pred_region
        _
      $region20: #{tpu_custom_call.1} parent=11 // pred_fallthru
        _
      // Predicated region
      $region21: #{tpu_custom_call.1} parent=11 // pred_check
        %p344 = pneg %p108
      $region22: #{tpu_custom_call.1} parent=11 // pred_check_branch
        %346 = sbr.rel (%p344) target = $region24
      $region23: #{tpu_custom_call.1} parent=11 // pred_region
        _
      $region24: #{tpu_custom_call.1} parent=11 // pred_fallthru
        _
      // Predicated region
      $region25: #{tpu_custom_call.1} parent=11 // pred_check
        %p347 = pneg %p129
      $region26: #{tpu_custom_call.1} parent=11 // pred_check_branch
        %349 = sbr.rel (%p347) target = $region28
      $region27: #{tpu_custom_call.1} parent=11 // pred_region
        _
      $region28: #{tpu_custom_call.1} parent=11 // pred_fallthru
        _
      // Predicated region
      $region29: #{tpu_custom_call.1} parent=11 // pred_check
        %p350 = pneg %p150
      $region30: #{tpu_custom_call.1} parent=11 // pred_check_branch
        %352 = sbr.rel (%p350) target = $region32
      $region31: #{tpu_custom_call.1} parent=11 // pred_region
        _
      $region32: #{tpu_custom_call.1} parent=11 // pred_fallthru
        _
      // Predicated region
      $region33: #{tpu_custom_call.1} parent=11 // pred_check
        %p353 = pneg %p171
      $region34: #{tpu_custom_call.1} parent=11 // pred_check_branch
        %355 = sbr.rel (%p353) target = $region36
      $region35: #{tpu_custom_call.1} parent=11 // pred_region
        _
      $region36: #{tpu_custom_call.1} parent=11 // pred_fallthru
        _
      // Predicated region
      $region37: #{tpu_custom_call.1} parent=11 // pred_check
        %p356 = pneg %p192
      $region38: #{tpu_custom_call.1} parent=11 // pred_check_branch
        %358 = sbr.rel (%p356) target = $region40
      $region39: #{tpu_custom_call.1} parent=11 // pred_region
        _
      $region40: #{tpu_custom_call.1} parent=11 // pred_fallthru
        _
      // Predicated region
      $region41: #{tpu_custom_call.1} parent=11 // pred_check
        %p359 = pneg %p213
      $region42: #{tpu_custom_call.1} parent=11 // pred_check_branch
        %361 = sbr.rel (%p359) target = $region44
      $region43: #{tpu_custom_call.1} parent=11 // pred_region
        _
      $region44: #{tpu_custom_call.1} parent=11 // pred_fallthru
        _
      // Predicated region
      $region45: #{tpu_custom_call.1} parent=11 // pred_check
        %p362 = pneg %p234
      $region46: #{tpu_custom_call.1} parent=11 // pred_check_branch
        %364 = sbr.rel (%p362) target = $region48
      $region47: #{tpu_custom_call.1} parent=11 // pred_region
        _
      $region48: #{tpu_custom_call.1} parent=11 // pred_fallthru
        _
      // Predicated region
      $region49: #{tpu_custom_call.1} parent=11 // pred_check
        %p365 = pneg %p255
      $region50: #{tpu_custom_call.1} parent=11 // pred_check_branch
        %367 = sbr.rel (%p365) target = $region52
      $region51: #{tpu_custom_call.1} parent=11 // pred_region
        _
      $region52: #{tpu_custom_call.1} parent=11 // pred_fallthru
        _
      // Predicated region
      $region53: #{tpu_custom_call.1} parent=11 // pred_check
        %p368 = pneg %p276
      $region54: #{tpu_custom_call.1} parent=11 // pred_check_branch
        %370 = sbr.rel (%p368) target = $region56
      $region55: #{tpu_custom_call.1} parent=11 // pred_region
        _
      $region56: #{tpu_custom_call.1} parent=11 // pred_fallthru
        _
      // Predicated region
      $region57: #{tpu_custom_call.1} parent=11 // pred_check
        %p371 = pneg %p297
      $region58: #{tpu_custom_call.1} parent=11 // pred_check_branch
        %373 = sbr.rel (%p371) target = $region60
      $region59: #{tpu_custom_call.1} parent=11 // pred_region
        _
      $region60: #{tpu_custom_call.1} parent=11 // pred_fallthru
        _
    $region12: #{tpu_custom_call.1} parent=5 // pred_fallthru
      _
    %p374 = scmp.lt.s32.totalorder %s19, 2
    // Predicated region
    $region61: #{tpu_custom_call.1} parent=5 // pred_check
      %p375 = pneg %p374
    $region62: #{tpu_custom_call.1} parent=5 // pred_check_branch
      %377 = sbr.rel (%p375) target = $region64
    $region63: #{tpu_custom_call.1} parent=5 // pred_region
      // Predicated region
      $region65: #{tpu_custom_call.1} parent=63 // pred_check
        %p378 = pneg %p39
      $region66: #{tpu_custom_call.1} parent=63 // pred_check_branch
        %380 = sbr.rel (%p378) target = $region68
      $region67: #{tpu_custom_call.1} parent=63 // pred_region
        %p381 = scmp.lt.s32.totalorder %s19, 1
        %s382 = scalar_select %p381, %s19, 1
        %s383 = smul.addr %s382, 32
        %s384 = smul.addr %s383, 8
        %s385 = scalar_lea.vmem %s0, %s384
      $region68: #{tpu_custom_call.1} parent=63 // pred_fallthru
        _
    $region64: #{tpu_custom_call.1} parent=5 // pred_fallthru
      _
    %p386 = scmp.le.s32.totalorder 1, %s19
    %p387 = scmp.lt.s32.totalorder %s19, 3
    %p388 = pnand %p386, %p387
    %p389 = pneg %p388
    // Predicated region
    $region69: #{tpu_custom_call.1} parent=5 // pred_check
      _
    $region70: #{tpu_custom_call.1} parent=5 // pred_check_branch
      %391 = sbr.rel (%p388) target = $region72
    $region71: #{tpu_custom_call.1} parent=5 // pred_region
      %s392 = ssub.s32 %s19, 1
      %p393 = scmp.lt.s32.totalorder %s24, 1
      %s394 = scalar_select %p393, %s24, 1
      %s395 = smul.addr %s394, 32
      %s396 = smul.addr %s395, 8
      %s397 = scalar_lea.vmem %s0, %s396
      %p398 = pneg %p45
      %p399 = pneg %p42
      %p400 = pneg %p66
      %p401 = pneg %p63
      %p402 = pneg %p87
      %p403 = pneg %p84
      %p404 = pneg %p108
      %p405 = pneg %p105
      %p406 = pneg %p129
      %p407 = pneg %p126
      %p408 = pneg %p150
      %p409 = pneg %p147
      %p410 = pneg %p171
      %p411 = pneg %p168
      %p412 = pneg %p192
      %p413 = pneg %p189
      %p414 = pneg %p213
      %p415 = pneg %p210
      %p416 = pneg %p234
      %p417 = pneg %p231
      %p418 = pneg %p255
      %p419 = pneg %p252
      %p420 = pneg %p276
      %p421 = pneg %p273
      %p422 = pneg %p297
      %p423 = pneg %p294
      %p424 = pneg %p323
      %p425 = pneg %p320
      %p426 = scmp.lt.s32.totalorder %s24, 1
      %s427 = scalar_select %p426, %s24, 1
      %s428 = smul.addr %s427, 32
      %s429 = smul.addr %s428, 8
      %s430 = scalar_lea.vmem %s13, %s429
      %p431 = scmp.lt.s32.totalorder %s24, 1
      %s432 = scalar_select %p431, %s24, 1
      %s433 = smul.addr %s432, 32
      %s434 = smul.addr %s433, 8
      %s435 = scalar_lea.vmem %s0, %s434
      %p436 = scmp.lt.s32.totalorder %s24, 1
      %s437 = scalar_select %p436, %s24, 1
      %s438 = smul.addr %s437, 32
      %s439 = smul.addr %s438, 8
      %s440 = scalar_lea.vmem %s13, %s439
      %v442 = vld [vmem:[%s435] sm:$0xff]
      %v443 = vld [vmem:[%s435 + $0x8] sm:$0xff]
      %v444 = vld [vmem:[%s435 + $0x10] sm:$0xff]
      %v445 = vld [vmem:[%s435 + $0x18] sm:$0xff]
      %v446 = vld [vmem:[%s435 + $0x20] sm:$0xff]
      %v447 = vld [vmem:[%s435 + $0x28] sm:$0xff]
      %v448 = vld [vmem:[%s435 + $0x30] sm:$0xff]
      %v449 = vld [vmem:[%s435 + $0x38] sm:$0xff]
      %v450 = vld [vmem:[%s435 + $0x40] sm:$0xff]
      %v451 = vld [vmem:[%s435 + $0x48] sm:$0xff]
      %v452 = vld [vmem:[%s435 + $0x50] sm:$0xff]
      %v453 = vld [vmem:[%s435 + $0x58] sm:$0xff]
      %v454 = vld [vmem:[%s435 + $0x60] sm:$0xff]
      %v455 = vld [vmem:[%s435 + $0x68] sm:$0xff]
      %v456 = vld [vmem:[%s435 + $0x70] sm:$0xff]
      %v457 = vld [vmem:[%s435 + $0x78] sm:$0xff]
      %v458 = vld [vmem:[%s435 + $0x80] sm:$0xff]
      %v459 = vld [vmem:[%s435 + $0x88] sm:$0xff]
      %v460 = vld [vmem:[%s435 + $0x90] sm:$0xff]
      %v461 = vld [vmem:[%s435 + $0x98] sm:$0xff]
      %v462 = vld [vmem:[%s435 + $0xa0] sm:$0xff]
      %v463 = vld [vmem:[%s435 + $0xa8] sm:$0xff]
      %v464 = vld [vmem:[%s435 + $0xb0] sm:$0xff]
      %v465 = vld [vmem:[%s435 + $0xb8] sm:$0xff]
      %v466 = vld [vmem:[%s435 + $0xc0] sm:$0xff]
      %v467 = vld [vmem:[%s435 + $0xc8] sm:$0xff]
      %v468 = vld [vmem:[%s435 + $0xd0] sm:$0xff]
      %v469 = vld [vmem:[%s435 + $0xd8] sm:$0xff]
      %v470 = vld [vmem:[%s435 + $0xe0] sm:$0xff]
      %v471 = vld [vmem:[%s435 + $0xe8] sm:$0xff]
      %v472 = vld [vmem:[%s435 + $0xf0] sm:$0xff]
      %v473 = vld [vmem:[%s435 + $0xf8] sm:$0xff]
      %v474 = vpack.c.bf16 %v443, %v442
      %v475 = vpack.c.bf16 %v445, %v444
      %v476 = vpack.c.bf16 %v447, %v446
      %v477 = vpack.c.bf16 %v449, %v448
      %v478 = vpack.c.bf16 %v451, %v450
      %v479 = vpack.c.bf16 %v453, %v452
      %v480 = vpack.c.bf16 %v455, %v454
      %v481 = vpack.c.bf16 %v457, %v456
      %v482 = vpack.c.bf16 %v459, %v458
      %v483 = vpack.c.bf16 %v461, %v460
      %v484 = vpack.c.bf16 %v463, %v462
      %v485 = vpack.c.bf16 %v465, %v464
      %v486 = vpack.c.bf16 %v467, %v466
      %v487 = vpack.c.bf16 %v469, %v468
      %v488 = vpack.c.bf16 %v471, %v470
      %v489 = vpack.c.bf16 %v473, %v472
      %v490 = vld [vmem:[%s1] sm:$0x3]
      %v491 = vld [vmem:[%s2] sm:$0x1]
      %v493 = vlaneseq
      %v494 = vshrl.u32 %v493, 7
      %v495 = vsub.s32 0, %v494
      %v496 = vrot.slane %v491, %v495
      %vm498 = vcmask 31744
      %v500 = vsel %vm498, %v474, 0
      %v503 = vsel %vm498, %v475, 0
      %v506 = vsel %vm498, %v476, 0
      %v509 = vsel %vm498, %v477, 0
      %v512 = vsel %vm498, %v478, 0
      %v515 = vsel %vm498, %v479, 0
      %v518 = vsel %vm498, %v480, 0
      %v521 = vsel %vm498, %v481, 0
      %v524 = vsel %vm498, %v482, 0
      %v527 = vsel %vm498, %v483, 0
      %v530 = vsel %vm498, %v484, 0
      %v533 = vsel %vm498, %v485, 0
      %v536 = vsel %vm498, %v486, 0
      %v539 = vsel %vm498, %v487, 0
      %v542 = vsel %vm498, %v488, 0
      %v545 = vsel %vm498, %v489, 0
      %vm547 = vcmask 1041408
      %v549 = vsel %vm547, %v490, 0
      %551 = vmatprep.subr.bf16.mxu0 0
      %552 = vmatpush1.bf16.msra.mxu0 %v549
      %553 = vmatprep.subr.bf16.mxu0 0
      %554 = vmatpush1.bf16.msra.mxu0 0
      %555 = vmatprep.subr.bf16.mxu0 0
      %556 = vmatpush1.bf16.msra.mxu0 0
      %557 = vmatprep.subr.bf16.mxu0 0
      %558 = vmatpush1.bf16.msra.mxu0 0
      %559 = vmatprep.subr.bf16.mxu0 0
      %560 = vmatpush1.bf16.msra.mxu0 0
      %561 = vmatprep.subr.bf16.mxu0 0
      %562 = vmatpush1.bf16.msra.mxu0 0
      %563 = vmatprep.subr.bf16.mxu0 0
      %564 = vmatpush1.bf16.msra.mxu0 0
      %565 = vmatprep.subr.bf16.mxu0 0
      %566 = vmatpush1.bf16.msra.mxu0 0
      %567 = vmatprep.subr.bf16.mxu0 0
      %568 = vmatpush1.bf16.msra.mxu0 0
      %569 = vmatprep.subr.bf16.mxu0 0
      %570 = vmatpush1.bf16.msra.mxu0 0
      %571 = vmatprep.subr.bf16.mxu0 0
      %572 = vmatpush1.bf16.msra.mxu0 0
      %573 = vmatprep.subr.bf16.mxu0 0
      %574 = vmatpush1.bf16.msra.mxu0 0
      %575 = vmatprep.subr.bf16.mxu0 0
      %576 = vmatpush1.bf16.msra.mxu0 0
      %577 = vmatprep.subr.bf16.mxu0 0
      %578 = vmatpush1.bf16.msra.mxu0 0
      %579 = vmatprep.subr.bf16.mxu0 0
      %580 = vmatpush1.bf16.msra.mxu0 0
      %581 = vmatprep.subr.bf16.mxu0 0
      %582 = vmatpush1.bf16.msra.mxu0 0
      %583 = vmatprep.mubr.bf16.mxu0 0
      %584 = vmatmul.mubr.bf16.gmra.mrb[0].mxu0 %v500
      %v585 = vpop.f32.mrb[0].mxu0
      %v586 = vadd.f32 %v496, %v585
      %v587 = vpop.f32.mrb[0].mxu0
      %v588 = vpop.f32.mrb[0].mxu0
      %v589 = vadd.f32 %v496, %v588
      %v590 = vpop.f32.mrb[0].mxu0
      %591 = vmatprep.mubr.bf16.mxu0 0
      %592 = vmatmul.mubr.bf16.gmra.mrb[0].mxu0 %v503
      %v593 = vpop.f32.mrb[0].mxu0
      %v594 = vadd.f32 %v496, %v593
      %v595 = vpop.f32.mrb[0].mxu0
      %v596 = vpop.f32.mrb[0].mxu0
      %v597 = vadd.f32 %v496, %v596
      %v598 = vpop.f32.mrb[0].mxu0
      %599 = vmatprep.mubr.bf16.mxu0 0
      %600 = vmatmul.mubr.bf16.gmra.mrb[0].mxu0 %v506
      %v601 = vpop.f32.mrb[0].mxu0
      %v602 = vadd.f32 %v496, %v601
      %v603 = vpop.f32.mrb[0].mxu0
      %v604 = vpop.f32.mrb[0].mxu0
      %v605 = vadd.f32 %v496, %v604
      %v606 = vpop.f32.mrb[0].mxu0
      %607 = vmatprep.mubr.bf16.mxu0 0
      %608 = vmatmul.mubr.bf16.gmra.mrb[0].mxu0 %v509
      %v609 = vpop.f32.mrb[0].mxu0
      %v610 = vadd.f32 %v496, %v609
      %v611 = vpop.f32.mrb[0].mxu0
      %v612 = vpop.f32.mrb[0].mxu0
      %v613 = vadd.f32 %v496, %v612
      %v614 = vpop.f32.mrb[0].mxu0
      %615 = vmatprep.mubr.bf16.mxu0 0
      %616 = vmatmul.mubr.bf16.gmra.mrb[0].mxu0 %v512
      %v617 = vpop.f32.mrb[0].mxu0
      %v618 = vadd.f32 %v496, %v617
      %v619 = vpop.f32.mrb[0].mxu0
      %v620 = vpop.f32.mrb[0].mxu0
      %v621 = vadd.f32 %v496, %v620
      %v622 = vpop.f32.mrb[0].mxu0
      %623 = vmatprep.mubr.bf16.mxu0 0
      %624 = vmatmul.mubr.bf16.gmra.mrb[0].mxu0 %v515
      %v625 = vpop.f32.mrb[0].mxu0
      %v626 = vadd.f32 %v496, %v625
      %v627 = vpop.f32.mrb[0].mxu0
      %v628 = vpop.f32.mrb[0].mxu0
      %v629 = vadd.f32 %v496, %v628
      %v630 = vpop.f32.mrb[0].mxu0
      %631 = vmatprep.mubr.bf16.mxu0 0
      %632 = vmatmul.mubr.bf16.gmra.mrb[0].mxu0 %v518
      %v633 = vpop.f32.mrb[0].mxu0
      %v634 = vadd.f32 %v496, %v633
      %v635 = vpop.f32.mrb[0].mxu0
      %v636 = vpop.f32.mrb[0].mxu0
      %v637 = vadd.f32 %v496, %v636
      %v638 = vpop.f32.mrb[0].mxu0
      %639 = vmatprep.mubr.bf16.mxu0 0
      %640 = vmatmul.mubr.bf16.gmra.mrb[0].mxu0 %v521
      %v641 = vpop.f32.mrb[0].mxu0
      %v642 = vadd.f32 %v496, %v641
      %v643 = vpop.f32.mrb[0].mxu0
      %v644 = vpop.f32.mrb[0].mxu0
      %v645 = vadd.f32 %v496, %v644
      %v646 = vpop.f32.mrb[0].mxu0
      %647 = vmatprep.mubr.bf16.mxu0 0
      %648 = vmatmul.mubr.bf16.gmra.mrb[0].mxu0 %v524
      %v649 = vpop.f32.mrb[0].mxu0
      %v650 = vadd.f32 %v496, %v649
      %v651 = vpop.f32.mrb[0].mxu0
      %v652 = vpop.f32.mrb[0].mxu0
      %v653 = vadd.f32 %v496, %v652
      %v654 = vpop.f32.mrb[0].mxu0
      %655 = vmatprep.mubr.bf16.mxu0 0
      %656 = vmatmul.mubr.bf16.gmra.mrb[0].mxu0 %v527
      %v657 = vpop.f32.mrb[0].mxu0
      %v658 = vadd.f32 %v496, %v657
      %v659 = vpop.f32.mrb[0].mxu0
      %v660 = vpop.f32.mrb[0].mxu0
      %v661 = vadd.f32 %v496, %v660
      %v662 = vpop.f32.mrb[0].mxu0
      %663 = vmatprep.mubr.bf16.mxu0 0
      %664 = vmatmul.mubr.bf16.gmra.mrb[0].mxu0 %v530
      %v665 = vpop.f32.mrb[0].mxu0
      %v666 = vadd.f32 %v496, %v665
      %v667 = vpop.f32.mrb[0].mxu0
      %v668 = vpop.f32.mrb[0].mxu0
      %v669 = vadd.f32 %v496, %v668
      %v670 = vpop.f32.mrb[0].mxu0
      %671 = vmatprep.mubr.bf16.mxu0 0
      %672 = vmatmul.mubr.bf16.gmra.mrb[0].mxu0 %v533
      %v673 = vpop.f32.mrb[0].mxu0
      %v674 = vadd.f32 %v496, %v673
      %v675 = vpop.f32.mrb[0].mxu0
      %v676 = vpop.f32.mrb[0].mxu0
      %v677 = vadd.f32 %v496, %v676
      %v678 = vpop.f32.mrb[0].mxu0
      %679 = vmatprep.mubr.bf16.mxu0 0
      %680 = vmatmul.mubr.bf16.gmra.mrb[0].mxu0 %v536
      %v681 = vpop.f32.mrb[0].mxu0
      %v682 = vadd.f32 %v496, %v681
      %v683 = vpop.f32.mrb[0].mxu0
      %v684 = vpop.f32.mrb[0].mxu0
      %v685 = vadd.f32 %v496, %v684
      %v686 = vpop.f32.mrb[0].mxu0
      %687 = vmatprep.mubr.bf16.mxu0 0
      %688 = vmatmul.mubr.bf16.gmra.mrb[0].mxu0 %v539
      %v689 = vpop.f32.mrb[0].mxu0
      %v690 = vadd.f32 %v496, %v689
      %v691 = vpop.f32.mrb[0].mxu0
      %v692 = vpop.f32.mrb[0].mxu0
      %v693 = vadd.f32 %v496, %v692
      %v694 = vpop.f32.mrb[0].mxu0
      %695 = vmatprep.mubr.bf16.mxu0 0
      %696 = vmatmul.mubr.bf16.gmra.mrb[0].mxu0 %v542
      %v697 = vpop.f32.mrb[0].mxu0
      %v698 = vadd.f32 %v496, %v697
      %v699 = vpop.f32.mrb[0].mxu0
      %v700 = vpop.f32.mrb[0].mxu0
      %v701 = vadd.f32 %v496, %v700
      %v702 = vpop.f32.mrb[0].mxu0
      %703 = vmatprep.mubr.bf16.mxu0 0
      %704 = vmatmul.mubr.bf16.gmra.mrb[0].mxu0 %v545
      %v705 = vpop.f32.mrb[0].mxu0
      %v706 = vadd.f32 %v496, %v705
      %v707 = vpop.f32.mrb[0].mxu0
      %v708 = vpop.f32.mrb[0].mxu0
      %v709 = vadd.f32 %v496, %v708
      %v710 = vpop.f32.mrb[0].mxu0
      %711 = vdwg.mxu0
      %v712 = vmax.f32 %v586, 0.0
      %v713 = vmax.f32 %v589, 0.0
      %v714 = vmax.f32 %v594, 0.0
      %v715 = vmax.f32 %v597, 0.0
      %v716 = vmax.f32 %v602, 0.0
      %v717 = vmax.f32 %v605, 0.0
      %v718 = vmax.f32 %v610, 0.0
      %v719 = vmax.f32 %v613, 0.0
      %v720 = vmax.f32 %v618, 0.0
      %v721 = vmax.f32 %v621, 0.0
      %v722 = vmax.f32 %v626, 0.0
      %v723 = vmax.f32 %v629, 0.0
      %v724 = vmax.f32 %v634, 0.0
      %v725 = vmax.f32 %v637, 0.0
      %v726 = vmax.f32 %v642, 0.0
      %v727 = vmax.f32 %v645, 0.0
      %v728 = vmax.f32 %v650, 0.0
      %v729 = vmax.f32 %v653, 0.0
      %v730 = vmax.f32 %v658, 0.0
      %v731 = vmax.f32 %v661, 0.0
      %v732 = vmax.f32 %v666, 0.0
      %v733 = vmax.f32 %v669, 0.0
      %v734 = vmax.f32 %v674, 0.0
      %v735 = vmax.f32 %v677, 0.0
      %v736 = vmax.f32 %v682, 0.0
      %v737 = vmax.f32 %v685, 0.0
      %v738 = vmax.f32 %v690, 0.0
      %v739 = vmax.f32 %v693, 0.0
      %v740 = vmax.f32 %v698, 0.0
      %v741 = vmax.f32 %v701, 0.0
      %v742 = vmax.f32 %v706, 0.0
      %v743 = vmax.f32 %v709, 0.0
      %vm744 = vcmask 15360
      %745 = vst.msk [vmem:[#allocation2] sm:$0xff] %vm744, 0.0
      %746 = vst.msk [vmem:[#allocation2 + $0x8] sm:$0xff] %vm744, 0.0
      %vm747 = vcmask 9216
      %748 = vst.msk [vmem:[#allocation2 + $0x10] sm:$0x3] %vm747, 0.0
      %749 = vst.msk [vmem:[#allocation2 + $0x18] sm:$0xff] %vm744, 0.0
      %750 = vst.msk [vmem:[#allocation2 + $0x20] sm:$0xff] %vm744, 0.0
      %751 = vst.msk [vmem:[#allocation2 + $0x28] sm:$0x3] %vm747, 0.0
      %752 = vst.msk [vmem:[#allocation2 + $0x30] sm:$0xff] %vm744, 0.0
      %753 = vst.msk [vmem:[#allocation2 + $0x38] sm:$0xff] %vm744, 0.0
      %754 = vst.msk [vmem:[#allocation2 + $0x40] sm:$0x3] %vm747, 0.0
      %755 = vst.msk [vmem:[#allocation2 + $0x48] sm:$0xff] %vm744, 0.0
      %756 = vst.msk [vmem:[#allocation2 + $0x50] sm:$0xff] %vm744, 0.0
      %757 = vst.msk [vmem:[#allocation2 + $0x58] sm:$0x3] %vm747, 0.0
      %758 = vst.msk [vmem:[#allocation2 + $0x60] sm:$0xff] %vm744, 0.0
      %759 = vst.msk [vmem:[#allocation2 + $0x68] sm:$0xff] %vm744, 0.0
      %760 = vst.msk [vmem:[#allocation2 + $0x70] sm:$0x3] %vm747, 0.0
      %761 = vst.msk [vmem:[#allocation2 + $0x78] sm:$0xff] %vm744, 0.0
      %762 = vst.msk [vmem:[#allocation2 + $0x80] sm:$0xff] %vm744, 0.0
      %763 = vst.msk [vmem:[#allocation2 + $0x88] sm:$0x3] %vm747, 0.0
      %764 = vst.msk [vmem:[#allocation2 + $0x90] sm:$0xff] %vm744, 0.0
      %765 = vst.msk [vmem:[#allocation2 + $0x98] sm:$0xff] %vm744, 0.0
      %766 = vst.msk [vmem:[#allocation2 + $0xa0] sm:$0x3] %vm747, 0.0
      %767 = vst.msk [vmem:[#allocation2 + $0xa8] sm:$0xff] %vm744, 0.0
      %768 = vst.msk [vmem:[#allocation2 + $0xb0] sm:$0xff] %vm744, 0.0
      %769 = vst.msk [vmem:[#allocation2 + $0xb8] sm:$0x3] %vm747, 0.0
      %770 = vst.msk [vmem:[#allocation2 + $0xc0] sm:$0xff] %vm744, 0.0
      %771 = vst.msk [vmem:[#allocation2 + $0xc8] sm:$0xff] %vm744, 0.0
      %772 = vst.msk [vmem:[#allocation2 + $0xd0] sm:$0x3] %vm747, 0.0
      %773 = vst.msk [vmem:[#allocation2 + $0xd8] sm:$0xff] %vm744, 0.0
      %774 = vst.msk [vmem:[#allocation2 + $0xe0] sm:$0xff] %vm744, 0.0
      %775 = vst.msk [vmem:[#allocation2 + $0xe8] sm:$0x3] %vm747, 0.0
      %776 = vst.msk [vmem:[#allocation2 + $0xf0] sm:$0xff] %vm744, 0.0
      %777 = vst.msk [vmem:[#allocation2 + $0xf8] sm:$0xff] %vm744, 0.0
      %778 = vst.msk [vmem:[#allocation2 + $0x100] sm:$0x3] %vm747, 0.0
      %779 = vst.msk [vmem:[#allocation2 + $0x108] sm:$0xff] %vm744, 0.0
      %780 = vst.msk [vmem:[#allocation2 + $0x110] sm:$0xff] %vm744, 0.0
      %781 = vst.msk [vmem:[#allocation2 + $0x118] sm:$0x3] %vm747, 0.0
      %782 = vst.msk [vmem:[#allocation2 + $0x120] sm:$0xff] %vm744, 0.0
      %783 = vst.msk [vmem:[#allocation2 + $0x128] sm:$0xff] %vm744, 0.0
      %784 = vst.msk [vmem:[#allocation2 + $0x130] sm:$0x3] %vm747, 0.0
      %785 = vst.msk [vmem:[#allocation2 + $0x138] sm:$0xff] %vm744, 0.0
      %786 = vst.msk [vmem:[#allocation2 + $0x140] sm:$0xff] %vm744, 0.0
      %787 = vst.msk [vmem:[#allocation2 + $0x148] sm:$0x3] %vm747, 0.0
      %788 = vst.msk [vmem:[#allocation2 + $0x150] sm:$0xff] %vm744, 0.0
      %789 = vst.msk [vmem:[#allocation2 + $0x158] sm:$0xff] %vm744, 0.0
      %790 = vst.msk [vmem:[#allocation2 + $0x160] sm:$0x3] %vm747, 0.0
      %791 = vst.msk [vmem:[#allocation2 + $0x168] sm:$0xff] %vm744, 0.0
      %792 = vst.msk [vmem:[#allocation2 + $0x170] sm:$0xff] %vm744, 0.0
      %793 = vst.msk [vmem:[#allocation2 + $0x178] sm:$0x3] %vm747, 0.0
      %794 = vst.msk [vmem:[#allocation2 + $0x180] sm:$0xff] %vm744, 0.0
      %795 = vst.msk [vmem:[#allocation2 + $0x188] sm:$0xff] %vm744, 0.0
      %796 = vst.msk [vmem:[#allocation2 + $0x190] sm:$0x3] %vm747, 0.0
      %797 = vst.msk [vmem:[#allocation2 + $0x198] sm:$0xff] %vm744, 0.0
      %798 = vst.msk [vmem:[#allocation2 + $0x1a0] sm:$0xff] %vm744, 0.0
      %799 = vst.msk [vmem:[#allocation2 + $0x1a8] sm:$0x3] %vm747, 0.0
      %s800 = scalar_lea.vmem [#allocation2], 24
      %801 = vst.msk [vmem:[%s800 + $0x1] sm:$0xff] %vm744, %v712
      %802 = vst.msk [vmem:[%s800 + $0x9] sm:$0xff] %vm744, %v713
      %803 = vst.msk [vmem:[%s800 + $0x19] sm:$0xff] %vm744, %v714
      %804 = vst.msk [vmem:[%s800 + $0x21] sm:$0xff] %vm744, %v715
      %805 = vst.msk [vmem:[%s800 + $0x31] sm:$0xff] %vm744, %v716
      %806 = vst.msk [vmem:[%s800 + $0x39] sm:$0xff] %vm744, %v717
      %807 = vst.msk [vmem:[%s800 + $0x49] sm:$0xff] %vm744, %v718
      %808 = vst.msk [vmem:[%s800 + $0x51] sm:$0xff] %vm744, %v719
      %809 = vst.msk [vmem:[%s800 + $0x61] sm:$0xff] %vm744, %v720
      %810 = vst.msk [vmem:[%s800 + $0x69] sm:$0xff] %vm744, %v721
      %811 = vst.msk [vmem:[%s800 + $0x79] sm:$0xff] %vm744, %v722
      %812 = vst.msk [vmem:[%s800 + $0x81] sm:$0xff] %vm744, %v723
      %813 = vst.msk [vmem:[%s800 + $0x91] sm:$0xff] %vm744, %v724
      %814 = vst.msk [vmem:[%s800 + $0x99] sm:$0xff] %vm744, %v725
      %815 = vst.msk [vmem:[%s800 + $0xa9] sm:$0xff] %vm744, %v726
      %816 = vst.msk [vmem:[%s800 + $0xb1] sm:$0xff] %vm744, %v727
      %817 = vst.msk [vmem:[%s800 + $0xc1] sm:$0xff] %vm744, %v728
      %818 = vst.msk [vmem:[%s800 + $0xc9] sm:$0xff] %vm744, %v729
      %819 = vst.msk [vmem:[%s800 + $0xd9] sm:$0xff] %vm744, %v730
      %820 = vst.msk [vmem:[%s800 + $0xe1] sm:$0xff] %vm744, %v731
      %821 = vst.msk [vmem:[%s800 + $0xf1] sm:$0xff] %vm744, %v732
      %822 = vst.msk [vmem:[%s800 + $0xf9] sm:$0xff] %vm744, %v733
      %823 = vst.msk [vmem:[%s800 + $0x109] sm:$0xff] %vm744, %v734
      %824 = vst.msk [vmem:[%s800 + $0x111] sm:$0xff] %vm744, %v735
      %825 = vst.msk [vmem:[%s800 + $0x121] sm:$0xff] %vm744, %v736
      %826 = vst.msk [vmem:[%s800 + $0x129] sm:$0xff] %vm744, %v737
      %827 = vst.msk [vmem:[%s800 + $0x139] sm:$0xff] %vm744, %v738
      %828 = vst.msk [vmem:[%s800 + $0x141] sm:$0xff] %vm744, %v739
      %829 = vst.msk [vmem:[%s800 + $0x151] sm:$0xff] %vm744, %v740
      %830 = vst.msk [vmem:[%s800 + $0x159] sm:$0xff] %vm744, %v741
      %831 = vst.msk [vmem:[%s800 + $0x169] sm:$0xff] %vm744, %v742
      %832 = vst.msk [vmem:[%s800 + $0x171] sm:$0xff] %vm744, %v743
      %833 = vst.msk [vmem:[#allocation3] sm:$0xff] %vm744, 0.0
      %834 = vst.msk [vmem:[#allocation3 + $0x8] sm:$0xff] %vm744, 0.0
      %835 = vst.msk [vmem:[#allocation3 + $0x10] sm:$0xff] %vm744, 0.0
      %836 = vst.msk [vmem:[#allocation3 + $0x18] sm:$0xff] %vm744, 0.0
      %837 = vst.msk [vmem:[#allocation3 + $0x20] sm:$0xff] %vm744, 0.0
      %838 = vst.msk [vmem:[#allocation3 + $0x28] sm:$0xff] %vm744, 0.0
      %839 = vst.msk [vmem:[#allocation3 + $0x30] sm:$0xff] %vm744, 0.0
      %840 = vst.msk [vmem:[#allocation3 + $0x38] sm:$0xff] %vm744, 0.0
      %841 = vst.msk [vmem:[#allocation3 + $0x40] sm:$0xff] %vm744, 0.0
      %842 = vst.msk [vmem:[#allocation3 + $0x48] sm:$0xff] %vm744, 0.0
      %843 = vst.msk [vmem:[#allocation3 + $0x50] sm:$0xff] %vm744, 0.0
      %844 = vst.msk [vmem:[#allocation3 + $0x58] sm:$0xff] %vm744, 0.0
      %845 = vst.msk [vmem:[#allocation3 + $0x60] sm:$0xff] %vm744, 0.0
      %846 = vst.msk [vmem:[#allocation3 + $0x68] sm:$0xff] %vm744, 0.0
      %847 = vst.msk [vmem:[#allocation3 + $0x70] sm:$0xff] %vm744, 0.0
      %848 = vst.msk [vmem:[#allocation3 + $0x78] sm:$0xff] %vm744, 0.0
      %849 = vst.msk [vmem:[#allocation3 + $0x80] sm:$0xff] %vm744, 0.0
      %850 = vst.msk [vmem:[#allocation3 + $0x88] sm:$0xff] %vm744, 0.0
      %851 = vst.msk [vmem:[#allocation3 + $0x90] sm:$0xff] %vm744, 0.0
      %852 = vst.msk [vmem:[#allocation3 + $0x98] sm:$0xff] %vm744, 0.0
      %853 = vst.msk [vmem:[#allocation3 + $0xa0] sm:$0xff] %vm744, 0.0
      %854 = vst.msk [vmem:[#allocation3 + $0xa8] sm:$0xff] %vm744, 0.0
      %855 = vst.msk [vmem:[#allocation3 + $0xb0] sm:$0xff] %vm744, 0.0
      %856 = vst.msk [vmem:[#allocation3 + $0xb8] sm:$0xff] %vm744, 0.0
      %857 = vst.msk [vmem:[#allocation3 + $0xc0] sm:$0xff] %vm744, 0.0
      %858 = vst.msk [vmem:[#allocation3 + $0xc8] sm:$0xff] %vm744, 0.0
      %859 = vst.msk [vmem:[#allocation3 + $0xd0] sm:$0xff] %vm744, 0.0
      %860 = vst.msk [vmem:[#allocation3 + $0xd8] sm:$0xff] %vm744, 0.0
      %861 = vst.msk [vmem:[#allocation3 + $0xe0] sm:$0xff] %vm744, 0.0
      %862 = vst.msk [vmem:[#allocation3 + $0xe8] sm:$0xff] %vm744, 0.0
      %863 = vst.msk [vmem:[#allocation3 + $0xf0] sm:$0xff] %vm744, 0.0
      %864 = vst.msk [vmem:[#allocation3 + $0xf8] sm:$0xff] %vm744, 0.0
      %v865 = vld [vmem:[#allocation2] sm:$0xff]
      %v866 = vld [vmem:[#allocation2 + $0x8] sm:$0xff]
      %v867 = vld [vmem:[#allocation2 + $0x18] sm:$0xff]
      %v868 = vld [vmem:[#allocation2 + $0x20] sm:$0xff]
      %v869 = vld [vmem:[#allocation2 + $0x30] sm:$0xff]
      %v870 = vld [vmem:[#allocation2 + $0x38] sm:$0xff]
      %v871 = vld [vmem:[#allocation2 + $0x48] sm:$0xff]
      %v872 = vld [vmem:[#allocation2 + $0x50] sm:$0xff]
      %v873 = vld [vmem:[#allocation2 + $0x60] sm:$0xff]
      %v874 = vld [vmem:[#allocation2 + $0x68] sm:$0xff]
      %v875 = vld [vmem:[#allocation2 + $0x78] sm:$0xff]
      %v876 = vld [vmem:[#allocation2 + $0x80] sm:$0xff]
      %v877 = vld [vmem:[#allocation2 + $0x90] sm:$0xff]
      %v878 = vld [vmem:[#allocation2 + $0x98] sm:$0xff]
      %v879 = vld [vmem:[#allocation2 + $0xa8] sm:$0xff]
      %v880 = vld [vmem:[#allocation2 + $0xb0] sm:$0xff]
      %v881 = vld [vmem:[#allocation2 + $0xc0] sm:$0xff]
      %v882 = vld [vmem:[#allocation2 + $0xc8] sm:$0xff]
      %v883 = vld [vmem:[#allocation2 + $0xd8] sm:$0xff]
      %v884 = vld [vmem:[#allocation2 + $0xe0] sm:$0xff]
      %v885 = vld [vmem:[#allocation2 + $0xf0] sm:$0xff]
      %v886 = vld [vmem:[#allocation2 + $0xf8] sm:$0xff]
      %v887 = vld [vmem:[#allocation2 + $0x108] sm:$0xff]
      %v888 = vld [vmem:[#allocation2 + $0x110] sm:$0xff]
      %v889 = vld [vmem:[#allocation2 + $0x120] sm:$0xff]
      %v890 = vld [vmem:[#allocation2 + $0x128] sm:$0xff]
      %v891 = vld [vmem:[#allocation2 + $0x138] sm:$0xff]
      %v892 = vld [vmem:[#allocation2 + $0x140] sm:$0xff]
      %v893 = vld [vmem:[#allocation2 + $0x150] sm:$0xff]
      %v894 = vld [vmem:[#allocation2 + $0x158] sm:$0xff]
      %v895 = vld [vmem:[#allocation2 + $0x168] sm:$0xff]
      %v896 = vld [vmem:[#allocation2 + $0x170] sm:$0xff]
      %v897 = vld [vmem:[#allocation3] sm:$0xff]
      %v898 = vld [vmem:[#allocation3 + $0x8] sm:$0xff]
      %v899 = vld [vmem:[#allocation3 + $0x10] sm:$0xff]
      %v900 = vld [vmem:[#allocation3 + $0x18] sm:$0xff]
      %v901 = vld [vmem:[#allocation3 + $0x20] sm:$0xff]
      %v902 = vld [vmem:[#allocation3 + $0x28] sm:$0xff]
      %v903 = vld [vmem:[#allocation3 + $0x30] sm:$0xff]
      %v904 = vld [vmem:[#allocation3 + $0x38] sm:$0xff]
      %v905 = vld [vmem:[#allocation3 + $0x40] sm:$0xff]
      %v906 = vld [vmem:[#allocation3 + $0x48] sm:$0xff]
      %v907 = vld [vmem:[#allocation3 + $0x50] sm:$0xff]
      %v908 = vld [vmem:[#allocation3 + $0x58] sm:$0xff]
      %v909 = vld [vmem:[#allocation3 + $0x60] sm:$0xff]
      %v910 = vld [vmem:[#allocation3 + $0x68] sm:$0xff]
      %v911 = vld [vmem:[#allocation3 + $0x70] sm:$0xff]
      %v912 = vld [vmem:[#allocation3 + $0x78] sm:$0xff]
      %v913 = vld [vmem:[#allocation3 + $0x80] sm:$0xff]
      %v914 = vld [vmem:[#allocation3 + $0x88] sm:$0xff]
      %v915 = vld [vmem:[#allocation3 + $0x90] sm:$0xff]
      %v916 = vld [vmem:[#allocation3 + $0x98] sm:$0xff]
      %v917 = vld [vmem:[#allocation3 + $0xa0] sm:$0xff]
      %v918 = vld [vmem:[#allocation3 + $0xa8] sm:$0xff]
      %v919 = vld [vmem:[#allocation3 + $0xb0] sm:$0xff]
      %v920 = vld [vmem:[#allocation3 + $0xb8] sm:$0xff]
      %v921 = vld [vmem:[#allocation3 + $0xc0] sm:$0xff]
      %v922 = vld [vmem:[#allocation3 + $0xc8] sm:$0xff]
      %v923 = vld [vmem:[#allocation3 + $0xd0] sm:$0xff]
      %v924 = vld [vmem:[#allocation3 + $0xd8] sm:$0xff]
      %v925 = vld [vmem:[#allocation3 + $0xe0] sm:$0xff]
      %v926 = vld [vmem:[#allocation3 + $0xe8] sm:$0xff]
      %v927 = vld [vmem:[#allocation3 + $0xf0] sm:$0xff]
      %v928 = vld [vmem:[#allocation3 + $0xf8] sm:$0xff]
      %v929 = vpack.c.bf16 %v866, %v865
      %v930 = vpack.c.bf16 %v868, %v867
      %v931 = vpack.c.bf16 %v870, %v869
      %v932 = vpack.c.bf16 %v872, %v871
      %v933 = vpack.c.bf16 %v874, %v873
      %v934 = vpack.c.bf16 %v876, %v875
      %v935 = vpack.c.bf16 %v878, %v877
      %v936 = vpack.c.bf16 %v880, %v879
      %v937 = vpack.c.bf16 %v882, %v881
      %v938 = vpack.c.bf16 %v884, %v883
      %v939 = vpack.c.bf16 %v886, %v885
      %v940 = vpack.c.bf16 %v888, %v887
      %v941 = vpack.c.bf16 %v890, %v889
      %v942 = vpack.c.bf16 %v892, %v891
      %v943 = vpack.c.bf16 %v894, %v893
      %v944 = vpack.c.bf16 %v896, %v895
      %v945 = vld [vmem:[%s3] sm:$0x1]
      %v947 = vsel %vm744, %v929, 0
      %v950 = vsel %vm744, %v930, 0
      %v953 = vsel %vm744, %v931, 0
      %v956 = vsel %vm744, %v932, 0
      %v959 = vsel %vm744, %v933, 0
      %v962 = vsel %vm744, %v934, 0
      %v965 = vsel %vm744, %v935, 0
      %v968 = vsel %vm744, %v936, 0
      %v971 = vsel %vm744, %v937, 0
      %v974 = vsel %vm744, %v938, 0
      %v977 = vsel %vm744, %v939, 0
      %v980 = vsel %vm744, %v940, 0
      %v983 = vsel %vm744, %v941, 0
      %v986 = vsel %vm744, %v942, 0
      %v989 = vsel %vm744, %v943, 0
      %v992 = vsel %vm744, %v944, 0
      %vm994 = vcmask 1040384
      %v996 = vsel %vm994, %v945, 0
      %998 = vmatprep.subr.bf16.mxu0 0
      %999 = vmatpush1.bf16.msra.mxu0 %v996
      %1000 = vmatprep.subr.bf16.mxu0 0
      %1001 = vmatpush1.bf16.msra.mxu0 0
      %1002 = vmatprep.subr.bf16.mxu0 0
      %1003 = vmatpush1.bf16.msra.mxu0 0
      %1004 = vmatprep.subr.bf16.mxu0 0
      %1005 = vmatpush1.bf16.msra.mxu0 0
      %1006 = vmatprep.subr.bf16.mxu0 0
      %1007 = vmatpush1.bf16.msra.mxu0 0
      %1008 = vmatprep.subr.bf16.mxu0 0
      %1009 = vmatpush1.bf16.msra.mxu0 0
      %1010 = vmatprep.subr.bf16.mxu0 0
      %1011 = vmatpush1.bf16.msra.mxu0 0
      %1012 = vmatprep.subr.bf16.mxu0 0
      %1013 = vmatpush1.bf16.msra.mxu0 0
      %1014 = vmatprep.subr.bf16.mxu0 0
      %1015 = vmatpush1.bf16.msra.mxu0 0
      %1016 = vmatprep.subr.bf16.mxu0 0
      %1017 = vmatpush1.bf16.msra.mxu0 0
      %1018 = vmatprep.subr.bf16.mxu0 0
      %1019 = vmatpush1.bf16.msra.mxu0 0
      %1020 = vmatprep.subr.bf16.mxu0 0
      %1021 = vmatpush1.bf16.msra.mxu0 0
      %1022 = vmatprep.subr.bf16.mxu0 0
      %1023 = vmatpush1.bf16.msra.mxu0 0
      %1024 = vmatprep.subr.bf16.mxu0 0
      %1025 = vmatpush1.bf16.msra.mxu0 0
      %1026 = vmatprep.subr.bf16.mxu0 0
      %1027 = vmatpush1.bf16.msra.mxu0 0
      %1028 = vmatprep.subr.bf16.mxu0 0
      %1029 = vmatpush1.bf16.msra.mxu0 0
      %1030 = vmatprep.mubr.bf16.mxu0 0
      %1031 = vmatmul.mubr.bf16.gmra.mrb[0].mxu0 %v947
      %v1032 = vpop.f32.mrb[0].mxu0
      %v1033 = vadd.f32 0.0, %v1032
      %v1034 = vpop.f32.mrb[0].mxu0
      %v1035 = vpop.f32.mrb[0].mxu0
      %v1036 = vadd.f32 0.0, %v1035
      %v1037 = vpop.f32.mrb[0].mxu0
      %1038 = vmatprep.mubr.bf16.mxu0 0
      %1039 = vmatmul.mubr.bf16.gmra.mrb[0].mxu0 %v950
      %v1040 = vpop.f32.mrb[0].mxu0
      %v1041 = vadd.f32 0.0, %v1040
      %v1042 = vpop.f32.mrb[0].mxu0
      %v1043 = vpop.f32.mrb[0].mxu0
      %v1044 = vadd.f32 0.0, %v1043
      %v1045 = vpop.f32.mrb[0].mxu0
      %1046 = vmatprep.mubr.bf16.mxu0 0
      %1047 = vmatmul.mubr.bf16.gmra.mrb[0].mxu0 %v953
      %v1048 = vpop.f32.mrb[0].mxu0
      %v1049 = vadd.f32 0.0, %v1048
      %v1050 = vpop.f32.mrb[0].mxu0
      %v1051 = vpop.f32.mrb[0].mxu0
      %v1052 = vadd.f32 0.0, %v1051
      %v1053 = vpop.f32.mrb[0].mxu0
      %1054 = vmatprep.mubr.bf16.mxu0 0
      %1055 = vmatmul.mubr.bf16.gmra.mrb[0].mxu0 %v956
      %v1056 = vpop.f32.mrb[0].mxu0
      %v1057 = vadd.f32 0.0, %v1056
      %v1058 = vpop.f32.mrb[0].mxu0
      %v1059 = vpop.f32.mrb[0].mxu0
      %v1060 = vadd.f32 0.0, %v1059
      %v1061 = vpop.f32.mrb[0].mxu0
      %1062 = vmatprep.mubr.bf16.mxu0 0
      %1063 = vmatmul.mubr.bf16.gmra.mrb[0].mxu0 %v959
      %v1064 = vpop.f32.mrb[0].mxu0
      %v1065 = vadd.f32 0.0, %v1064
      %v1066 = vpop.f32.mrb[0].mxu0
      %v1067 = vpop.f32.mrb[0].mxu0
      %v1068 = vadd.f32 0.0, %v1067
      %v1069 = vpop.f32.mrb[0].mxu0
      %1070 = vmatprep.mubr.bf16.mxu0 0
      %1071 = vmatmul.mubr.bf16.gmra.mrb[0].mxu0 %v962
      %v1072 = vpop.f32.mrb[0].mxu0
      %v1073 = vadd.f32 0.0, %v1072
      %v1074 = vpop.f32.mrb[0].mxu0
      %v1075 = vpop.f32.mrb[0].mxu0
      %v1076 = vadd.f32 0.0, %v1075
      %v1077 = vpop.f32.mrb[0].mxu0
      %1078 = vmatprep.mubr.bf16.mxu0 0
      %1079 = vmatmul.mubr.bf16.gmra.mrb[0].mxu0 %v965
      %v1080 = vpop.f32.mrb[0].mxu0
      %v1081 = vadd.f32 0.0, %v1080
      %v1082 = vpop.f32.mrb[0].mxu0
      %v1083 = vpop.f32.mrb[0].mxu0
      %v1084 = vadd.f32 0.0, %v1083
      %v1085 = vpop.f32.mrb[0].mxu0
      %1086 = vmatprep.mubr.bf16.mxu0 0
      %1087 = vmatmul.mubr.bf16.gmra.mrb[0].mxu0 %v968
      %v1088 = vpop.f32.mrb[0].mxu0
      %v1089 = vadd.f32 0.0, %v1088
      %v1090 = vpop.f32.mrb[0].mxu0
      %v1091 = vpop.f32.mrb[0].mxu0
      %v1092 = vadd.f32 0.0, %v1091
      %v1093 = vpop.f32.mrb[0].mxu0
      %1094 = vmatprep.mubr.bf16.mxu0 0
      %1095 = vmatmul.mubr.bf16.gmra.mrb[0].mxu0 %v971
      %v1096 = vpop.f32.mrb[0].mxu0
      %v1097 = vadd.f32 0.0, %v1096
      %v1098 = vpop.f32.mrb[0].mxu0
      %v1099 = vpop.f32.mrb[0].mxu0
      %v1100 = vadd.f32 0.0, %v1099
      %v1101 = vpop.f32.mrb[0].mxu0
      %1102 = vmatprep.mubr.bf16.mxu0 0
      %1103 = vmatmul.mubr.bf16.gmra.mrb[0].mxu0 %v974
      %v1104 = vpop.f32.mrb[0].mxu0
      %v1105 = vadd.f32 0.0, %v1104
      %v1106 = vpop.f32.mrb[0].mxu0
      %v1107 = vpop.f32.mrb[0].mxu0
      %v1108 = vadd.f32 0.0, %v1107
      %v1109 = vpop.f32.mrb[0].mxu0
      %1110 = vmatprep.mubr.bf16.mxu0 0
      %1111 = vmatmul.mubr.bf16.gmra.mrb[0].mxu0 %v977
      %v1112 = vpop.f32.mrb[0].mxu0
      %v1113 = vadd.f32 0.0, %v1112
      %v1114 = vpop.f32.mrb[0].mxu0
      %v1115 = vpop.f32.mrb[0].mxu0
      %v1116 = vadd.f32 0.0, %v1115
      %v1117 = vpop.f32.mrb[0].mxu0
      %1118 = vmatprep.mubr.bf16.mxu0 0
      %1119 = vmatmul.mubr.bf16.gmra.mrb[0].mxu0 %v980
      %v1120 = vpop.f32.mrb[0].mxu0
      %v1121 = vadd.f32 0.0, %v1120
      %v1122 = vpop.f32.mrb[0].mxu0
      %v1123 = vpop.f32.mrb[0].mxu0
      %v1124 = vadd.f32 0.0, %v1123
      %v1125 = vpop.f32.mrb[0].mxu0
      %1126 = vmatprep.mubr.bf16.mxu0 0
      %1127 = vmatmul.mubr.bf16.gmra.mrb[0].mxu0 %v983
      %v1128 = vpop.f32.mrb[0].mxu0
      %v1129 = vadd.f32 0.0, %v1128
      %v1130 = vpop.f32.mrb[0].mxu0
      %v1131 = vpop.f32.mrb[0].mxu0
      %v1132 = vadd.f32 0.0, %v1131
      %v1133 = vpop.f32.mrb[0].mxu0
      %1134 = vmatprep.mubr.bf16.mxu0 0
      %1135 = vmatmul.mubr.bf16.gmra.mrb[0].mxu0 %v986
      %v1136 = vpop.f32.mrb[0].mxu0
      %v1137 = vadd.f32 0.0, %v1136
      %v1138 = vpop.f32.mrb[0].mxu0
      %v1139 = vpop.f32.mrb[0].mxu0
      %v1140 = vadd.f32 0.0, %v1139
      %v1141 = vpop.f32.mrb[0].mxu0
      %1142 = vmatprep.mubr.bf16.mxu0 0
      %1143 = vmatmul.mubr.bf16.gmra.mrb[0].mxu0 %v989
      %v1144 = vpop.f32.mrb[0].mxu0
      %v1145 = vadd.f32 0.0, %v1144
      %v1146 = vpop.f32.mrb[0].mxu0
      %v1147 = vpop.f32.mrb[0].mxu0
      %v1148 = vadd.f32 0.0, %v1147
      %v1149 = vpop.f32.mrb[0].mxu0
      %1150 = vmatprep.mubr.bf16.mxu0 0
      %1151 = vmatmul.mubr.bf16.gmra.mrb[0].mxu0 %v992
      %v1152 = vpop.f32.mrb[0].mxu0
      %v1153 = vadd.f32 0.0, %v1152
      %v1154 = vpop.f32.mrb[0].mxu0
      %v1155 = vpop.f32.mrb[0].mxu0
      %v1156 = vadd.f32 0.0, %v1155
      %v1157 = vpop.f32.mrb[0].mxu0
      %1158 = vdwg.mxu0
      %v1159 = vadd.f32 %v897, %v1033
      %v1160 = vadd.f32 %v898, %v1036
      %v1161 = vadd.f32 %v899, %v1041
      %v1162 = vadd.f32 %v900, %v1044
      %v1163 = vadd.f32 %v901, %v1049
      %v1164 = vadd.f32 %v902, %v1052
      %v1165 = vadd.f32 %v903, %v1057
      %v1166 = vadd.f32 %v904, %v1060
      %v1167 = vadd.f32 %v905, %v1065
      %v1168 = vadd.f32 %v906, %v1068
      %v1169 = vadd.f32 %v907, %v1073
      %v1170 = vadd.f32 %v908, %v1076
      %v1171 = vadd.f32 %v909, %v1081
      %v1172 = vadd.f32 %v910, %v1084
      %v1173 = vadd.f32 %v911, %v1089
      %v1174 = vadd.f32 %v912, %v1092
      %v1175 = vadd.f32 %v913, %v1097
      %v1176 = vadd.f32 %v914, %v1100
      %v1177 = vadd.f32 %v915, %v1105
      %v1178 = vadd.f32 %v916, %v1108
      %v1179 = vadd.f32 %v917, %v1113
      %v1180 = vadd.f32 %v918, %v1116
      %v1181 = vadd.f32 %v919, %v1121
      %v1182 = vadd.f32 %v920, %v1124
      %v1183 = vadd.f32 %v921, %v1129
      %v1184 = vadd.f32 %v922, %v1132
      %v1185 = vadd.f32 %v923, %v1137
      %v1186 = vadd.f32 %v924, %v1140
      %v1187 = vadd.f32 %v925, %v1145
      %v1188 = vadd.f32 %v926, %v1148
      %v1189 = vadd.f32 %v927, %v1153
      %v1190 = vadd.f32 %v928, %v1156
      %1191 = vst.msk [vmem:[#allocation3] sm:$0xff] %vm744, %v1159
      %1192 = vst.msk [vmem:[#allocation3 + $0x8] sm:$0xff] %vm744, %v1160
      %1193 = vst.msk [vmem:[#allocation3 + $0x10] sm:$0xff] %vm744, %v1161
      %1194 = vst.msk [vmem:[#allocation3 + $0x18] sm:$0xff] %vm744, %v1162
      %1195 = vst.msk [vmem:[#allocation3 + $0x20] sm:$0xff] %vm744, %v1163
      %1196 = vst.msk [vmem:[#allocation3 + $0x28] sm:$0xff] %vm744, %v1164
      %1197 = vst.msk [vmem:[#allocation3 + $0x30] sm:$0xff] %vm744, %v1165
      %1198 = vst.msk [vmem:[#allocation3 + $0x38] sm:$0xff] %vm744, %v1166
      %1199 = vst.msk [vmem:[#allocation3 + $0x40] sm:$0xff] %vm744, %v1167
      %1200 = vst.msk [vmem:[#allocation3 + $0x48] sm:$0xff] %vm744, %v1168
      %1201 = vst.msk [vmem:[#allocation3 + $0x50] sm:$0xff] %vm744, %v1169
      %1202 = vst.msk [vmem:[#allocation3 + $0x58] sm:$0xff] %vm744, %v1170
      %1203 = vst.msk [vmem:[#allocation3 + $0x60] sm:$0xff] %vm744, %v1171
      %1204 = vst.msk [vmem:[#allocation3 + $0x68] sm:$0xff] %vm744, %v1172
      %1205 = vst.msk [vmem:[#allocation3 + $0x70] sm:$0xff] %vm744, %v1173
      %1206 = vst.msk [vmem:[#allocation3 + $0x78] sm:$0xff] %vm744, %v1174
      %1207 = vst.msk [vmem:[#allocation3 + $0x80] sm:$0xff] %vm744, %v1175
      %1208 = vst.msk [vmem:[#allocation3 + $0x88] sm:$0xff] %vm744, %v1176
      %1209 = vst.msk [vmem:[#allocation3 + $0x90] sm:$0xff] %vm744, %v1177
      %1210 = vst.msk [vmem:[#allocation3 + $0x98] sm:$0xff] %vm744, %v1178
      %1211 = vst.msk [vmem:[#allocation3 + $0xa0] sm:$0xff] %vm744, %v1179
      %1212 = vst.msk [vmem:[#allocation3 + $0xa8] sm:$0xff] %vm744, %v1180
      %1213 = vst.msk [vmem:[#allocation3 + $0xb0] sm:$0xff] %vm744, %v1181
      %1214 = vst.msk [vmem:[#allocation3 + $0xb8] sm:$0xff] %vm744, %v1182
      %1215 = vst.msk [vmem:[#allocation3 + $0xc0] sm:$0xff] %vm744, %v1183
      %1216 = vst.msk [vmem:[#allocation3 + $0xc8] sm:$0xff] %vm744, %v1184
      %1217 = vst.msk [vmem:[#allocation3 + $0xd0] sm:$0xff] %vm744, %v1185
      %1218 = vst.msk [vmem:[#allocation3 + $0xd8] sm:$0xff] %vm744, %v1186
      %1219 = vst.msk [vmem:[#allocation3 + $0xe0] sm:$0xff] %vm744, %v1187
      %1220 = vst.msk [vmem:[#allocation3 + $0xe8] sm:$0xff] %vm744, %v1188
      %1221 = vst.msk [vmem:[#allocation3 + $0xf0] sm:$0xff] %vm744, %v1189
      %1222 = vst.msk [vmem:[#allocation3 + $0xf8] sm:$0xff] %vm744, %v1190
      %v1223 = vld [vmem:[#allocation2 + $0x1] sm:$0xff]
      %v1224 = vld [vmem:[#allocation2 + $0x9] sm:$0xff]
      %v1225 = vld [vmem:[#allocation2 + $0x19] sm:$0xff]
      %v1226 = vld [vmem:[#allocation2 + $0x21] sm:$0xff]
      %v1227 = vld [vmem:[#allocation2 + $0x31] sm:$0xff]
      %v1228 = vld [vmem:[#allocation2 + $0x39] sm:$0xff]
      %v1229 = vld [vmem:[#allocation2 + $0x49] sm:$0xff]
      %v1230 = vld [vmem:[#allocation2 + $0x51] sm:$0xff]
      %v1231 = vld [vmem:[#allocation2 + $0x61] sm:$0xff]
      %v1232 = vld [vmem:[#allocation2 + $0x69] sm:$0xff]
      %v1233 = vld [vmem:[#allocation2 + $0x79] sm:$0xff]
      %v1234 = vld [vmem:[#allocation2 + $0x81] sm:$0xff]
      %v1235 = vld [vmem:[#allocation2 + $0x91] sm:$0xff]
      %v1236 = vld [vmem:[#allocation2 + $0x99] sm:$0xff]
      %v1237 = vld [vmem:[#allocation2 + $0xa9] sm:$0xff]
      %v1238 = vld [vmem:[#allocation2 + $0xb1] sm:$0xff]
      %v1239 = vld [vmem:[#allocation2 + $0xc1] sm:$0xff]
      %v1240 = vld [vmem:[#allocation2 + $0xc9] sm:$0xff]
      %v1241 = vld [vmem:[#allocation2 + $0xd9] sm:$0xff]
      %v1242 = vld [vmem:[#allocation2 + $0xe1] sm:$0xff]
      %v1243 = vld [vmem:[#allocation2 + $0xf1] sm:$0xff]
      %v1244 = vld [vmem:[#allocation2 + $0xf9] sm:$0xff]
      %v1245 = vld [vmem:[#allocation2 + $0x109] sm:$0xff]
      %v1246 = vld [vmem:[#allocation2 + $0x111] sm:$0xff]
      %v1247 = vld [vmem:[#allocation2 + $0x121] sm:$0xff]
      %v1248 = vld [vmem:[#allocation2 + $0x129] sm:$0xff]
      %v1249 = vld [vmem:[#allocation2 + $0x139] sm:$0xff]
      %v1250 = vld [vmem:[#allocation2 + $0x141] sm:$0xff]
      %v1251 = vld [vmem:[#allocation2 + $0x151] sm:$0xff]
      %v1252 = vld [vmem:[#allocation2 + $0x159] sm:$0xff]
      %v1253 = vld [vmem:[#allocation2 + $0x169] sm:$0xff]
      %v1254 = vld [vmem:[#allocation2 + $0x171] sm:$0xff]
      %v1255 = vld [vmem:[#allocation3] sm:$0xff]
      %v1256 = vld [vmem:[#allocation3 + $0x8] sm:$0xff]
      %v1257 = vld [vmem:[#allocation3 + $0x10] sm:$0xff]
      %v1258 = vld [vmem:[#allocation3 + $0x18] sm:$0xff]
      %v1259 = vld [vmem:[#allocation3 + $0x20] sm:$0xff]
      %v1260 = vld [vmem:[#allocation3 + $0x28] sm:$0xff]
      %v1261 = vld [vmem:[#allocation3 + $0x30] sm:$0xff]
      %v1262 = vld [vmem:[#allocation3 + $0x38] sm:$0xff]
      %v1263 = vld [vmem:[#allocation3 + $0x40] sm:$0xff]
      %v1264 = vld [vmem:[#allocation3 + $0x48] sm:$0xff]
      %v1265 = vld [vmem:[#allocation3 + $0x50] sm:$0xff]
      %v1266 = vld [vmem:[#allocation3 + $0x58] sm:$0xff]
      %v1267 = vld [vmem:[#allocation3 + $0x60] sm:$0xff]
      %v1268 = vld [vmem:[#allocation3 + $0x68] sm:$0xff]
      %v1269 = vld [vmem:[#allocation3 + $0x70] sm:$0xff]
      %v1270 = vld [vmem:[#allocation3 + $0x78] sm:$0xff]
      %v1271 = vld [vmem:[#allocation3 + $0x80] sm:$0xff]
      %v1272 = vld [vmem:[#allocation3 + $0x88] sm:$0xff]
      %v1273 = vld [vmem:[#allocation3 + $0x90] sm:$0xff]
      %v1274 = vld [vmem:[#allocation3 + $0x98] sm:$0xff]
      %v1275 = vld [vmem:[#allocation3 + $0xa0] sm:$0xff]
      %v1276 = vld [vmem:[#allocation3 + $0xa8] sm:$0xff]
      %v1277 = vld [vmem:[#allocation3 + $0xb0] sm:$0xff]
      %v1278 = vld [vmem:[#allocation3 + $0xb8] sm:$0xff]
      %v1279 = vld [vmem:[#allocation3 + $0xc0] sm:$0xff]
      %v1280 = vld [vmem:[#allocation3 + $0xc8] sm:$0xff]
      %v1281 = vld [vmem:[#allocation3 + $0xd0] sm:$0xff]
      %v1282 = vld [vmem:[#allocation3 + $0xd8] sm:$0xff]
      %v1283 = vld [vmem:[#allocation3 + $0xe0] sm:$0xff]
      %v1284 = vld [vmem:[#allocation3 + $0xe8] sm:$0xff]
      %v1285 = vld [vmem:[#allocation3 + $0xf0] sm:$0xff]
      %v1286 = vld [vmem:[#allocation3 + $0xf8] sm:$0xff]
      %v1287 = vpack.c.bf16 %v1224, %v1223
      %v1288 = vpack.c.bf16 %v1226, %v1225
      %v1289 = vpack.c.bf16 %v1228, %v1227
      %v1290 = vpack.c.bf16 %v1230, %v1229
      %v1291 = vpack.c.bf16 %v1232, %v1231
      %v1292 = vpack.c.bf16 %v1234, %v1233
      %v1293 = vpack.c.bf16 %v1236, %v1235
      %v1294 = vpack.c.bf16 %v1238, %v1237
      %v1295 = vpack.c.bf16 %v1240, %v1239
      %v1296 = vpack.c.bf16 %v1242, %v1241
      %v1297 = vpack.c.bf16 %v1244, %v1243
      %v1298 = vpack.c.bf16 %v1246, %v1245
      %v1299 = vpack.c.bf16 %v1248, %v1247
      %v1300 = vpack.c.bf16 %v1250, %v1249
      %v1301 = vpack.c.bf16 %v1252, %v1251
      %v1302 = vpack.c.bf16 %v1254, %v1253
      %s1303 = scalar_lea.vmem %s3, 1
      %v1304 = vld [vmem:[%s1303] sm:$0x1]
      %v1306 = vsel %vm744, %v1287, 0
      %v1309 = vsel %vm744, %v1288, 0
      %v1312 = vsel %vm744, %v1289, 0
      %v1315 = vsel %vm744, %v1290, 0
      %v1318 = vsel %vm744, %v1291, 0
      %v1321 = vsel %vm744, %v1292, 0
      %v1324 = vsel %vm744, %v1293, 0
      %v1327 = vsel %vm744, %v1294, 0
      %v1330 = vsel %vm744, %v1295, 0
      %v1333 = vsel %vm744, %v1296, 0
      %v1336 = vsel %vm744, %v1297, 0
      %v1339 = vsel %vm744, %v1298, 0
      %v1342 = vsel %vm744, %v1299, 0
      %v1345 = vsel %vm744, %v1300, 0
      %v1348 = vsel %vm744, %v1301, 0
      %v1351 = vsel %vm744, %v1302, 0
      %v1354 = vsel %vm994, %v1304, 0
      %1356 = vmatprep.subr.bf16.mxu0 0
      %1357 = vmatpush1.bf16.msra.mxu0 %v1354
      %1358 = vmatprep.subr.bf16.mxu0 0
      %1359 = vmatpush1.bf16.msra.mxu0 0
      %1360 = vmatprep.subr.bf16.mxu0 0
      %1361 = vmatpush1.bf16.msra.mxu0 0
      %1362 = vmatprep.subr.bf16.mxu0 0
      %1363 = vmatpush1.bf16.msra.mxu0 0
      %1364 = vmatprep.subr.bf16.mxu0 0
      %1365 = vmatpush1.bf16.msra.mxu0 0
      %1366 = vmatprep.subr.bf16.mxu0 0
      %1367 = vmatpush1.bf16.msra.mxu0 0
      %1368 = vmatprep.subr.bf16.mxu0 0
      %1369 = vmatpush1.bf16.msra.mxu0 0
      %1370 = vmatprep.subr.bf16.mxu0 0
      %1371 = vmatpush1.bf16.msra.mxu0 0
      %1372 = vmatprep.subr.bf16.mxu0 0
      %1373 = vmatpush1.bf16.msra.mxu0 0
      %1374 = vmatprep.subr.bf16.mxu0 0
      %1375 = vmatpush1.bf16.msra.mxu0 0
      %1376 = vmatprep.subr.bf16.mxu0 0
      %1377 = vmatpush1.bf16.msra.mxu0 0
      %1378 = vmatprep.subr.bf16.mxu0 0
      %1379 = vmatpush1.bf16.msra.mxu0 0
      %1380 = vmatprep.subr.bf16.mxu0 0
      %1381 = vmatpush1.bf16.msra.mxu0 0
      %1382 = vmatprep.subr.bf16.mxu0 0
      %1383 = vmatpush1.bf16.msra.mxu0 0
      %1384 = vmatprep.subr.bf16.mxu0 0
      %1385 = vmatpush1.bf16.msra.mxu0 0
      %1386 = vmatprep.subr.bf16.mxu0 0
      %1387 = vmatpush1.bf16.msra.mxu0 0
      %1388 = vmatprep.mubr.bf16.mxu0 0
      %1389 = vmatmul.mubr.bf16.gmra.mrb[0].mxu0 %v1306
      %v1390 = vpop.f32.mrb[0].mxu0
      %v1391 = vadd.f32 0.0, %v1390
      %v1392 = vpop.f32.mrb[0].mxu0
      %v1393 = vpop.f32.mrb[0].mxu0
      %v1394 = vadd.f32 0.0, %v1393
      %v1395 = vpop.f32.mrb[0].mxu0
      %1396 = vmatprep.mubr.bf16.mxu0 0
      %1397 = vmatmul.mubr.bf16.gmra.mrb[0].mxu0 %v1309
      %v1398 = vpop.f32.mrb[0].mxu0
      %v1399 = vadd.f32 0.0, %v1398
      %v1400 = vpop.f32.mrb[0].mxu0
      %v1401 = vpop.f32.mrb[0].mxu0
      %v1402 = vadd.f32 0.0, %v1401
      %v1403 = vpop.f32.mrb[0].mxu0
      %1404 = vmatprep.mubr.bf16.mxu0 0
      %1405 = vmatmul.mubr.bf16.gmra.mrb[0].mxu0 %v1312
      %v1406 = vpop.f32.mrb[0].mxu0
      %v1407 = vadd.f32 0.0, %v1406
      %v1408 = vpop.f32.mrb[0].mxu0
      %v1409 = vpop.f32.mrb[0].mxu0
      %v1410 = vadd.f32 0.0, %v1409
      %v1411 = vpop.f32.mrb[0].mxu0
      %1412 = vmatprep.mubr.bf16.mxu0 0
      %1413 = vmatmul.mubr.bf16.gmra.mrb[0].mxu0 %v1315
      %v1414 = vpop.f32.mrb[0].mxu0
      %v1415 = vadd.f32 0.0, %v1414
      %v1416 = vpop.f32.mrb[0].mxu0
      %v1417 = vpop.f32.mrb[0].mxu0
      %v1418 = vadd.f32 0.0, %v1417
      %v1419 = vpop.f32.mrb[0].mxu0
      %1420 = vmatprep.mubr.bf16.mxu0 0
      %1421 = vmatmul.mubr.bf16.gmra.mrb[0].mxu0 %v1318
      %v1422 = vpop.f32.mrb[0].mxu0
      %v1423 = vadd.f32 0.0, %v1422
      %v1424 = vpop.f32.mrb[0].mxu0
      %v1425 = vpop.f32.mrb[0].mxu0
      %v1426 = vadd.f32 0.0, %v1425
      %v1427 = vpop.f32.mrb[0].mxu0
      %1428 = vmatprep.mubr.bf16.mxu0 0
      %1429 = vmatmul.mubr.bf16.gmra.mrb[0].mxu0 %v1321
      %v1430 = vpop.f32.mrb[0].mxu0
      %v1431 = vadd.f32 0.0, %v1430
      %v1432 = vpop.f32.mrb[0].mxu0
      %v1433 = vpop.f32.mrb[0].mxu0
      %v1434 = vadd.f32 0.0, %v1433
      %v1435 = vpop.f32.mrb[0].mxu0
      %1436 = vmatprep.mubr.bf16.mxu0 0
      %1437 = vmatmul.mubr.bf16.gmra.mrb[0].mxu0 %v1324
      %v1438 = vpop.f32.mrb[0].mxu0
      %v1439 = vadd.f32 0.0, %v1438
      %v1440 = vpop.f32.mrb[0].mxu0
      %v1441 = vpop.f32.mrb[0].mxu0
      %v1442 = vadd.f32 0.0, %v1441
      %v1443 = vpop.f32.mrb[0].mxu0
      %1444 = vmatprep.mubr.bf16.mxu0 0
      %1445 = vmatmul.mubr.bf16.gmra.mrb[0].mxu0 %v1327
      %v1446 = vpop.f32.mrb[0].mxu0
      %v1447 = vadd.f32 0.0, %v1446
      %v1448 = vpop.f32.mrb[0].mxu0
      %v1449 = vpop.f32.mrb[0].mxu0
      %v1450 = vadd.f32 0.0, %v1449
      %v1451 = vpop.f32.mrb[0].mxu0
      %1452 = vmatprep.mubr.bf16.mxu0 0
      %1453 = vmatmul.mubr.bf16.gmra.mrb[0].mxu0 %v1330
      %v1454 = vpop.f32.mrb[0].mxu0
      %v1455 = vadd.f32 0.0, %v1454
      %v1456 = vpop.f32.mrb[0].mxu0
      %v1457 = vpop.f32.mrb[0].mxu0
      %v1458 = vadd.f32 0.0, %v1457
      %v1459 = vpop.f32.mrb[0].mxu0
      %1460 = vmatprep.mubr.bf16.mxu0 0
      %1461 = vmatmul.mubr.bf16.gmra.mrb[0].mxu0 %v1333
      %v1462 = vpop.f32.mrb[0].mxu0
      %v1463 = vadd.f32 0.0, %v1462
      %v1464 = vpop.f32.mrb[0].mxu0
      %v1465 = vpop.f32.mrb[0].mxu0
      %v1466 = vadd.f32 0.0, %v1465
      %v1467 = vpop.f32.mrb[0].mxu0
      %1468 = vmatprep.mubr.bf16.mxu0 0
      %1469 = vmatmul.mubr.bf16.gmra.mrb[0].mxu0 %v1336
      %v1470 = vpop.f32.mrb[0].mxu0
      %v1471 = vadd.f32 0.0, %v1470
      %v1472 = vpop.f32.mrb[0].mxu0
      %v1473 = vpop.f32.mrb[0].mxu0
      %v1474 = vadd.f32 0.0, %v1473
      %v1475 = vpop.f32.mrb[0].mxu0
      %1476 = vmatprep.mubr.bf16.mxu0 0
      %1477 = vmatmul.mubr.bf16.gmra.mrb[0].mxu0 %v1339
      %v1478 = vpop.f32.mrb[0].mxu0
      %v1479 = vadd.f32 0.0, %v1478
      %v1480 = vpop.f32.mrb[0].mxu0
      %v1481 = vpop.f32.mrb[0].mxu0
      %v1482 = vadd.f32 0.0, %v1481
      %v1483 = vpop.f32.mrb[0].mxu0
      %1484 = vmatprep.mubr.bf16.mxu0 0
      %1485 = vmatmul.mubr.bf16.gmra.mrb[0].mxu0 %v1342
      %v1486 = vpop.f32.mrb[0].mxu0
      %v1487 = vadd.f32 0.0, %v1486
      %v1488 = vpop.f32.mrb[0].mxu0
      %v1489 = vpop.f32.mrb[0].mxu0
      %v1490 = vadd.f32 0.0, %v1489
      %v1491 = vpop.f32.mrb[0].mxu0
      %1492 = vmatprep.mubr.bf16.mxu0 0
      %1493 = vmatmul.mubr.bf16.gmra.mrb[0].mxu0 %v1345
      %v1494 = vpop.f32.mrb[0].mxu0
      %v1495 = vadd.f32 0.0, %v1494
      %v1496 = vpop.f32.mrb[0].mxu0
      %v1497 = vpop.f32.mrb[0].mxu0
      %v1498 = vadd.f32 0.0, %v1497
      %v1499 = vpop.f32.mrb[0].mxu0
      %1500 = vmatprep.mubr.bf16.mxu0 0
      %1501 = vmatmul.mubr.bf16.gmra.mrb[0].mxu0 %v1348
      %v1502 = vpop.f32.mrb[0].mxu0
      %v1503 = vadd.f32 0.0, %v1502
      %v1504 = vpop.f32.mrb[0].mxu0
      %v1505 = vpop.f32.mrb[0].mxu0
      %v1506 = vadd.f32 0.0, %v1505
      %v1507 = vpop.f32.mrb[0].mxu0
      %1508 = vmatprep.mubr.bf16.mxu0 0
      %1509 = vmatmul.mubr.bf16.gmra.mrb[0].mxu0 %v1351
      %v1510 = vpop.f32.mrb[0].mxu0
      %v1511 = vadd.f32 0.0, %v1510
      %v1512 = vpop.f32.mrb[0].mxu0
      %v1513 = vpop.f32.mrb[0].mxu0
      %v1514 = vadd.f32 0.0, %v1513
      %v1515 = vpop.f32.mrb[0].mxu0
      %1516 = vdwg.mxu0
      %v1517 = vadd.f32 %v1255, %v1391
      %v1518 = vadd.f32 %v1256, %v1394
      %v1519 = vadd.f32 %v1257, %v1399
      %v1520 = vadd.f32 %v1258, %v1402
      %v1521 = vadd.f32 %v1259, %v1407
      %v1522 = vadd.f32 %v1260, %v1410
      %v1523 = vadd.f32 %v1261, %v1415
      %v1524 = vadd.f32 %v1262, %v1418
      %v1525 = vadd.f32 %v1263, %v1423
      %v1526 = vadd.f32 %v1264, %v1426
      %v1527 = vadd.f32 %v1265, %v1431
      %v1528 = vadd.f32 %v1266, %v1434
      %v1529 = vadd.f32 %v1267, %v1439
      %v1530 = vadd.f32 %v1268, %v1442
      %v1531 = vadd.f32 %v1269, %v1447
      %v1532 = vadd.f32 %v1270, %v1450
      %v1533 = vadd.f32 %v1271, %v1455
      %v1534 = vadd.f32 %v1272, %v1458
      %v1535 = vadd.f32 %v1273, %v1463
      %v1536 = vadd.f32 %v1274, %v1466
      %v1537 = vadd.f32 %v1275, %v1471
      %v1538 = vadd.f32 %v1276, %v1474
      %v1539 = vadd.f32 %v1277, %v1479
      %v1540 = vadd.f32 %v1278, %v1482
      %v1541 = vadd.f32 %v1279, %v1487
      %v1542 = vadd.f32 %v1280, %v1490
      %v1543 = vadd.f32 %v1281, %v1495
      %v1544 = vadd.f32 %v1282, %v1498
      %v1545 = vadd.f32 %v1283, %v1503
      %v1546 = vadd.f32 %v1284, %v1506
      %v1547 = vadd.f32 %v1285, %v1511
      %v1548 = vadd.f32 %v1286, %v1514
      %1549 = vst.msk [vmem:[#allocation3] sm:$0xff] %vm744, %v1517
      %1550 = vst.msk [vmem:[#allocation3 + $0x8] sm:$0xff] %vm744, %v1518
      %1551 = vst.msk [vmem:[#allocation3 + $0x10] sm:$0xff] %vm744, %v1519
      %1552 = vst.msk [vmem:[#allocation3 + $0x18] sm:$0xff] %vm744, %v1520
      %1553 = vst.msk [vmem:[#allocation3 + $0x20] sm:$0xff] %vm744, %v1521
      %1554 = vst.msk [vmem:[#allocation3 + $0x28] sm:$0xff] %vm744, %v1522
      %1555 = vst.msk [vmem:[#allocation3 + $0x30] sm:$0xff] %vm744, %v1523
      %1556 = vst.msk [vmem:[#allocation3 + $0x38] sm:$0xff] %vm744, %v1524
      %1557 = vst.msk [vmem:[#allocation3 + $0x40] sm:$0xff] %vm744, %v1525
      %1558 = vst.msk [vmem:[#allocation3 + $0x48] sm:$0xff] %vm744, %v1526
      %1559 = vst.msk [vmem:[#allocation3 + $0x50] sm:$0xff] %vm744, %v1527
      %1560 = vst.msk [vmem:[#allocation3 + $0x58] sm:$0xff] %vm744, %v1528
      %1561 = vst.msk [vmem:[#allocation3 + $0x60] sm:$0xff] %vm744, %v1529
      %1562 = vst.msk [vmem:[#allocation3 + $0x68] sm:$0xff] %vm744, %v1530
      %1563 = vst.msk [vmem:[#allocation3 + $0x70] sm:$0xff] %vm744, %v1531
      %1564 = vst.msk [vmem:[#allocation3 + $0x78] sm:$0xff] %vm744, %v1532
      %1565 = vst.msk [vmem:[#allocation3 + $0x80] sm:$0xff] %vm744, %v1533
      %1566 = vst.msk [vmem:[#allocation3 + $0x88] sm:$0xff] %vm744, %v1534
      %1567 = vst.msk [vmem:[#allocation3 + $0x90] sm:$0xff] %vm744, %v1535
      %1568 = vst.msk [vmem:[#allocation3 + $0x98] sm:$0xff] %vm744, %v1536
      %1569 = vst.msk [vmem:[#allocation3 + $0xa0] sm:$0xff] %vm744, %v1537
      %1570 = vst.msk [vmem:[#allocation3 + $0xa8] sm:$0xff] %vm744, %v1538
      %1571 = vst.msk [vmem:[#allocation3 + $0xb0] sm:$0xff] %vm744, %v1539
      %1572 = vst.msk [vmem:[#allocation3 + $0xb8] sm:$0xff] %vm744, %v1540
      %1573 = vst.msk [vmem:[#allocation3 + $0xc0] sm:$0xff] %vm744, %v1541
      %1574 = vst.msk [vmem:[#allocation3 + $0xc8] sm:$0xff] %vm744, %v1542
      %1575 = vst.msk [vmem:[#allocation3 + $0xd0] sm:$0xff] %vm744, %v1543
      %1576 = vst.msk [vmem:[#allocation3 + $0xd8] sm:$0xff] %vm744, %v1544
      %1577 = vst.msk [vmem:[#allocation3 + $0xe0] sm:$0xff] %vm744, %v1545
      %1578 = vst.msk [vmem:[#allocation3 + $0xe8] sm:$0xff] %vm744, %v1546
      %1579 = vst.msk [vmem:[#allocation3 + $0xf0] sm:$0xff] %vm744, %v1547
      %1580 = vst.msk [vmem:[#allocation3 + $0xf8] sm:$0xff] %vm744, %v1548
      %v1581 = vld [vmem:[#allocation2 + $0x2] sm:$0xff]
      %v1582 = vld [vmem:[#allocation2 + $0xa] sm:$0xff]
      %v1583 = vld [vmem:[#allocation2 + $0x1a] sm:$0xff]
      %v1584 = vld [vmem:[#allocation2 + $0x22] sm:$0xff]
      %v1585 = vld [vmem:[#allocation2 + $0x32] sm:$0xff]
      %v1586 = vld [vmem:[#allocation2 + $0x3a] sm:$0xff]
      %v1587 = vld [vmem:[#allocation2 + $0x4a] sm:$0xff]
      %v1588 = vld [vmem:[#allocation2 + $0x52] sm:$0xff]
      %v1589 = vld [vmem:[#allocation2 + $0x62] sm:$0xff]
      %v1590 = vld [vmem:[#allocation2 + $0x6a] sm:$0xff]
      %v1591 = vld [vmem:[#allocation2 + $0x7a] sm:$0xff]
      %v1592 = vld [vmem:[#allocation2 + $0x82] sm:$0xff]
      %v1593 = vld [vmem:[#allocation2 + $0x92] sm:$0xff]
      %v1594 = vld [vmem:[#allocation2 + $0x9a] sm:$0xff]
      %v1595 = vld [vmem:[#allocation2 + $0xaa] sm:$0xff]
      %v1596 = vld [vmem:[#allocation2 + $0xb2] sm:$0xff]
      %v1597 = vld [vmem:[#allocation2 + $0xc2] sm:$0xff]
      %v1598 = vld [vmem:[#allocation2 + $0xca] sm:$0xff]
      %v1599 = vld [vmem:[#allocation2 + $0xda] sm:$0xff]
      %v1600 = vld [vmem:[#allocation2 + $0xe2] sm:$0xff]
      %v1601 = vld [vmem:[#allocation2 + $0xf2] sm:$0xff]
      %v1602 = vld [vmem:[#allocation2 + $0xfa] sm:$0xff]
      %v1603 = vld [vmem:[#allocation2 + $0x10a] sm:$0xff]
      %v1604 = vld [vmem:[#allocation2 + $0x112] sm:$0xff]
      %v1605 = vld [vmem:[#allocation2 + $0x122] sm:$0xff]
      %v1606 = vld [vmem:[#allocation2 + $0x12a] sm:$0xff]
      %v1607 = vld [vmem:[#allocation2 + $0x13a] sm:$0xff]
      %v1608 = vld [vmem:[#allocation2 + $0x142] sm:$0xff]
      %v1609 = vld [vmem:[#allocation2 + $0x152] sm:$0xff]
      %v1610 = vld [vmem:[#allocation2 + $0x15a] sm:$0xff]
      %v1611 = vld [vmem:[#allocation2 + $0x16a] sm:$0xff]
      %v1612 = vld [vmem:[#allocation2 + $0x172] sm:$0xff]
      %v1613 = vld [vmem:[#allocation3] sm:$0xff]
      %v1614 = vld [vmem:[#allocation3 + $0x8] sm:$0xff]
      %v1615 = vld [vmem:[#allocation3 + $0x10] sm:$0xff]
      %v1616 = vld [vmem:[#allocation3 + $0x18] sm:$0xff]
      %v1617 = vld [vmem:[#allocation3 + $0x20] sm:$0xff]
      %v1618 = vld [vmem:[#allocation3 + $0x28] sm:$0xff]
      %v1619 = vld [vmem:[#allocation3 + $0x30] sm:$0xff]
      %v1620 = vld [vmem:[#allocation3 + $0x38] sm:$0xff]
      %v1621 = vld [vmem:[#allocation3 + $0x40] sm:$0xff]
      %v1622 = vld [vmem:[#allocation3 + $0x48] sm:$0xff]
      %v1623 = vld [vmem:[#allocation3 + $0x50] sm:$0xff]
      %v1624 = vld [vmem:[#allocation3 + $0x58] sm:$0xff]
      %v1625 = vld [vmem:[#allocation3 + $0x60] sm:$0xff]
      %v1626 = vld [vmem:[#allocation3 + $0x68] sm:$0xff]
      %v1627 = vld [vmem:[#allocation3 + $0x70] sm:$0xff]
      %v1628 = vld [vmem:[#allocation3 + $0x78] sm:$0xff]
      %v1629 = vld [vmem:[#allocation3 + $0x80] sm:$0xff]
      %v1630 = vld [vmem:[#allocation3 + $0x88] sm:$0xff]
      %v1631 = vld [vmem:[#allocation3 + $0x90] sm:$0xff]
      %v1632 = vld [vmem:[#allocation3 + $0x98] sm:$0xff]
      %v1633 = vld [vmem:[#allocation3 + $0xa0] sm:$0xff]
      %v1634 = vld [vmem:[#allocation3 + $0xa8] sm:$0xff]
      %v1635 = vld [vmem:[#allocation3 + $0xb0] sm:$0xff]
      %v1636 = vld [vmem:[#allocation3 + $0xb8] sm:$0xff]
      %v1637 = vld [vmem:[#allocation3 + $0xc0] sm:$0xff]
      %v1638 = vld [vmem:[#allocation3 + $0xc8] sm:$0xff]
      %v1639 = vld [vmem:[#allocation3 + $0xd0] sm:$0xff]
      %v1640 = vld [vmem:[#allocation3 + $0xd8] sm:$0xff]
      %v1641 = vld [vmem:[#allocation3 + $0xe0] sm:$0xff]
      %v1642 = vld [vmem:[#allocation3 + $0xe8] sm:$0xff]
      %v1643 = vld [vmem:[#allocation3 + $0xf0] sm:$0xff]
      %v1644 = vld [vmem:[#allocation3 + $0xf8] sm:$0xff]
      %v1645 = vpack.c.bf16 %v1582, %v1581
      %v1646 = vpack.c.bf16 %v1584, %v1583
      %v1647 = vpack.c.bf16 %v1586, %v1585
      %v1648 = vpack.c.bf16 %v1588, %v1587
      %v1649 = vpack.c.bf16 %v1590, %v1589
      %v1650 = vpack.c.bf16 %v1592, %v1591
      %v1651 = vpack.c.bf16 %v1594, %v1593
      %v1652 = vpack.c.bf16 %v1596, %v1595
      %v1653 = vpack.c.bf16 %v1598, %v1597
      %v1654 = vpack.c.bf16 %v1600, %v1599
      %v1655 = vpack.c.bf16 %v1602, %v1601
      %v1656 = vpack.c.bf16 %v1604, %v1603
      %v1657 = vpack.c.bf16 %v1606, %v1605
      %v1658 = vpack.c.bf16 %v1608, %v1607
      %v1659 = vpack.c.bf16 %v1610, %v1609
      %v1660 = vpack.c.bf16 %v1612, %v1611
      %s1661 = scalar_lea.vmem %s3, 2
      %v1662 = vld [vmem:[%s1661] sm:$0x1]
      %v1664 = vsel %vm744, %v1645, 0
      %v1667 = vsel %vm744, %v1646, 0
      %v1670 = vsel %vm744, %v1647, 0
      %v1673 = vsel %vm744, %v1648, 0
      %v1676 = vsel %vm744, %v1649, 0
      %v1679 = vsel %vm744, %v1650, 0
      %v1682 = vsel %vm744, %v1651, 0
      %v1685 = vsel %vm744, %v1652, 0
      %v1688 = vsel %vm744, %v1653, 0
      %v1691 = vsel %vm744, %v1654, 0
      %v1694 = vsel %vm744, %v1655, 0
      %v1697 = vsel %vm744, %v1656, 0
      %v1700 = vsel %vm744, %v1657, 0
      %v1703 = vsel %vm744, %v1658, 0
      %v1706 = vsel %vm744, %v1659, 0
      %v1709 = vsel %vm744, %v1660, 0
      %v1712 = vsel %vm994, %v1662, 0
      %1714 = vmatprep.subr.bf16.mxu0 0
      %1715 = vmatpush1.bf16.msra.mxu0 %v1712
      %1716 = vmatprep.subr.bf16.mxu0 0
      %1717 = vmatpush1.bf16.msra.mxu0 0
      %1718 = vmatprep.subr.bf16.mxu0 0
      %1719 = vmatpush1.bf16.msra.mxu0 0
      %1720 = vmatprep.subr.bf16.mxu0 0
      %1721 = vmatpush1.bf16.msra.mxu0 0
      %1722 = vmatprep.subr.bf16.mxu0 0
      %1723 = vmatpush1.bf16.msra.mxu0 0
      %1724 = vmatprep.subr.bf16.mxu0 0
      %1725 = vmatpush1.bf16.msra.mxu0 0
      %1726 = vmatprep.subr.bf16.mxu0 0
      %1727 = vmatpush1.bf16.msra.mxu0 0
      %1728 = vmatprep.subr.bf16.mxu0 0
      %1729 = vmatpush1.bf16.msra.mxu0 0
      %1730 = vmatprep.subr.bf16.mxu0 0
      %1731 = vmatpush1.bf16.msra.mxu0 0
      %1732 = vmatprep.subr.bf16.mxu0 0
      %1733 = vmatpush1.bf16.msra.mxu0 0
      %1734 = vmatprep.subr.bf16.mxu0 0
      %1735 = vmatpush1.bf16.msra.mxu0 0
      %1736 = vmatprep.subr.bf16.mxu0 0
      %1737 = vmatpush1.bf16.msra.mxu0 0
      %1738 = vmatprep.subr.bf16.mxu0 0
      %1739 = vmatpush1.bf16.msra.mxu0 0
      %1740 = vmatprep.subr.bf16.mxu0 0
      %1741 = vmatpush1.bf16.msra.mxu0 0
      %1742 = vmatprep.subr.bf16.mxu0 0
      %1743 = vmatpush1.bf16.msra.mxu0 0
      %1744 = vmatprep.subr.bf16.mxu0 0
      %1745 = vmatpush1.bf16.msra.mxu0 0
      %1746 = vmatprep.mubr.bf16.mxu0 0
      %1747 = vmatmul.mubr.bf16.gmra.mrb[0].mxu0 %v1664
      %v1748 = vpop.f32.mrb[0].mxu0
      %v1749 = vadd.f32 0.0, %v1748
      %v1750 = vpop.f32.mrb[0].mxu0
      %v1751 = vpop.f32.mrb[0].mxu0
      %v1752 = vadd.f32 0.0, %v1751
      %v1753 = vpop.f32.mrb[0].mxu0
      %1754 = vmatprep.mubr.bf16.mxu0 0
      %1755 = vmatmul.mubr.bf16.gmra.mrb[0].mxu0 %v1667
      %v1756 = vpop.f32.mrb[0].mxu0
      %v1757 = vadd.f32 0.0, %v1756
      %v1758 = vpop.f32.mrb[0].mxu0
      %v1759 = vpop.f32.mrb[0].mxu0
      %v1760 = vadd.f32 0.0, %v1759
      %v1761 = vpop.f32.mrb[0].mxu0
      %1762 = vmatprep.mubr.bf16.mxu0 0
      %1763 = vmatmul.mubr.bf16.gmra.mrb[0].mxu0 %v1670
      %v1764 = vpop.f32.mrb[0].mxu0
      %v1765 = vadd.f32 0.0, %v1764
      %v1766 = vpop.f32.mrb[0].mxu0
      %v1767 = vpop.f32.mrb[0].mxu0
      %v1768 = vadd.f32 0.0, %v1767
      %v1769 = vpop.f32.mrb[0].mxu0
      %1770 = vmatprep.mubr.bf16.mxu0 0
      %1771 = vmatmul.mubr.bf16.gmra.mrb[0].mxu0 %v1673
      %v1772 = vpop.f32.mrb[0].mxu0
      %v1773 = vadd.f32 0.0, %v1772
      %v1774 = vpop.f32.mrb[0].mxu0
      %v1775 = vpop.f32.mrb[0].mxu0
      %v1776 = vadd.f32 0.0, %v1775
      %v1777 = vpop.f32.mrb[0].mxu0
      %1778 = vmatprep.mubr.bf16.mxu0 0
      %1779 = vmatmul.mubr.bf16.gmra.mrb[0].mxu0 %v1676
      %v1780 = vpop.f32.mrb[0].mxu0
      %v1781 = vadd.f32 0.0, %v1780
      %v1782 = vpop.f32.mrb[0].mxu0
      %v1783 = vpop.f32.mrb[0].mxu0
      %v1784 = vadd.f32 0.0, %v1783
      %v1785 = vpop.f32.mrb[0].mxu0
      %1786 = vmatprep.mubr.bf16.mxu0 0
      %1787 = vmatmul.mubr.bf16.gmra.mrb[0].mxu0 %v1679
      %v1788 = vpop.f32.mrb[0].mxu0
      %v1789 = vadd.f32 0.0, %v1788
      %v1790 = vpop.f32.mrb[0].mxu0
      %v1791 = vpop.f32.mrb[0].mxu0
      %v1792 = vadd.f32 0.0, %v1791
      %v1793 = vpop.f32.mrb[0].mxu0
      %1794 = vmatprep.mubr.bf16.mxu0 0
      %1795 = vmatmul.mubr.bf16.gmra.mrb[0].mxu0 %v1682
      %v1796 = vpop.f32.mrb[0].mxu0
      %v1797 = vadd.f32 0.0, %v1796
      %v1798 = vpop.f32.mrb[0].mxu0
      %v1799 = vpop.f32.mrb[0].mxu0
      %v1800 = vadd.f32 0.0, %v1799
      %v1801 = vpop.f32.mrb[0].mxu0
      %1802 = vmatprep.mubr.bf16.mxu0 0
      %1803 = vmatmul.mubr.bf16.gmra.mrb[0].mxu0 %v1685
      %v1804 = vpop.f32.mrb[0].mxu0
      %v1805 = vadd.f32 0.0, %v1804
      %v1806 = vpop.f32.mrb[0].mxu0
      %v1807 = vpop.f32.mrb[0].mxu0
      %v1808 = vadd.f32 0.0, %v1807
      %v1809 = vpop.f32.mrb[0].mxu0
      %1810 = vmatprep.mubr.bf16.mxu0 0
      %1811 = vmatmul.mubr.bf16.gmra.mrb[0].mxu0 %v1688
      %v1812 = vpop.f32.mrb[0].mxu0
      %v1813 = vadd.f32 0.0, %v1812
      %v1814 = vpop.f32.mrb[0].mxu0
      %v1815 = vpop.f32.mrb[0].mxu0
      %v1816 = vadd.f32 0.0, %v1815
      %v1817 = vpop.f32.mrb[0].mxu0
      %1818 = vmatprep.mubr.bf16.mxu0 0
      %1819 = vmatmul.mubr.bf16.gmra.mrb[0].mxu0 %v1691
      %v1820 = vpop.f32.mrb[0].mxu0
      %v1821 = vadd.f32 0.0, %v1820
      %v1822 = vpop.f32.mrb[0].mxu0
      %v1823 = vpop.f32.mrb[0].mxu0
      %v1824 = vadd.f32 0.0, %v1823
      %v1825 = vpop.f32.mrb[0].mxu0
      %1826 = vmatprep.mubr.bf16.mxu0 0
      %1827 = vmatmul.mubr.bf16.gmra.mrb[0].mxu0 %v1694
      %v1828 = vpop.f32.mrb[0].mxu0
      %v1829 = vadd.f32 0.0, %v1828
      %v1830 = vpop.f32.mrb[0].mxu0
      %v1831 = vpop.f32.mrb[0].mxu0
      %v1832 = vadd.f32 0.0, %v1831
      %v1833 = vpop.f32.mrb[0].mxu0
      %1834 = vmatprep.mubr.bf16.mxu0 0
      %1835 = vmatmul.mubr.bf16.gmra.mrb[0].mxu0 %v1697
      %v1836 = vpop.f32.mrb[0].mxu0
      %v1837 = vadd.f32 0.0, %v1836
      %v1838 = vpop.f32.mrb[0].mxu0
      %v1839 = vpop.f32.mrb[0].mxu0
      %v1840 = vadd.f32 0.0, %v1839
      %v1841 = vpop.f32.mrb[0].mxu0
      %1842 = vmatprep.mubr.bf16.mxu0 0
      %1843 = vmatmul.mubr.bf16.gmra.mrb[0].mxu0 %v1700
      %v1844 = vpop.f32.mrb[0].mxu0
      %v1845 = vadd.f32 0.0, %v1844
      %v1846 = vpop.f32.mrb[0].mxu0
      %v1847 = vpop.f32.mrb[0].mxu0
      %v1848 = vadd.f32 0.0, %v1847
      %v1849 = vpop.f32.mrb[0].mxu0
      %1850 = vmatprep.mubr.bf16.mxu0 0
      %1851 = vmatmul.mubr.bf16.gmra.mrb[0].mxu0 %v1703
      %v1852 = vpop.f32.mrb[0].mxu0
      %v1853 = vadd.f32 0.0, %v1852
      %v1854 = vpop.f32.mrb[0].mxu0
      %v1855 = vpop.f32.mrb[0].mxu0
      %v1856 = vadd.f32 0.0, %v1855
      %v1857 = vpop.f32.mrb[0].mxu0
      %1858 = vmatprep.mubr.bf16.mxu0 0
      %1859 = vmatmul.mubr.bf16.gmra.mrb[0].mxu0 %v1706
      %v1860 = vpop.f32.mrb[0].mxu0
      %v1861 = vadd.f32 0.0, %v1860
      %v1862 = vpop.f32.mrb[0].mxu0
      %v1863 = vpop.f32.mrb[0].mxu0
      %v1864 = vadd.f32 0.0, %v1863
      %v1865 = vpop.f32.mrb[0].mxu0
      %1866 = vmatprep.mubr.bf16.mxu0 0
      %1867 = vmatmul.mubr.bf16.gmra.mrb[0].mxu0 %v1709
      %v1868 = vpop.f32.mrb[0].mxu0
      %v1869 = vadd.f32 0.0, %v1868
      %v1870 = vpop.f32.mrb[0].mxu0
      %v1871 = vpop.f32.mrb[0].mxu0
      %v1872 = vadd.f32 0.0, %v1871
      %v1873 = vpop.f32.mrb[0].mxu0
      %1874 = vdwg.mxu0
      %v1875 = vadd.f32 %v1613, %v1749
      %v1876 = vadd.f32 %v1614, %v1752
      %v1877 = vadd.f32 %v1615, %v1757
      %v1878 = vadd.f32 %v1616, %v1760
      %v1879 = vadd.f32 %v1617, %v1765
      %v1880 = vadd.f32 %v1618, %v1768
      %v1881 = vadd.f32 %v1619, %v1773
      %v1882 = vadd.f32 %v1620, %v1776
      %v1883 = vadd.f32 %v1621, %v1781
      %v1884 = vadd.f32 %v1622, %v1784
      %v1885 = vadd.f32 %v1623, %v1789
      %v1886 = vadd.f32 %v1624, %v1792
      %v1887 = vadd.f32 %v1625, %v1797
      %v1888 = vadd.f32 %v1626, %v1800
      %v1889 = vadd.f32 %v1627, %v1805
      %v1890 = vadd.f32 %v1628, %v1808
      %v1891 = vadd.f32 %v1629, %v1813
      %v1892 = vadd.f32 %v1630, %v1816
      %v1893 = vadd.f32 %v1631, %v1821
      %v1894 = vadd.f32 %v1632, %v1824
      %v1895 = vadd.f32 %v1633, %v1829
      %v1896 = vadd.f32 %v1634, %v1832
      %v1897 = vadd.f32 %v1635, %v1837
      %v1898 = vadd.f32 %v1636, %v1840
      %v1899 = vadd.f32 %v1637, %v1845
      %v1900 = vadd.f32 %v1638, %v1848
      %v1901 = vadd.f32 %v1639, %v1853
      %v1902 = vadd.f32 %v1640, %v1856
      %v1903 = vadd.f32 %v1641, %v1861
      %v1904 = vadd.f32 %v1642, %v1864
      %v1905 = vadd.f32 %v1643, %v1869
      %v1906 = vadd.f32 %v1644, %v1872
      %1907 = vst.msk [vmem:[#allocation3] sm:$0xff] %vm744, %v1875
      %1908 = vst.msk [vmem:[#allocation3 + $0x8] sm:$0xff] %vm744, %v1876
      %1909 = vst.msk [vmem:[#allocation3 + $0x10] sm:$0xff] %vm744, %v1877
      %1910 = vst.msk [vmem:[#allocation3 + $0x18] sm:$0xff] %vm744, %v1878
      %1911 = vst.msk [vmem:[#allocation3 + $0x20] sm:$0xff] %vm744, %v1879
      %1912 = vst.msk [vmem:[#allocation3 + $0x28] sm:$0xff] %vm744, %v1880
      %1913 = vst.msk [vmem:[#allocation3 + $0x30] sm:$0xff] %vm744, %v1881
      %1914 = vst.msk [vmem:[#allocation3 + $0x38] sm:$0xff] %vm744, %v1882
      %1915 = vst.msk [vmem:[#allocation3 + $0x40] sm:$0xff] %vm744, %v1883
      %1916 = vst.msk [vmem:[#allocation3 + $0x48] sm:$0xff] %vm744, %v1884
      %1917 = vst.msk [vmem:[#allocation3 + $0x50] sm:$0xff] %vm744, %v1885
      %1918 = vst.msk [vmem:[#allocation3 + $0x58] sm:$0xff] %vm744, %v1886
      %1919 = vst.msk [vmem:[#allocation3 + $0x60] sm:$0xff] %vm744, %v1887
      %1920 = vst.msk [vmem:[#allocation3 + $0x68] sm:$0xff] %vm744, %v1888
      %1921 = vst.msk [vmem:[#allocation3 + $0x70] sm:$0xff] %vm744, %v1889
      %1922 = vst.msk [vmem:[#allocation3 + $0x78] sm:$0xff] %vm744, %v1890
      %1923 = vst.msk [vmem:[#allocation3 + $0x80] sm:$0xff] %vm744, %v1891
      %1924 = vst.msk [vmem:[#allocation3 + $0x88] sm:$0xff] %vm744, %v1892
      %1925 = vst.msk [vmem:[#allocation3 + $0x90] sm:$0xff] %vm744, %v1893
      %1926 = vst.msk [vmem:[#allocation3 + $0x98] sm:$0xff] %vm744, %v1894
      %1927 = vst.msk [vmem:[#allocation3 + $0xa0] sm:$0xff] %vm744, %v1895
      %1928 = vst.msk [vmem:[#allocation3 + $0xa8] sm:$0xff] %vm744, %v1896
      %1929 = vst.msk [vmem:[#allocation3 + $0xb0] sm:$0xff] %vm744, %v1897
      %1930 = vst.msk [vmem:[#allocation3 + $0xb8] sm:$0xff] %vm744, %v1898
      %1931 = vst.msk [vmem:[#allocation3 + $0xc0] sm:$0xff] %vm744, %v1899
      %1932 = vst.msk [vmem:[#allocation3 + $0xc8] sm:$0xff] %vm744, %v1900
      %1933 = vst.msk [vmem:[#allocation3 + $0xd0] sm:$0xff] %vm744, %v1901
      %1934 = vst.msk [vmem:[#allocation3 + $0xd8] sm:$0xff] %vm744, %v1902
      %1935 = vst.msk [vmem:[#allocation3 + $0xe0] sm:$0xff] %vm744, %v1903
      %1936 = vst.msk [vmem:[#allocation3 + $0xe8] sm:$0xff] %vm744, %v1904
      %1937 = vst.msk [vmem:[#allocation3 + $0xf0] sm:$0xff] %vm744, %v1905
      %1938 = vst.msk [vmem:[#allocation3 + $0xf8] sm:$0xff] %vm744, %v1906
      %v1939 = vld [vmem:[%s800] sm:$0xff]
      %v1940 = vld [vmem:[%s800 + $0x8] sm:$0xff]
      %v1941 = vld [vmem:[%s800 + $0x18] sm:$0xff]
      %v1942 = vld [vmem:[%s800 + $0x20] sm:$0xff]
      %v1943 = vld [vmem:[%s800 + $0x30] sm:$0xff]
      %v1944 = vld [vmem:[%s800 + $0x38] sm:$0xff]
      %v1945 = vld [vmem:[%s800 + $0x48] sm:$0xff]
      %v1946 = vld [vmem:[%s800 + $0x50] sm:$0xff]
      %v1947 = vld [vmem:[%s800 + $0x60] sm:$0xff]
      %v1948 = vld [vmem:[%s800 + $0x68] sm:$0xff]
      %v1949 = vld [vmem:[%s800 + $0x78] sm:$0xff]
      %v1950 = vld [vmem:[%s800 + $0x80] sm:$0xff]
      %v1951 = vld [vmem:[%s800 + $0x90] sm:$0xff]
      %v1952 = vld [vmem:[%s800 + $0x98] sm:$0xff]
      %v1953 = vld [vmem:[%s800 + $0xa8] sm:$0xff]
      %v1954 = vld [vmem:[%s800 + $0xb0] sm:$0xff]
      %v1955 = vld [vmem:[%s800 + $0xc0] sm:$0xff]
      %v1956 = vld [vmem:[%s800 + $0xc8] sm:$0xff]
      %v1957 = vld [vmem:[%s800 + $0xd8] sm:$0xff]
      %v1958 = vld [vmem:[%s800 + $0xe0] sm:$0xff]
      %v1959 = vld [vmem:[%s800 + $0xf0] sm:$0xff]
      %v1960 = vld [vmem:[%s800 + $0xf8] sm:$0xff]
      %v1961 = vld [vmem:[%s800 + $0x108] sm:$0xff]
      %v1962 = vld [vmem:[%s800 + $0x110] sm:$0xff]
      %v1963 = vld [vmem:[%s800 + $0x120] sm:$0xff]
      %v1964 = vld [vmem:[%s800 + $0x128] sm:$0xff]
      %v1965 = vld [vmem:[%s800 + $0x138] sm:$0xff]
      %v1966 = vld [vmem:[%s800 + $0x140] sm:$0xff]
      %v1967 = vld [vmem:[%s800 + $0x150] sm:$0xff]
      %v1968 = vld [vmem:[%s800 + $0x158] sm:$0xff]
      %v1969 = vld [vmem:[%s800 + $0x168] sm:$0xff]
      %v1970 = vld [vmem:[%s800 + $0x170] sm:$0xff]
      %v1971 = vld [vmem:[#allocation3] sm:$0xff]
      %v1972 = vld [vmem:[#allocation3 + $0x8] sm:$0xff]
      %v1973 = vld [vmem:[#allocation3 + $0x10] sm:$0xff]
      %v1974 = vld [vmem:[#allocation3 + $0x18] sm:$0xff]
      %v1975 = vld [vmem:[#allocation3 + $0x20] sm:$0xff]
      %v1976 = vld [vmem:[#allocation3 + $0x28] sm:$0xff]
      %v1977 = vld [vmem:[#allocation3 + $0x30] sm:$0xff]
      %v1978 = vld [vmem:[#allocation3 + $0x38] sm:$0xff]
      %v1979 = vld [vmem:[#allocation3 + $0x40] sm:$0xff]
      %v1980 = vld [vmem:[#allocation3 + $0x48] sm:$0xff]
      %v1981 = vld [vmem:[#allocation3 + $0x50] sm:$0xff]
      %v1982 = vld [vmem:[#allocation3 + $0x58] sm:$0xff]
      %v1983 = vld [vmem:[#allocation3 + $0x60] sm:$0xff]
      %v1984 = vld [vmem:[#allocation3 + $0x68] sm:$0xff]
      %v1985 = vld [vmem:[#allocation3 + $0x70] sm:$0xff]
      %v1986 = vld [vmem:[#allocation3 + $0x78] sm:$0xff]
      %v1987 = vld [vmem:[#allocation3 + $0x80] sm:$0xff]
      %v1988 = vld [vmem:[#allocation3 + $0x88] sm:$0xff]
      %v1989 = vld [vmem:[#allocation3 + $0x90] sm:$0xff]
      %v1990 = vld [vmem:[#allocation3 + $0x98] sm:$0xff]
      %v1991 = vld [vmem:[#allocation3 + $0xa0] sm:$0xff]
      %v1992 = vld [vmem:[#allocation3 + $0xa8] sm:$0xff]
      %v1993 = vld [vmem:[#allocation3 + $0xb0] sm:$0xff]
      %v1994 = vld [vmem:[#allocation3 + $0xb8] sm:$0xff]
      %v1995 = vld [vmem:[#allocation3 + $0xc0] sm:$0xff]
      %v1996 = vld [vmem:[#allocation3 + $0xc8] sm:$0xff]
      %v1997 = vld [vmem:[#allocation3 + $0xd0] sm:$0xff]
      %v1998 = vld [vmem:[#allocation3 + $0xd8] sm:$0xff]
      %v1999 = vld [vmem:[#allocation3 + $0xe0] sm:$0xff]
      %v2000 = vld [vmem:[#allocation3 + $0xe8] sm:$0xff]
      %v2001 = vld [vmem:[#allocation3 + $0xf0] sm:$0xff]
      %v2002 = vld [vmem:[#allocation3 + $0xf8] sm:$0xff]
      %v2003 = vpack.c.bf16 %v1940, %v1939
      %v2004 = vpack.c.bf16 %v1942, %v1941
      %v2005 = vpack.c.bf16 %v1944, %v1943
      %v2006 = vpack.c.bf16 %v1946, %v1945
      %v2007 = vpack.c.bf16 %v1948, %v1947
      %v2008 = vpack.c.bf16 %v1950, %v1949
      %v2009 = vpack.c.bf16 %v1952, %v1951
      %v2010 = vpack.c.bf16 %v1954, %v1953
      %v2011 = vpack.c.bf16 %v1956, %v1955
      %v2012 = vpack.c.bf16 %v1958, %v1957
      %v2013 = vpack.c.bf16 %v1960, %v1959
      %v2014 = vpack.c.bf16 %v1962, %v1961
      %v2015 = vpack.c.bf16 %v1964, %v1963
      %v2016 = vpack.c.bf16 %v1966, %v1965
      %v2017 = vpack.c.bf16 %v1968, %v1967
      %v2018 = vpack.c.bf16 %v1970, %v1969
      %s2019 = scalar_lea.vmem %s3, 3
      %v2020 = vld [vmem:[%s2019] sm:$0x1]
      %v2022 = vsel %vm744, %v2003, 0
      %v2025 = vsel %vm744, %v2004, 0
      %v2028 = vsel %vm744, %v2005, 0
      %v2031 = vsel %vm744, %v2006, 0
      %v2034 = vsel %vm744, %v2007, 0
      %v2037 = vsel %vm744, %v2008, 0
      %v2040 = vsel %vm744, %v2009, 0
      %v2043 = vsel %vm744, %v2010, 0
      %v2046 = vsel %vm744, %v2011, 0
      %v2049 = vsel %vm744, %v2012, 0
      %v2052 = vsel %vm744, %v2013, 0
      %v2055 = vsel %vm744, %v2014, 0
      %v2058 = vsel %vm744, %v2015, 0
      %v2061 = vsel %vm744, %v2016, 0
      %v2064 = vsel %vm744, %v2017, 0
      %v2067 = vsel %vm744, %v2018, 0
      %v2070 = vsel %vm994, %v2020, 0
      %2072 = vmatprep.subr.bf16.mxu0 0
      %2073 = vmatpush1.bf16.msra.mxu0 %v2070
      %2074 = vmatprep.subr.bf16.mxu0 0
      %2075 = vmatpush1.bf16.msra.mxu0 0
      %2076 = vmatprep.subr.bf16.mxu0 0
      %2077 = vmatpush1.bf16.msra.mxu0 0
      %2078 = vmatprep.subr.bf16.mxu0 0
      %2079 = vmatpush1.bf16.msra.mxu0 0
      %2080 = vmatprep.subr.bf16.mxu0 0
      %2081 = vmatpush1.bf16.msra.mxu0 0
      %2082 = vmatprep.subr.bf16.mxu0 0
      %2083 = vmatpush1.bf16.msra.mxu0 0
      %2084 = vmatprep.subr.bf16.mxu0 0
      %2085 = vmatpush1.bf16.msra.mxu0 0
      %2086 = vmatprep.subr.bf16.mxu0 0
      %2087 = vmatpush1.bf16.msra.mxu0 0
      %2088 = vmatprep.subr.bf16.mxu0 0
      %2089 = vmatpush1.bf16.msra.mxu0 0
      %2090 = vmatprep.subr.bf16.mxu0 0
      %2091 = vmatpush1.bf16.msra.mxu0 0
      %2092 = vmatprep.subr.bf16.mxu0 0
      %2093 = vmatpush1.bf16.msra.mxu0 0
      %2094 = vmatprep.subr.bf16.mxu0 0
      %2095 = vmatpush1.bf16.msra.mxu0 0
      %2096 = vmatprep.subr.bf16.mxu0 0
      %2097 = vmatpush1.bf16.msra.mxu0 0
      %2098 = vmatprep.subr.bf16.mxu0 0
      %2099 = vmatpush1.bf16.msra.mxu0 0
      %2100 = vmatprep.subr.bf16.mxu0 0
      %2101 = vmatpush1.bf16.msra.mxu0 0
      %2102 = vmatprep.subr.bf16.mxu0 0
      %2103 = vmatpush1.bf16.msra.mxu0 0
      %2104 = vmatprep.mubr.bf16.mxu0 0
      %2105 = vmatmul.mubr.bf16.gmra.mrb[0].mxu0 %v2022
      %v2106 = vpop.f32.mrb[0].mxu0
      %v2107 = vadd.f32 0.0, %v2106
      %v2108 = vpop.f32.mrb[0].mxu0
      %v2109 = vpop.f32.mrb[0].mxu0
      %v2110 = vadd.f32 0.0, %v2109
      %v2111 = vpop.f32.mrb[0].mxu0
      %2112 = vmatprep.mubr.bf16.mxu0 0
      %2113 = vmatmul.mubr.bf16.gmra.mrb[0].mxu0 %v2025
      %v2114 = vpop.f32.mrb[0].mxu0
      %v2115 = vadd.f32 0.0, %v2114
      %v2116 = vpop.f32.mrb[0].mxu0
      %v2117 = vpop.f32.mrb[0].mxu0
      %v2118 = vadd.f32 0.0, %v2117
      %v2119 = vpop.f32.mrb[0].mxu0
      %2120 = vmatprep.mubr.bf16.mxu0 0
      %2121 = vmatmul.mubr.bf16.gmra.mrb[0].mxu0 %v2028
      %v2122 = vpop.f32.mrb[0].mxu0
      %v2123 = vadd.f32 0.0, %v2122
      %v2124 = vpop.f32.mrb[0].mxu0
      %v2125 = vpop.f32.mrb[0].mxu0
      %v2126 = vadd.f32 0.0, %v2125
      %v2127 = vpop.f32.mrb[0].mxu0
      %2128 = vmatprep.mubr.bf16.mxu0 0
      %2129 = vmatmul.mubr.bf16.gmra.mrb[0].mxu0 %v2031
      %v2130 = vpop.f32.mrb[0].mxu0
      %v2131 = vadd.f32 0.0, %v2130
      %v2132 = vpop.f32.mrb[0].mxu0
      %v2133 = vpop.f32.mrb[0].mxu0
      %v2134 = vadd.f32 0.0, %v2133
      %v2135 = vpop.f32.mrb[0].mxu0
      %2136 = vmatprep.mubr.bf16.mxu0 0
      %2137 = vmatmul.mubr.bf16.gmra.mrb[0].mxu0 %v2034
      %v2138 = vpop.f32.mrb[0].mxu0
      %v2139 = vadd.f32 0.0, %v2138
      %v2140 = vpop.f32.mrb[0].mxu0
      %v2141 = vpop.f32.mrb[0].mxu0
      %v2142 = vadd.f32 0.0, %v2141
      %v2143 = vpop.f32.mrb[0].mxu0
      %2144 = vmatprep.mubr.bf16.mxu0 0
      %2145 = vmatmul.mubr.bf16.gmra.mrb[0].mxu0 %v2037
      %v2146 = vpop.f32.mrb[0].mxu0
      %v2147 = vadd.f32 0.0, %v2146
      %v2148 = vpop.f32.mrb[0].mxu0
      %v2149 = vpop.f32.mrb[0].mxu0
      %v2150 = vadd.f32 0.0, %v2149
      %v2151 = vpop.f32.mrb[0].mxu0
      %2152 = vmatprep.mubr.bf16.mxu0 0
      %2153 = vmatmul.mubr.bf16.gmra.mrb[0].mxu0 %v2040
      %v2154 = vpop.f32.mrb[0].mxu0
      %v2155 = vadd.f32 0.0, %v2154
      %v2156 = vpop.f32.mrb[0].mxu0
      %v2157 = vpop.f32.mrb[0].mxu0
      %v2158 = vadd.f32 0.0, %v2157
      %v2159 = vpop.f32.mrb[0].mxu0
      %2160 = vmatprep.mubr.bf16.mxu0 0
      %2161 = vmatmul.mubr.bf16.gmra.mrb[0].mxu0 %v2043
      %v2162 = vpop.f32.mrb[0].mxu0
      %v2163 = vadd.f32 0.0, %v2162
      %v2164 = vpop.f32.mrb[0].mxu0
      %v2165 = vpop.f32.mrb[0].mxu0
      %v2166 = vadd.f32 0.0, %v2165
      %v2167 = vpop.f32.mrb[0].mxu0
      %2168 = vmatprep.mubr.bf16.mxu0 0
      %2169 = vmatmul.mubr.bf16.gmra.mrb[0].mxu0 %v2046
      %v2170 = vpop.f32.mrb[0].mxu0
      %v2171 = vadd.f32 0.0, %v2170
      %v2172 = vpop.f32.mrb[0].mxu0
      %v2173 = vpop.f32.mrb[0].mxu0
      %v2174 = vadd.f32 0.0, %v2173
      %v2175 = vpop.f32.mrb[0].mxu0
      %2176 = vmatprep.mubr.bf16.mxu0 0
      %2177 = vmatmul.mubr.bf16.gmra.mrb[0].mxu0 %v2049
      %v2178 = vpop.f32.mrb[0].mxu0
      %v2179 = vadd.f32 0.0, %v2178
      %v2180 = vpop.f32.mrb[0].mxu0
      %v2181 = vpop.f32.mrb[0].mxu0
      %v2182 = vadd.f32 0.0, %v2181
      %v2183 = vpop.f32.mrb[0].mxu0
      %2184 = vmatprep.mubr.bf16.mxu0 0
      %2185 = vmatmul.mubr.bf16.gmra.mrb[0].mxu0 %v2052
      %v2186 = vpop.f32.mrb[0].mxu0
      %v2187 = vadd.f32 0.0, %v2186
      %v2188 = vpop.f32.mrb[0].mxu0
      %v2189 = vpop.f32.mrb[0].mxu0
      %v2190 = vadd.f32 0.0, %v2189
      %v2191 = vpop.f32.mrb[0].mxu0
      %2192 = vmatprep.mubr.bf16.mxu0 0
      %2193 = vmatmul.mubr.bf16.gmra.mrb[0].mxu0 %v2055
      %v2194 = vpop.f32.mrb[0].mxu0
      %v2195 = vadd.f32 0.0, %v2194
      %v2196 = vpop.f32.mrb[0].mxu0
      %v2197 = vpop.f32.mrb[0].mxu0
      %v2198 = vadd.f32 0.0, %v2197
      %v2199 = vpop.f32.mrb[0].mxu0
      %2200 = vmatprep.mubr.bf16.mxu0 0
      %2201 = vmatmul.mubr.bf16.gmra.mrb[0].mxu0 %v2058
      %v2202 = vpop.f32.mrb[0].mxu0
      %v2203 = vadd.f32 0.0, %v2202
      %v2204 = vpop.f32.mrb[0].mxu0
      %v2205 = vpop.f32.mrb[0].mxu0
      %v2206 = vadd.f32 0.0, %v2205
      %v2207 = vpop.f32.mrb[0].mxu0
      %2208 = vmatprep.mubr.bf16.mxu0 0
      %2209 = vmatmul.mubr.bf16.gmra.mrb[0].mxu0 %v2061
      %v2210 = vpop.f32.mrb[0].mxu0
      %v2211 = vadd.f32 0.0, %v2210
      %v2212 = vpop.f32.mrb[0].mxu0
      %v2213 = vpop.f32.mrb[0].mxu0
      %v2214 = vadd.f32 0.0, %v2213
      %v2215 = vpop.f32.mrb[0].mxu0
      %2216 = vmatprep.mubr.bf16.mxu0 0
      %2217 = vmatmul.mubr.bf16.gmra.mrb[0].mxu0 %v2064
      %v2218 = vpop.f32.mrb[0].mxu0
      %v2219 = vadd.f32 0.0, %v2218
      %v2220 = vpop.f32.mrb[0].mxu0
      %v2221 = vpop.f32.mrb[0].mxu0
      %v2222 = vadd.f32 0.0, %v2221
      %v2223 = vpop.f32.mrb[0].mxu0
      %2224 = vmatprep.mubr.bf16.mxu0 0
      %2225 = vmatmul.mubr.bf16.gmra.mrb[0].mxu0 %v2067
      %v2226 = vpop.f32.mrb[0].mxu0
      %v2227 = vadd.f32 0.0, %v2226
      %v2228 = vpop.f32.mrb[0].mxu0
      %v2229 = vpop.f32.mrb[0].mxu0
      %v2230 = vadd.f32 0.0, %v2229
      %v2231 = vpop.f32.mrb[0].mxu0
      %2232 = vdwg.mxu0
      %v2233 = vadd.f32 %v1971, %v2107
      %v2234 = vadd.f32 %v1972, %v2110
      %v2235 = vadd.f32 %v1973, %v2115
      %v2236 = vadd.f32 %v1974, %v2118
      %v2237 = vadd.f32 %v1975, %v2123
      %v2238 = vadd.f32 %v1976, %v2126
      %v2239 = vadd.f32 %v1977, %v2131
      %v2240 = vadd.f32 %v1978, %v2134
      %v2241 = vadd.f32 %v1979, %v2139
      %v2242 = vadd.f32 %v1980, %v2142
      %v2243 = vadd.f32 %v1981, %v2147
      %v2244 = vadd.f32 %v1982, %v2150
      %v2245 = vadd.f32 %v1983, %v2155
      %v2246 = vadd.f32 %v1984, %v2158
      %v2247 = vadd.f32 %v1985, %v2163
      %v2248 = vadd.f32 %v1986, %v2166
      %v2249 = vadd.f32 %v1987, %v2171
      %v2250 = vadd.f32 %v1988, %v2174
      %v2251 = vadd.f32 %v1989, %v2179
      %v2252 = vadd.f32 %v1990, %v2182
      %v2253 = vadd.f32 %v1991, %v2187
      %v2254 = vadd.f32 %v1992, %v2190
      %v2255 = vadd.f32 %v1993, %v2195
      %v2256 = vadd.f32 %v1994, %v2198
      %v2257 = vadd.f32 %v1995, %v2203
      %v2258 = vadd.f32 %v1996, %v2206
      %v2259 = vadd.f32 %v1997, %v2211
      %v2260 = vadd.f32 %v1998, %v2214
      %v2261 = vadd.f32 %v1999, %v2219
      %v2262 = vadd.f32 %v2000, %v2222
      %v2263 = vadd.f32 %v2001, %v2227
      %v2264 = vadd.f32 %v2002, %v2230
      %2265 = vst.msk [vmem:[#allocation3] sm:$0xff] %vm744, %v2233
      %2266 = vst.msk [vmem:[#allocation3 + $0x8] sm:$0xff] %vm744, %v2234
      %2267 = vst.msk [vmem:[#allocation3 + $0x10] sm:$0xff] %vm744, %v2235
      %2268 = vst.msk [vmem:[#allocation3 + $0x18] sm:$0xff] %vm744, %v2236
      %2269 = vst.msk [vmem:[#allocation3 + $0x20] sm:$0xff] %vm744, %v2237
      %2270 = vst.msk [vmem:[#allocation3 + $0x28] sm:$0xff] %vm744, %v2238
      %2271 = vst.msk [vmem:[#allocation3 + $0x30] sm:$0xff] %vm744, %v2239
      %2272 = vst.msk [vmem:[#allocation3 + $0x38] sm:$0xff] %vm744, %v2240
      %2273 = vst.msk [vmem:[#allocation3 + $0x40] sm:$0xff] %vm744, %v2241
      %2274 = vst.msk [vmem:[#allocation3 + $0x48] sm:$0xff] %vm744, %v2242
      %2275 = vst.msk [vmem:[#allocation3 + $0x50] sm:$0xff] %vm744, %v2243
      %2276 = vst.msk [vmem:[#allocation3 + $0x58] sm:$0xff] %vm744, %v2244
      %2277 = vst.msk [vmem:[#allocation3 + $0x60] sm:$0xff] %vm744, %v2245
      %2278 = vst.msk [vmem:[#allocation3 + $0x68] sm:$0xff] %vm744, %v2246
      %2279 = vst.msk [vmem:[#allocation3 + $0x70] sm:$0xff] %vm744, %v2247
      %2280 = vst.msk [vmem:[#allocation3 + $0x78] sm:$0xff] %vm744, %v2248
      %2281 = vst.msk [vmem:[#allocation3 + $0x80] sm:$0xff] %vm744, %v2249
      %2282 = vst.msk [vmem:[#allocation3 + $0x88] sm:$0xff] %vm744, %v2250
      %2283 = vst.msk [vmem:[#allocation3 + $0x90] sm:$0xff] %vm744, %v2251
      %2284 = vst.msk [vmem:[#allocation3 + $0x98] sm:$0xff] %vm744, %v2252
      %2285 = vst.msk [vmem:[#allocation3 + $0xa0] sm:$0xff] %vm744, %v2253
      %2286 = vst.msk [vmem:[#allocation3 + $0xa8] sm:$0xff] %vm744, %v2254
      %2287 = vst.msk [vmem:[#allocation3 + $0xb0] sm:$0xff] %vm744, %v2255
      %2288 = vst.msk [vmem:[#allocation3 + $0xb8] sm:$0xff] %vm744, %v2256
      %2289 = vst.msk [vmem:[#allocation3 + $0xc0] sm:$0xff] %vm744, %v2257
      %2290 = vst.msk [vmem:[#allocation3 + $0xc8] sm:$0xff] %vm744, %v2258
      %2291 = vst.msk [vmem:[#allocation3 + $0xd0] sm:$0xff] %vm744, %v2259
      %2292 = vst.msk [vmem:[#allocation3 + $0xd8] sm:$0xff] %vm744, %v2260
      %2293 = vst.msk [vmem:[#allocation3 + $0xe0] sm:$0xff] %vm744, %v2261
      %2294 = vst.msk [vmem:[#allocation3 + $0xe8] sm:$0xff] %vm744, %v2262
      %2295 = vst.msk [vmem:[#allocation3 + $0xf0] sm:$0xff] %vm744, %v2263
      %2296 = vst.msk [vmem:[#allocation3 + $0xf8] sm:$0xff] %vm744, %v2264
      %v2297 = vld [vmem:[%s800 + $0x1] sm:$0xff]
      %v2298 = vld [vmem:[%s800 + $0x9] sm:$0xff]
      %v2299 = vld [vmem:[%s800 + $0x19] sm:$0xff]
      %v2300 = vld [vmem:[%s800 + $0x21] sm:$0xff]
      %v2301 = vld [vmem:[%s800 + $0x31] sm:$0xff]
      %v2302 = vld [vmem:[%s800 + $0x39] sm:$0xff]
      %v2303 = vld [vmem:[%s800 + $0x49] sm:$0xff]
      %v2304 = vld [vmem:[%s800 + $0x51] sm:$0xff]
      %v2305 = vld [vmem:[%s800 + $0x61] sm:$0xff]
      %v2306 = vld [vmem:[%s800 + $0x69] sm:$0xff]
      %v2307 = vld [vmem:[%s800 + $0x79] sm:$0xff]
      %v2308 = vld [vmem:[%s800 + $0x81] sm:$0xff]
      %v2309 = vld [vmem:[%s800 + $0x91] sm:$0xff]
      %v2310 = vld [vmem:[%s800 + $0x99] sm:$0xff]
      %v2311 = vld [vmem:[%s800 + $0xa9] sm:$0xff]
      %v2312 = vld [vmem:[%s800 + $0xb1] sm:$0xff]
      %v2313 = vld [vmem:[%s800 + $0xc1] sm:$0xff]
      %v2314 = vld [vmem:[%s800 + $0xc9] sm:$0xff]
      %v2315 = vld [vmem:[%s800 + $0xd9] sm:$0xff]
      %v2316 = vld [vmem:[%s800 + $0xe1] sm:$0xff]
      %v2317 = vld [vmem:[%s800 + $0xf1] sm:$0xff]
      %v2318 = vld [vmem:[%s800 + $0xf9] sm:$0xff]
      %v2319 = vld [vmem:[%s800 + $0x109] sm:$0xff]
      %v2320 = vld [vmem:[%s800 + $0x111] sm:$0xff]
      %v2321 = vld [vmem:[%s800 + $0x121] sm:$0xff]
      %v2322 = vld [vmem:[%s800 + $0x129] sm:$0xff]
      %v2323 = vld [vmem:[%s800 + $0x139] sm:$0xff]
      %v2324 = vld [vmem:[%s800 + $0x141] sm:$0xff]
      %v2325 = vld [vmem:[%s800 + $0x151] sm:$0xff]
      %v2326 = vld [vmem:[%s800 + $0x159] sm:$0xff]
      %v2327 = vld [vmem:[%s800 + $0x169] sm:$0xff]
      %v2328 = vld [vmem:[%s800 + $0x171] sm:$0xff]
      %v2329 = vld [vmem:[#allocation3] sm:$0xff]
      %v2330 = vld [vmem:[#allocation3 + $0x8] sm:$0xff]
      %v2331 = vld [vmem:[#allocation3 + $0x10] sm:$0xff]
      %v2332 = vld [vmem:[#allocation3 + $0x18] sm:$0xff]
      %v2333 = vld [vmem:[#allocation3 + $0x20] sm:$0xff]
      %v2334 = vld [vmem:[#allocation3 + $0x28] sm:$0xff]
      %v2335 = vld [vmem:[#allocation3 + $0x30] sm:$0xff]
      %v2336 = vld [vmem:[#allocation3 + $0x38] sm:$0xff]
      %v2337 = vld [vmem:[#allocation3 + $0x40] sm:$0xff]
      %v2338 = vld [vmem:[#allocation3 + $0x48] sm:$0xff]
      %v2339 = vld [vmem:[#allocation3 + $0x50] sm:$0xff]
      %v2340 = vld [vmem:[#allocation3 + $0x58] sm:$0xff]
      %v2341 = vld [vmem:[#allocation3 + $0x60] sm:$0xff]
      %v2342 = vld [vmem:[#allocation3 + $0x68] sm:$0xff]
      %v2343 = vld [vmem:[#allocation3 + $0x70] sm:$0xff]
      %v2344 = vld [vmem:[#allocation3 + $0x78] sm:$0xff]
      %v2345 = vld [vmem:[#allocation3 + $0x80] sm:$0xff]
      %v2346 = vld [vmem:[#allocation3 + $0x88] sm:$0xff]
      %v2347 = vld [vmem:[#allocation3 + $0x90] sm:$0xff]
      %v2348 = vld [vmem:[#allocation3 + $0x98] sm:$0xff]
      %v2349 = vld [vmem:[#allocation3 + $0xa0] sm:$0xff]
      %v2350 = vld [vmem:[#allocation3 + $0xa8] sm:$0xff]
      %v2351 = vld [vmem:[#allocation3 + $0xb0] sm:$0xff]
      %v2352 = vld [vmem:[#allocation3 + $0xb8] sm:$0xff]
      %v2353 = vld [vmem:[#allocation3 + $0xc0] sm:$0xff]
      %v2354 = vld [vmem:[#allocation3 + $0xc8] sm:$0xff]
      %v2355 = vld [vmem:[#allocation3 + $0xd0] sm:$0xff]
      %v2356 = vld [vmem:[#allocation3 + $0xd8] sm:$0xff]
      %v2357 = vld [vmem:[#allocation3 + $0xe0] sm:$0xff]
      %v2358 = vld [vmem:[#allocation3 + $0xe8] sm:$0xff]
      %v2359 = vld [vmem:[#allocation3 + $0xf0] sm:$0xff]
      %v2360 = vld [vmem:[#allocation3 + $0xf8] sm:$0xff]
      %v2361 = vpack.c.bf16 %v2298, %v2297
      %v2362 = vpack.c.bf16 %v2300, %v2299
      %v2363 = vpack.c.bf16 %v2302, %v2301
      %v2364 = vpack.c.bf16 %v2304, %v2303
      %v2365 = vpack.c.bf16 %v2306, %v2305
      %v2366 = vpack.c.bf16 %v2308, %v2307
      %v2367 = vpack.c.bf16 %v2310, %v2309
      %v2368 = vpack.c.bf16 %v2312, %v2311
      %v2369 = vpack.c.bf16 %v2314, %v2313
      %v2370 = vpack.c.bf16 %v2316, %v2315
      %v2371 = vpack.c.bf16 %v2318, %v2317
      %v2372 = vpack.c.bf16 %v2320, %v2319
      %v2373 = vpack.c.bf16 %v2322, %v2321
      %v2374 = vpack.c.bf16 %v2324, %v2323
      %v2375 = vpack.c.bf16 %v2326, %v2325
      %v2376 = vpack.c.bf16 %v2328, %v2327
      %s2377 = scalar_lea.vmem %s3, 4
      %v2378 = vld [vmem:[%s2377] sm:$0x1]
      %v2380 = vsel %vm744, %v2361, 0
      %v2383 = vsel %vm744, %v2362, 0
      %v2386 = vsel %vm744, %v2363, 0
      %v2389 = vsel %vm744, %v2364, 0
      %v2392 = vsel %vm744, %v2365, 0
      %v2395 = vsel %vm744, %v2366, 0
      %v2398 = vsel %vm744, %v2367, 0
      %v2401 = vsel %vm744, %v2368, 0
      %v2404 = vsel %vm744, %v2369, 0
      %v2407 = vsel %vm744, %v2370, 0
      %v2410 = vsel %vm744, %v2371, 0
      %v2413 = vsel %vm744, %v2372, 0
      %v2416 = vsel %vm744, %v2373, 0
      %v2419 = vsel %vm744, %v2374, 0
      %v2422 = vsel %vm744, %v2375, 0
      %v2425 = vsel %vm744, %v2376, 0
      %v2428 = vsel %vm994, %v2378, 0
      %2430 = vmatprep.subr.bf16.mxu0 0
      %2431 = vmatpush1.bf16.msra.mxu0 %v2428
      %2432 = vmatprep.subr.bf16.mxu0 0
      %2433 = vmatpush1.bf16.msra.mxu0 0
      %2434 = vmatprep.subr.bf16.mxu0 0
      %2435 = vmatpush1.bf16.msra.mxu0 0
      %2436 = vmatprep.subr.bf16.mxu0 0
      %2437 = vmatpush1.bf16.msra.mxu0 0
      %2438 = vmatprep.subr.bf16.mxu0 0
      %2439 = vmatpush1.bf16.msra.mxu0 0
      %2440 = vmatprep.subr.bf16.mxu0 0
      %2441 = vmatpush1.bf16.msra.mxu0 0
      %2442 = vmatprep.subr.bf16.mxu0 0
      %2443 = vmatpush1.bf16.msra.mxu0 0
      %2444 = vmatprep.subr.bf16.mxu0 0
      %2445 = vmatpush1.bf16.msra.mxu0 0
      %2446 = vmatprep.subr.bf16.mxu0 0
      %2447 = vmatpush1.bf16.msra.mxu0 0
      %2448 = vmatprep.subr.bf16.mxu0 0
      %2449 = vmatpush1.bf16.msra.mxu0 0
      %2450 = vmatprep.subr.bf16.mxu0 0
      %2451 = vmatpush1.bf16.msra.mxu0 0
      %2452 = vmatprep.subr.bf16.mxu0 0
      %2453 = vmatpush1.bf16.msra.mxu0 0
      %2454 = vmatprep.subr.bf16.mxu0 0
      %2455 = vmatpush1.bf16.msra.mxu0 0
      %2456 = vmatprep.subr.bf16.mxu0 0
      %2457 = vmatpush1.bf16.msra.mxu0 0
      %2458 = vmatprep.subr.bf16.mxu0 0
      %2459 = vmatpush1.bf16.msra.mxu0 0
      %2460 = vmatprep.subr.bf16.mxu0 0
      %2461 = vmatpush1.bf16.msra.mxu0 0
      %2462 = vmatprep.mubr.bf16.mxu0 0
      %2463 = vmatmul.mubr.bf16.gmra.mrb[0].mxu0 %v2380
      %v2464 = vpop.f32.mrb[0].mxu0
      %v2465 = vadd.f32 0.0, %v2464
      %v2466 = vpop.f32.mrb[0].mxu0
      %v2467 = vpop.f32.mrb[0].mxu0
      %v2468 = vadd.f32 0.0, %v2467
      %v2469 = vpop.f32.mrb[0].mxu0
      %2470 = vmatprep.mubr.bf16.mxu0 0
      %2471 = vmatmul.mubr.bf16.gmra.mrb[0].mxu0 %v2383
      %v2472 = vpop.f32.mrb[0].mxu0
      %v2473 = vadd.f32 0.0, %v2472
      %v2474 = vpop.f32.mrb[0].mxu0
      %v2475 = vpop.f32.mrb[0].mxu0
      %v2476 = vadd.f32 0.0, %v2475
      %v2477 = vpop.f32.mrb[0].mxu0
      %2478 = vmatprep.mubr.bf16.mxu0 0
      %2479 = vmatmul.mubr.bf16.gmra.mrb[0].mxu0 %v2386
      %v2480 = vpop.f32.mrb[0].mxu0
      %v2481 = vadd.f32 0.0, %v2480
      %v2482 = vpop.f32.mrb[0].mxu0
      %v2483 = vpop.f32.mrb[0].mxu0
      %v2484 = vadd.f32 0.0, %v2483
      %v2485 = vpop.f32.mrb[0].mxu0
      %2486 = vmatprep.mubr.bf16.mxu0 0
      %2487 = vmatmul.mubr.bf16.gmra.mrb[0].mxu0 %v2389
      %v2488 = vpop.f32.mrb[0].mxu0
      %v2489 = vadd.f32 0.0, %v2488
      %v2490 = vpop.f32.mrb[0].mxu0
      %v2491 = vpop.f32.mrb[0].mxu0
      %v2492 = vadd.f32 0.0, %v2491
      %v2493 = vpop.f32.mrb[0].mxu0
      %2494 = vmatprep.mubr.bf16.mxu0 0
      %2495 = vmatmul.mubr.bf16.gmra.mrb[0].mxu0 %v2392
      %v2496 = vpop.f32.mrb[0].mxu0
      %v2497 = vadd.f32 0.0, %v2496
      %v2498 = vpop.f32.mrb[0].mxu0
      %v2499 = vpop.f32.mrb[0].mxu0
      %v2500 = vadd.f32 0.0, %v2499
      %v2501 = vpop.f32.mrb[0].mxu0
      %2502 = vmatprep.mubr.bf16.mxu0 0
      %2503 = vmatmul.mubr.bf16.gmra.mrb[0].mxu0 %v2395
      %v2504 = vpop.f32.mrb[0].mxu0
      %v2505 = vadd.f32 0.0, %v2504
      %v2506 = vpop.f32.mrb[0].mxu0
      %v2507 = vpop.f32.mrb[0].mxu0
      %v2508 = vadd.f32 0.0, %v2507
      %v2509 = vpop.f32.mrb[0].mxu0
      %2510 = vmatprep.mubr.bf16.mxu0 0
      %2511 = vmatmul.mubr.bf16.gmra.mrb[0].mxu0 %v2398
      %v2512 = vpop.f32.mrb[0].mxu0
      %v2513 = vadd.f32 0.0, %v2512
      %v2514 = vpop.f32.mrb[0].mxu0
      %v2515 = vpop.f32.mrb[0].mxu0
      %v2516 = vadd.f32 0.0, %v2515
      %v2517 = vpop.f32.mrb[0].mxu0
      %2518 = vmatprep.mubr.bf16.mxu0 0
      %2519 = vmatmul.mubr.bf16.gmra.mrb[0].mxu0 %v2401
      %v2520 = vpop.f32.mrb[0].mxu0
      %v2521 = vadd.f32 0.0, %v2520
      %v2522 = vpop.f32.mrb[0].mxu0
      %v2523 = vpop.f32.mrb[0].mxu0
      %v2524 = vadd.f32 0.0, %v2523
      %v2525 = vpop.f32.mrb[0].mxu0
      %2526 = vmatprep.mubr.bf16.mxu0 0
      %2527 = vmatmul.mubr.bf16.gmra.mrb[0].mxu0 %v2404
      %v2528 = vpop.f32.mrb[0].mxu0
      %v2529 = vadd.f32 0.0, %v2528
      %v2530 = vpop.f32.mrb[0].mxu0
      %v2531 = vpop.f32.mrb[0].mxu0
      %v2532 = vadd.f32 0.0, %v2531
      %v2533 = vpop.f32.mrb[0].mxu0
      %2534 = vmatprep.mubr.bf16.mxu0 0
      %2535 = vmatmul.mubr.bf16.gmra.mrb[0].mxu0 %v2407
      %v2536 = vpop.f32.mrb[0].mxu0
      %v2537 = vadd.f32 0.0, %v2536
      %v2538 = vpop.f32.mrb[0].mxu0
      %v2539 = vpop.f32.mrb[0].mxu0
      %v2540 = vadd.f32 0.0, %v2539
      %v2541 = vpop.f32.mrb[0].mxu0
      %2542 = vmatprep.mubr.bf16.mxu0 0
      %2543 = vmatmul.mubr.bf16.gmra.mrb[0].mxu0 %v2410
      %v2544 = vpop.f32.mrb[0].mxu0
      %v2545 = vadd.f32 0.0, %v2544
      %v2546 = vpop.f32.mrb[0].mxu0
      %v2547 = vpop.f32.mrb[0].mxu0
      %v2548 = vadd.f32 0.0, %v2547
      %v2549 = vpop.f32.mrb[0].mxu0
      %2550 = vmatprep.mubr.bf16.mxu0 0
      %2551 = vmatmul.mubr.bf16.gmra.mrb[0].mxu0 %v2413
      %v2552 = vpop.f32.mrb[0].mxu0
      %v2553 = vadd.f32 0.0, %v2552
      %v2554 = vpop.f32.mrb[0].mxu0
      %v2555 = vpop.f32.mrb[0].mxu0
      %v2556 = vadd.f32 0.0, %v2555
      %v2557 = vpop.f32.mrb[0].mxu0
      %2558 = vmatprep.mubr.bf16.mxu0 0
      %2559 = vmatmul.mubr.bf16.gmra.mrb[0].mxu0 %v2416
      %v2560 = vpop.f32.mrb[0].mxu0
      %v2561 = vadd.f32 0.0, %v2560
      %v2562 = vpop.f32.mrb[0].mxu0
      %v2563 = vpop.f32.mrb[0].mxu0
      %v2564 = vadd.f32 0.0, %v2563
      %v2565 = vpop.f32.mrb[0].mxu0
      %2566 = vmatprep.mubr.bf16.mxu0 0
      %2567 = vmatmul.mubr.bf16.gmra.mrb[0].mxu0 %v2419
      %v2568 = vpop.f32.mrb[0].mxu0
      %v2569 = vadd.f32 0.0, %v2568
      %v2570 = vpop.f32.mrb[0].mxu0
      %v2571 = vpop.f32.mrb[0].mxu0
      %v2572 = vadd.f32 0.0, %v2571
      %v2573 = vpop.f32.mrb[0].mxu0
      %2574 = vmatprep.mubr.bf16.mxu0 0
      %2575 = vmatmul.mubr.bf16.gmra.mrb[0].mxu0 %v2422
      %v2576 = vpop.f32.mrb[0].mxu0
      %v2577 = vadd.f32 0.0, %v2576
      %v2578 = vpop.f32.mrb[0].mxu0
      %v2579 = vpop.f32.mrb[0].mxu0
      %v2580 = vadd.f32 0.0, %v2579
      %v2581 = vpop.f32.mrb[0].mxu0
      %2582 = vmatprep.mubr.bf16.mxu0 0
      %2583 = vmatmul.mubr.bf16.gmra.mrb[0].mxu0 %v2425
      %v2584 = vpop.f32.mrb[0].mxu0
      %v2585 = vadd.f32 0.0, %v2584
      %v2586 = vpop.f32.mrb[0].mxu0
      %v2587 = vpop.f32.mrb[0].mxu0
      %v2588 = vadd.f32 0.0, %v2587
      %v2589 = vpop.f32.mrb[0].mxu0
      %2590 = vdwg.mxu0
      %v2591 = vadd.f32 %v2329, %v2465
      %v2592 = vadd.f32 %v2330, %v2468
      %v2593 = vadd.f32 %v2331, %v2473
      %v2594 = vadd.f32 %v2332, %v2476
      %v2595 = vadd.f32 %v2333, %v2481
      %v2596 = vadd.f32 %v2334, %v2484
      %v2597 = vadd.f32 %v2335, %v2489
      %v2598 = vadd.f32 %v2336, %v2492
      %v2599 = vadd.f32 %v2337, %v2497
      %v2600 = vadd.f32 %v2338, %v2500
      %v2601 = vadd.f32 %v2339, %v2505
      %v2602 = vadd.f32 %v2340, %v2508
      %v2603 = vadd.f32 %v2341, %v2513
      %v2604 = vadd.f32 %v2342, %v2516
      %v2605 = vadd.f32 %v2343, %v2521
      %v2606 = vadd.f32 %v2344, %v2524
      %v2607 = vadd.f32 %v2345, %v2529
      %v2608 = vadd.f32 %v2346, %v2532
      %v2609 = vadd.f32 %v2347, %v2537
      %v2610 = vadd.f32 %v2348, %v2540
      %v2611 = vadd.f32 %v2349, %v2545
      %v2612 = vadd.f32 %v2350, %v2548
      %v2613 = vadd.f32 %v2351, %v2553
      %v2614 = vadd.f32 %v2352, %v2556
      %v2615 = vadd.f32 %v2353, %v2561
      %v2616 = vadd.f32 %v2354, %v2564
      %v2617 = vadd.f32 %v2355, %v2569
      %v2618 = vadd.f32 %v2356, %v2572
      %v2619 = vadd.f32 %v2357, %v2577
      %v2620 = vadd.f32 %v2358, %v2580
      %v2621 = vadd.f32 %v2359, %v2585
      %v2622 = vadd.f32 %v2360, %v2588
      %2623 = vst.msk [vmem:[#allocation3] sm:$0xff] %vm744, %v2591
      %2624 = vst.msk [vmem:[#allocation3 + $0x8] sm:$0xff] %vm744, %v2592
      %2625 = vst.msk [vmem:[#allocation3 + $0x10] sm:$0xff] %vm744, %v2593
      %2626 = vst.msk [vmem:[#allocation3 + $0x18] sm:$0xff] %vm744, %v2594
      %2627 = vst.msk [vmem:[#allocation3 + $0x20] sm:$0xff] %vm744, %v2595
      %2628 = vst.msk [vmem:[#allocation3 + $0x28] sm:$0xff] %vm744, %v2596
      %2629 = vst.msk [vmem:[#allocation3 + $0x30] sm:$0xff] %vm744, %v2597
      %2630 = vst.msk [vmem:[#allocation3 + $0x38] sm:$0xff] %vm744, %v2598
      %2631 = vst.msk [vmem:[#allocation3 + $0x40] sm:$0xff] %vm744, %v2599
      %2632 = vst.msk [vmem:[#allocation3 + $0x48] sm:$0xff] %vm744, %v2600
      %2633 = vst.msk [vmem:[#allocation3 + $0x50] sm:$0xff] %vm744, %v2601
      %2634 = vst.msk [vmem:[#allocation3 + $0x58] sm:$0xff] %vm744, %v2602
      %2635 = vst.msk [vmem:[#allocation3 + $0x60] sm:$0xff] %vm744, %v2603
      %2636 = vst.msk [vmem:[#allocation3 + $0x68] sm:$0xff] %vm744, %v2604
      %2637 = vst.msk [vmem:[#allocation3 + $0x70] sm:$0xff] %vm744, %v2605
      %2638 = vst.msk [vmem:[#allocation3 + $0x78] sm:$0xff] %vm744, %v2606
      %2639 = vst.msk [vmem:[#allocation3 + $0x80] sm:$0xff] %vm744, %v2607
      %2640 = vst.msk [vmem:[#allocation3 + $0x88] sm:$0xff] %vm744, %v2608
      %2641 = vst.msk [vmem:[#allocation3 + $0x90] sm:$0xff] %vm744, %v2609
      %2642 = vst.msk [vmem:[#allocation3 + $0x98] sm:$0xff] %vm744, %v2610
      %2643 = vst.msk [vmem:[#allocation3 + $0xa0] sm:$0xff] %vm744, %v2611
      %2644 = vst.msk [vmem:[#allocation3 + $0xa8] sm:$0xff] %vm744, %v2612
      %2645 = vst.msk [vmem:[#allocation3 + $0xb0] sm:$0xff] %vm744, %v2613
      %2646 = vst.msk [vmem:[#allocation3 + $0xb8] sm:$0xff] %vm744, %v2614
      %2647 = vst.msk [vmem:[#allocation3 + $0xc0] sm:$0xff] %vm744, %v2615
      %2648 = vst.msk [vmem:[#allocation3 + $0xc8] sm:$0xff] %vm744, %v2616
      %2649 = vst.msk [vmem:[#allocation3 + $0xd0] sm:$0xff] %vm744, %v2617
      %2650 = vst.msk [vmem:[#allocation3 + $0xd8] sm:$0xff] %vm744, %v2618
      %2651 = vst.msk [vmem:[#allocation3 + $0xe0] sm:$0xff] %vm744, %v2619
      %2652 = vst.msk [vmem:[#allocation3 + $0xe8] sm:$0xff] %vm744, %v2620
      %2653 = vst.msk [vmem:[#allocation3 + $0xf0] sm:$0xff] %vm744, %v2621
      %2654 = vst.msk [vmem:[#allocation3 + $0xf8] sm:$0xff] %vm744, %v2622
      %v2655 = vld [vmem:[%s800 + $0x2] sm:$0xff]
      %v2656 = vld [vmem:[%s800 + $0xa] sm:$0xff]
      %v2657 = vld [vmem:[%s800 + $0x1a] sm:$0xff]
      %v2658 = vld [vmem:[%s800 + $0x22] sm:$0xff]
      %v2659 = vld [vmem:[%s800 + $0x32] sm:$0xff]
      %v2660 = vld [vmem:[%s800 + $0x3a] sm:$0xff]
      %v2661 = vld [vmem:[%s800 + $0x4a] sm:$0xff]
      %v2662 = vld [vmem:[%s800 + $0x52] sm:$0xff]
      %v2663 = vld [vmem:[%s800 + $0x62] sm:$0xff]
      %v2664 = vld [vmem:[%s800 + $0x6a] sm:$0xff]
      %v2665 = vld [vmem:[%s800 + $0x7a] sm:$0xff]
      %v2666 = vld [vmem:[%s800 + $0x82] sm:$0xff]
      %v2667 = vld [vmem:[%s800 + $0x92] sm:$0xff]
      %v2668 = vld [vmem:[%s800 + $0x9a] sm:$0xff]
      %v2669 = vld [vmem:[%s800 + $0xaa] sm:$0xff]
      %v2670 = vld [vmem:[%s800 + $0xb2] sm:$0xff]
      %v2671 = vld [vmem:[%s800 + $0xc2] sm:$0xff]
      %v2672 = vld [vmem:[%s800 + $0xca] sm:$0xff]
      %v2673 = vld [vmem:[%s800 + $0xda] sm:$0xff]
      %v2674 = vld [vmem:[%s800 + $0xe2] sm:$0xff]
      %v2675 = vld [vmem:[%s800 + $0xf2] sm:$0xff]
      %v2676 = vld [vmem:[%s800 + $0xfa] sm:$0xff]
      %v2677 = vld [vmem:[%s800 + $0x10a] sm:$0xff]
      %v2678 = vld [vmem:[%s800 + $0x112] sm:$0xff]
      %v2679 = vld [vmem:[%s800 + $0x122] sm:$0xff]
      %v2680 = vld [vmem:[%s800 + $0x12a] sm:$0xff]
      %v2681 = vld [vmem:[%s800 + $0x13a] sm:$0xff]
      %v2682 = vld [vmem:[%s800 + $0x142] sm:$0xff]
      %v2683 = vld [vmem:[%s800 + $0x152] sm:$0xff]
      %v2684 = vld [vmem:[%s800 + $0x15a] sm:$0xff]
      %v2685 = vld [vmem:[%s800 + $0x16a] sm:$0xff]
      %v2686 = vld [vmem:[%s800 + $0x172] sm:$0xff]
      %v2687 = vld [vmem:[#allocation3] sm:$0xff]
      %v2688 = vld [vmem:[#allocation3 + $0x8] sm:$0xff]
      %v2689 = vld [vmem:[#allocation3 + $0x10] sm:$0xff]
      %v2690 = vld [vmem:[#allocation3 + $0x18] sm:$0xff]
      %v2691 = vld [vmem:[#allocation3 + $0x20] sm:$0xff]
      %v2692 = vld [vmem:[#allocation3 + $0x28] sm:$0xff]
      %v2693 = vld [vmem:[#allocation3 + $0x30] sm:$0xff]
      %v2694 = vld [vmem:[#allocation3 + $0x38] sm:$0xff]
      %v2695 = vld [vmem:[#allocation3 + $0x40] sm:$0xff]
      %v2696 = vld [vmem:[#allocation3 + $0x48] sm:$0xff]
      %v2697 = vld [vmem:[#allocation3 + $0x50] sm:$0xff]
      %v2698 = vld [vmem:[#allocation3 + $0x58] sm:$0xff]
      %v2699 = vld [vmem:[#allocation3 + $0x60] sm:$0xff]
      %v2700 = vld [vmem:[#allocation3 + $0x68] sm:$0xff]
      %v2701 = vld [vmem:[#allocation3 + $0x70] sm:$0xff]
      %v2702 = vld [vmem:[#allocation3 + $0x78] sm:$0xff]
      %v2703 = vld [vmem:[#allocation3 + $0x80] sm:$0xff]
      %v2704 = vld [vmem:[#allocation3 + $0x88] sm:$0xff]
      %v2705 = vld [vmem:[#allocation3 + $0x90] sm:$0xff]
      %v2706 = vld [vmem:[#allocation3 + $0x98] sm:$0xff]
      %v2707 = vld [vmem:[#allocation3 + $0xa0] sm:$0xff]
      %v2708 = vld [vmem:[#allocation3 + $0xa8] sm:$0xff]
      %v2709 = vld [vmem:[#allocation3 + $0xb0] sm:$0xff]
      %v2710 = vld [vmem:[#allocation3 + $0xb8] sm:$0xff]
      %v2711 = vld [vmem:[#allocation3 + $0xc0] sm:$0xff]
      %v2712 = vld [vmem:[#allocation3 + $0xc8] sm:$0xff]
      %v2713 = vld [vmem:[#allocation3 + $0xd0] sm:$0xff]
      %v2714 = vld [vmem:[#allocation3 + $0xd8] sm:$0xff]
      %v2715 = vld [vmem:[#allocation3 + $0xe0] sm:$0xff]
      %v2716 = vld [vmem:[#allocation3 + $0xe8] sm:$0xff]
      %v2717 = vld [vmem:[#allocation3 + $0xf0] sm:$0xff]
      %v2718 = vld [vmem:[#allocation3 + $0xf8] sm:$0xff]
      %v2719 = vpack.c.bf16 %v2656, %v2655
      %v2720 = vpack.c.bf16 %v2658, %v2657
      %v2721 = vpack.c.bf16 %v2660, %v2659
      %v2722 = vpack.c.bf16 %v2662, %v2661
      %v2723 = vpack.c.bf16 %v2664, %v2663
      %v2724 = vpack.c.bf16 %v2666, %v2665
      %v2725 = vpack.c.bf16 %v2668, %v2667
      %v2726 = vpack.c.bf16 %v2670, %v2669
      %v2727 = vpack.c.bf16 %v2672, %v2671
      %v2728 = vpack.c.bf16 %v2674, %v2673
      %v2729 = vpack.c.bf16 %v2676, %v2675
      %v2730 = vpack.c.bf16 %v2678, %v2677
      %v2731 = vpack.c.bf16 %v2680, %v2679
      %v2732 = vpack.c.bf16 %v2682, %v2681
      %v2733 = vpack.c.bf16 %v2684, %v2683
      %v2734 = vpack.c.bf16 %v2686, %v2685
      %s2735 = scalar_lea.vmem %s3, 5
      %v2736 = vld [vmem:[%s2735] sm:$0x1]
      %v2738 = vsel %vm744, %v2719, 0
      %v2741 = vsel %vm744, %v2720, 0
      %v2744 = vsel %vm744, %v2721, 0
      %v2747 = vsel %vm744, %v2722, 0
      %v2750 = vsel %vm744, %v2723, 0
      %v2753 = vsel %vm744, %v2724, 0
      %v2756 = vsel %vm744, %v2725, 0
      %v2759 = vsel %vm744, %v2726, 0
      %v2762 = vsel %vm744, %v2727, 0
      %v2765 = vsel %vm744, %v2728, 0
      %v2768 = vsel %vm744, %v2729, 0
      %v2771 = vsel %vm744, %v2730, 0
      %v2774 = vsel %vm744, %v2731, 0
      %v2777 = vsel %vm744, %v2732, 0
      %v2780 = vsel %vm744, %v2733, 0
      %v2783 = vsel %vm744, %v2734, 0
      %v2786 = vsel %vm994, %v2736, 0
      %2788 = vmatprep.subr.bf16.mxu0 0
      %2789 = vmatpush1.bf16.msra.mxu0 %v2786
      %2790 = vmatprep.subr.bf16.mxu0 0
      %2791 = vmatpush1.bf16.msra.mxu0 0
      %2792 = vmatprep.subr.bf16.mxu0 0
      %2793 = vmatpush1.bf16.msra.mxu0 0
      %2794 = vmatprep.subr.bf16.mxu0 0
      %2795 = vmatpush1.bf16.msra.mxu0 0
      %2796 = vmatprep.subr.bf16.mxu0 0
      %2797 = vmatpush1.bf16.msra.mxu0 0
      %2798 = vmatprep.subr.bf16.mxu0 0
      %2799 = vmatpush1.bf16.msra.mxu0 0
      %2800 = vmatprep.subr.bf16.mxu0 0
      %2801 = vmatpush1.bf16.msra.mxu0 0
      %2802 = vmatprep.subr.bf16.mxu0 0
      %2803 = vmatpush1.bf16.msra.mxu0 0
      %2804 = vmatprep.subr.bf16.mxu0 0
      %2805 = vmatpush1.bf16.msra.mxu0 0
      %2806 = vmatprep.subr.bf16.mxu0 0
      %2807 = vmatpush1.bf16.msra.mxu0 0
      %2808 = vmatprep.subr.bf16.mxu0 0
      %2809 = vmatpush1.bf16.msra.mxu0 0
      %2810 = vmatprep.subr.bf16.mxu0 0
      %2811 = vmatpush1.bf16.msra.mxu0 0
      %2812 = vmatprep.subr.bf16.mxu0 0
      %2813 = vmatpush1.bf16.msra.mxu0 0
      %2814 = vmatprep.subr.bf16.mxu0 0
      %2815 = vmatpush1.bf16.msra.mxu0 0
      %2816 = vmatprep.subr.bf16.mxu0 0
      %2817 = vmatpush1.bf16.msra.mxu0 0
      %2818 = vmatprep.subr.bf16.mxu0 0
      %2819 = vmatpush1.bf16.msra.mxu0 0
      %2820 = vmatprep.mubr.bf16.mxu0 0
      %2821 = vmatmul.mubr.bf16.gmra.mrb[0].mxu0 %v2738
      %v2822 = vpop.f32.mrb[0].mxu0
      %v2823 = vadd.f32 0.0, %v2822
      %v2824 = vpop.f32.mrb[0].mxu0
      %v2825 = vpop.f32.mrb[0].mxu0
      %v2826 = vadd.f32 0.0, %v2825
      %v2827 = vpop.f32.mrb[0].mxu0
      %2828 = vmatprep.mubr.bf16.mxu0 0
      %2829 = vmatmul.mubr.bf16.gmra.mrb[0].mxu0 %v2741
      %v2830 = vpop.f32.mrb[0].mxu0
      %v2831 = vadd.f32 0.0, %v2830
      %v2832 = vpop.f32.mrb[0].mxu0
      %v2833 = vpop.f32.mrb[0].mxu0
      %v2834 = vadd.f32 0.0, %v2833
      %v2835 = vpop.f32.mrb[0].mxu0
      %2836 = vmatprep.mubr.bf16.mxu0 0
      %2837 = vmatmul.mubr.bf16.gmra.mrb[0].mxu0 %v2744
      %v2838 = vpop.f32.mrb[0].mxu0
      %v2839 = vadd.f32 0.0, %v2838
      %v2840 = vpop.f32.mrb[0].mxu0
      %v2841 = vpop.f32.mrb[0].mxu0
      %v2842 = vadd.f32 0.0, %v2841
      %v2843 = vpop.f32.mrb[0].mxu0
      %2844 = vmatprep.mubr.bf16.mxu0 0
      %2845 = vmatmul.mubr.bf16.gmra.mrb[0].mxu0 %v2747
      %v2846 = vpop.f32.mrb[0].mxu0
      %v2847 = vadd.f32 0.0, %v2846
      %v2848 = vpop.f32.mrb[0].mxu0
      %v2849 = vpop.f32.mrb[0].mxu0
      %v2850 = vadd.f32 0.0, %v2849
      %v2851 = vpop.f32.mrb[0].mxu0
      %2852 = vmatprep.mubr.bf16.mxu0 0
      %2853 = vmatmul.mubr.bf16.gmra.mrb[0].mxu0 %v2750
      %v2854 = vpop.f32.mrb[0].mxu0
      %v2855 = vadd.f32 0.0, %v2854
      %v2856 = vpop.f32.mrb[0].mxu0
      %v2857 = vpop.f32.mrb[0].mxu0
      %v2858 = vadd.f32 0.0, %v2857
      %v2859 = vpop.f32.mrb[0].mxu0
      %2860 = vmatprep.mubr.bf16.mxu0 0
      %2861 = vmatmul.mubr.bf16.gmra.mrb[0].mxu0 %v2753
      %v2862 = vpop.f32.mrb[0].mxu0
      %v2863 = vadd.f32 0.0, %v2862
      %v2864 = vpop.f32.mrb[0].mxu0
      %v2865 = vpop.f32.mrb[0].mxu0
      %v2866 = vadd.f32 0.0, %v2865
      %v2867 = vpop.f32.mrb[0].mxu0
      %2868 = vmatprep.mubr.bf16.mxu0 0
      %2869 = vmatmul.mubr.bf16.gmra.mrb[0].mxu0 %v2756
      %v2870 = vpop.f32.mrb[0].mxu0
      %v2871 = vadd.f32 0.0, %v2870
      %v2872 = vpop.f32.mrb[0].mxu0
      %v2873 = vpop.f32.mrb[0].mxu0
      %v2874 = vadd.f32 0.0, %v2873
      %v2875 = vpop.f32.mrb[0].mxu0
      %2876 = vmatprep.mubr.bf16.mxu0 0
      %2877 = vmatmul.mubr.bf16.gmra.mrb[0].mxu0 %v2759
      %v2878 = vpop.f32.mrb[0].mxu0
      %v2879 = vadd.f32 0.0, %v2878
      %v2880 = vpop.f32.mrb[0].mxu0
      %v2881 = vpop.f32.mrb[0].mxu0
      %v2882 = vadd.f32 0.0, %v2881
      %v2883 = vpop.f32.mrb[0].mxu0
      %2884 = vmatprep.mubr.bf16.mxu0 0
      %2885 = vmatmul.mubr.bf16.gmra.mrb[0].mxu0 %v2762
      %v2886 = vpop.f32.mrb[0].mxu0
      %v2887 = vadd.f32 0.0, %v2886
      %v2888 = vpop.f32.mrb[0].mxu0
      %v2889 = vpop.f32.mrb[0].mxu0
      %v2890 = vadd.f32 0.0, %v2889
      %v2891 = vpop.f32.mrb[0].mxu0
      %2892 = vmatprep.mubr.bf16.mxu0 0
      %2893 = vmatmul.mubr.bf16.gmra.mrb[0].mxu0 %v2765
      %v2894 = vpop.f32.mrb[0].mxu0
      %v2895 = vadd.f32 0.0, %v2894
      %v2896 = vpop.f32.mrb[0].mxu0
      %v2897 = vpop.f32.mrb[0].mxu0
      %v2898 = vadd.f32 0.0, %v2897
      %v2899 = vpop.f32.mrb[0].mxu0
      %2900 = vmatprep.mubr.bf16.mxu0 0
      %2901 = vmatmul.mubr.bf16.gmra.mrb[0].mxu0 %v2768
      %v2902 = vpop.f32.mrb[0].mxu0
      %v2903 = vadd.f32 0.0, %v2902
      %v2904 = vpop.f32.mrb[0].mxu0
      %v2905 = vpop.f32.mrb[0].mxu0
      %v2906 = vadd.f32 0.0, %v2905
      %v2907 = vpop.f32.mrb[0].mxu0
      %2908 = vmatprep.mubr.bf16.mxu0 0
      %2909 = vmatmul.mubr.bf16.gmra.mrb[0].mxu0 %v2771
      %v2910 = vpop.f32.mrb[0].mxu0
      %v2911 = vadd.f32 0.0, %v2910
      %v2912 = vpop.f32.mrb[0].mxu0
      %v2913 = vpop.f32.mrb[0].mxu0
      %v2914 = vadd.f32 0.0, %v2913
      %v2915 = vpop.f32.mrb[0].mxu0
      %2916 = vmatprep.mubr.bf16.mxu0 0
      %2917 = vmatmul.mubr.bf16.gmra.mrb[0].mxu0 %v2774
      %v2918 = vpop.f32.mrb[0].mxu0
      %v2919 = vadd.f32 0.0, %v2918
      %v2920 = vpop.f32.mrb[0].mxu0
      %v2921 = vpop.f32.mrb[0].mxu0
      %v2922 = vadd.f32 0.0, %v2921
      %v2923 = vpop.f32.mrb[0].mxu0
      %2924 = vmatprep.mubr.bf16.mxu0 0
      %2925 = vmatmul.mubr.bf16.gmra.mrb[0].mxu0 %v2777
      %v2926 = vpop.f32.mrb[0].mxu0
      %v2927 = vadd.f32 0.0, %v2926
      %v2928 = vpop.f32.mrb[0].mxu0
      %v2929 = vpop.f32.mrb[0].mxu0
      %v2930 = vadd.f32 0.0, %v2929
      %v2931 = vpop.f32.mrb[0].mxu0
      %2932 = vmatprep.mubr.bf16.mxu0 0
      %2933 = vmatmul.mubr.bf16.gmra.mrb[0].mxu0 %v2780
      %v2934 = vpop.f32.mrb[0].mxu0
      %v2935 = vadd.f32 0.0, %v2934
      %v2936 = vpop.f32.mrb[0].mxu0
      %v2937 = vpop.f32.mrb[0].mxu0
      %v2938 = vadd.f32 0.0, %v2937
      %v2939 = vpop.f32.mrb[0].mxu0
      %2940 = vmatprep.mubr.bf16.mxu0 0
      %2941 = vmatmul.mubr.bf16.gmra.mrb[0].mxu0 %v2783
      %v2942 = vpop.f32.mrb[0].mxu0
      %v2943 = vadd.f32 0.0, %v2942
      %v2944 = vpop.f32.mrb[0].mxu0
      %v2945 = vpop.f32.mrb[0].mxu0
      %v2946 = vadd.f32 0.0, %v2945
      %v2947 = vpop.f32.mrb[0].mxu0
      %2948 = vdwg.mxu0
      %v2949 = vadd.f32 %v2687, %v2823
      %v2950 = vadd.f32 %v2688, %v2826
      %v2951 = vadd.f32 %v2689, %v2831
      %v2952 = vadd.f32 %v2690, %v2834
      %v2953 = vadd.f32 %v2691, %v2839
      %v2954 = vadd.f32 %v2692, %v2842
      %v2955 = vadd.f32 %v2693, %v2847
      %v2956 = vadd.f32 %v2694, %v2850
      %v2957 = vadd.f32 %v2695, %v2855
      %v2958 = vadd.f32 %v2696, %v2858
      %v2959 = vadd.f32 %v2697, %v2863
      %v2960 = vadd.f32 %v2698, %v2866
      %v2961 = vadd.f32 %v2699, %v2871
      %v2962 = vadd.f32 %v2700, %v2874
      %v2963 = vadd.f32 %v2701, %v2879
      %v2964 = vadd.f32 %v2702, %v2882
      %v2965 = vadd.f32 %v2703, %v2887
      %v2966 = vadd.f32 %v2704, %v2890
      %v2967 = vadd.f32 %v2705, %v2895
      %v2968 = vadd.f32 %v2706, %v2898
      %v2969 = vadd.f32 %v2707, %v2903
      %v2970 = vadd.f32 %v2708, %v2906
      %v2971 = vadd.f32 %v2709, %v2911
      %v2972 = vadd.f32 %v2710, %v2914
      %v2973 = vadd.f32 %v2711, %v2919
      %v2974 = vadd.f32 %v2712, %v2922
      %v2975 = vadd.f32 %v2713, %v2927
      %v2976 = vadd.f32 %v2714, %v2930
      %v2977 = vadd.f32 %v2715, %v2935
      %v2978 = vadd.f32 %v2716, %v2938
      %v2979 = vadd.f32 %v2717, %v2943
      %v2980 = vadd.f32 %v2718, %v2946
      %2981 = vst.msk [vmem:[#allocation3] sm:$0xff] %vm744, %v2949
      %2982 = vst.msk [vmem:[#allocation3 + $0x8] sm:$0xff] %vm744, %v2950
      %2983 = vst.msk [vmem:[#allocation3 + $0x10] sm:$0xff] %vm744, %v2951
      %2984 = vst.msk [vmem:[#allocation3 + $0x18] sm:$0xff] %vm744, %v2952
      %2985 = vst.msk [vmem:[#allocation3 + $0x20] sm:$0xff] %vm744, %v2953
      %2986 = vst.msk [vmem:[#allocation3 + $0x28] sm:$0xff] %vm744, %v2954
      %2987 = vst.msk [vmem:[#allocation3 + $0x30] sm:$0xff] %vm744, %v2955
      %2988 = vst.msk [vmem:[#allocation3 + $0x38] sm:$0xff] %vm744, %v2956
      %2989 = vst.msk [vmem:[#allocation3 + $0x40] sm:$0xff] %vm744, %v2957
      %2990 = vst.msk [vmem:[#allocation3 + $0x48] sm:$0xff] %vm744, %v2958
      %2991 = vst.msk [vmem:[#allocation3 + $0x50] sm:$0xff] %vm744, %v2959
      %2992 = vst.msk [vmem:[#allocation3 + $0x58] sm:$0xff] %vm744, %v2960
      %2993 = vst.msk [vmem:[#allocation3 + $0x60] sm:$0xff] %vm744, %v2961
      %2994 = vst.msk [vmem:[#allocation3 + $0x68] sm:$0xff] %vm744, %v2962
      %2995 = vst.msk [vmem:[#allocation3 + $0x70] sm:$0xff] %vm744, %v2963
      %2996 = vst.msk [vmem:[#allocation3 + $0x78] sm:$0xff] %vm744, %v2964
      %2997 = vst.msk [vmem:[#allocation3 + $0x80] sm:$0xff] %vm744, %v2965
      %2998 = vst.msk [vmem:[#allocation3 + $0x88] sm:$0xff] %vm744, %v2966
      %2999 = vst.msk [vmem:[#allocation3 + $0x90] sm:$0xff] %vm744, %v2967
      %3000 = vst.msk [vmem:[#allocation3 + $0x98] sm:$0xff] %vm744, %v2968
      %3001 = vst.msk [vmem:[#allocation3 + $0xa0] sm:$0xff] %vm744, %v2969
      %3002 = vst.msk [vmem:[#allocation3 + $0xa8] sm:$0xff] %vm744, %v2970
      %3003 = vst.msk [vmem:[#allocation3 + $0xb0] sm:$0xff] %vm744, %v2971
      %3004 = vst.msk [vmem:[#allocation3 + $0xb8] sm:$0xff] %vm744, %v2972
      %3005 = vst.msk [vmem:[#allocation3 + $0xc0] sm:$0xff] %vm744, %v2973
      %3006 = vst.msk [vmem:[#allocation3 + $0xc8] sm:$0xff] %vm744, %v2974
      %3007 = vst.msk [vmem:[#allocation3 + $0xd0] sm:$0xff] %vm744, %v2975
      %3008 = vst.msk [vmem:[#allocation3 + $0xd8] sm:$0xff] %vm744, %v2976
      %3009 = vst.msk [vmem:[#allocation3 + $0xe0] sm:$0xff] %vm744, %v2977
      %3010 = vst.msk [vmem:[#allocation3 + $0xe8] sm:$0xff] %vm744, %v2978
      %3011 = vst.msk [vmem:[#allocation3 + $0xf0] sm:$0xff] %vm744, %v2979
      %3012 = vst.msk [vmem:[#allocation3 + $0xf8] sm:$0xff] %vm744, %v2980
      %s3013 = scalar_lea.vmem [#allocation2], 48
      %v3014 = vld [vmem:[%s3013] sm:$0xff]
      %v3015 = vld [vmem:[%s3013 + $0x8] sm:$0xff]
      %v3016 = vld [vmem:[%s3013 + $0x18] sm:$0xff]
      %v3017 = vld [vmem:[%s3013 + $0x20] sm:$0xff]
      %v3018 = vld [vmem:[%s3013 + $0x30] sm:$0xff]
      %v3019 = vld [vmem:[%s3013 + $0x38] sm:$0xff]
      %v3020 = vld [vmem:[%s3013 + $0x48] sm:$0xff]
      %v3021 = vld [vmem:[%s3013 + $0x50] sm:$0xff]
      %v3022 = vld [vmem:[%s3013 + $0x60] sm:$0xff]
      %v3023 = vld [vmem:[%s3013 + $0x68] sm:$0xff]
      %v3024 = vld [vmem:[%s3013 + $0x78] sm:$0xff]
      %v3025 = vld [vmem:[%s3013 + $0x80] sm:$0xff]
      %v3026 = vld [vmem:[%s3013 + $0x90] sm:$0xff]
      %v3027 = vld [vmem:[%s3013 + $0x98] sm:$0xff]
      %v3028 = vld [vmem:[%s3013 + $0xa8] sm:$0xff]
      %v3029 = vld [vmem:[%s3013 + $0xb0] sm:$0xff]
      %v3030 = vld [vmem:[%s3013 + $0xc0] sm:$0xff]
      %v3031 = vld [vmem:[%s3013 + $0xc8] sm:$0xff]
      %v3032 = vld [vmem:[%s3013 + $0xd8] sm:$0xff]
      %v3033 = vld [vmem:[%s3013 + $0xe0] sm:$0xff]
      %v3034 = vld [vmem:[%s3013 + $0xf0] sm:$0xff]
      %v3035 = vld [vmem:[%s3013 + $0xf8] sm:$0xff]
      %v3036 = vld [vmem:[%s3013 + $0x108] sm:$0xff]
      %v3037 = vld [vmem:[%s3013 + $0x110] sm:$0xff]
      %v3038 = vld [vmem:[%s3013 + $0x120] sm:$0xff]
      %v3039 = vld [vmem:[%s3013 + $0x128] sm:$0xff]
      %v3040 = vld [vmem:[%s3013 + $0x138] sm:$0xff]
      %v3041 = vld [vmem:[%s3013 + $0x140] sm:$0xff]
      %v3042 = vld [vmem:[%s3013 + $0x150] sm:$0xff]
      %v3043 = vld [vmem:[%s3013 + $0x158] sm:$0xff]
      %v3044 = vld [vmem:[%s3013 + $0x168] sm:$0xff]
      %v3045 = vld [vmem:[%s3013 + $0x170] sm:$0xff]
      %v3046 = vld [vmem:[#allocation3] sm:$0xff]
      %v3047 = vld [vmem:[#allocation3 + $0x8] sm:$0xff]
      %v3048 = vld [vmem:[#allocation3 + $0x10] sm:$0xff]
      %v3049 = vld [vmem:[#allocation3 + $0x18] sm:$0xff]
      %v3050 = vld [vmem:[#allocation3 + $0x20] sm:$0xff]
      %v3051 = vld [vmem:[#allocation3 + $0x28] sm:$0xff]
      %v3052 = vld [vmem:[#allocation3 + $0x30] sm:$0xff]
      %v3053 = vld [vmem:[#allocation3 + $0x38] sm:$0xff]
      %v3054 = vld [vmem:[#allocation3 + $0x40] sm:$0xff]
      %v3055 = vld [vmem:[#allocation3 + $0x48] sm:$0xff]
      %v3056 = vld [vmem:[#allocation3 + $0x50] sm:$0xff]
      %v3057 = vld [vmem:[#allocation3 + $0x58] sm:$0xff]
      %v3058 = vld [vmem:[#allocation3 + $0x60] sm:$0xff]
      %v3059 = vld [vmem:[#allocation3 + $0x68] sm:$0xff]
      %v3060 = vld [vmem:[#allocation3 + $0x70] sm:$0xff]
      %v3061 = vld [vmem:[#allocation3 + $0x78] sm:$0xff]
      %v3062 = vld [vmem:[#allocation3 + $0x80] sm:$0xff]
      %v3063 = vld [vmem:[#allocation3 + $0x88] sm:$0xff]
      %v3064 = vld [vmem:[#allocation3 + $0x90] sm:$0xff]
      %v3065 = vld [vmem:[#allocation3 + $0x98] sm:$0xff]
      %v3066 = vld [vmem:[#allocation3 + $0xa0] sm:$0xff]
      %v3067 = vld [vmem:[#allocation3 + $0xa8] sm:$0xff]
      %v3068 = vld [vmem:[#allocation3 + $0xb0] sm:$0xff]
      %v3069 = vld [vmem:[#allocation3 + $0xb8] sm:$0xff]
      %v3070 = vld [vmem:[#allocation3 + $0xc0] sm:$0xff]
      %v3071 = vld [vmem:[#allocation3 + $0xc8] sm:$0xff]
      %v3072 = vld [vmem:[#allocation3 + $0xd0] sm:$0xff]
      %v3073 = vld [vmem:[#allocation3 + $0xd8] sm:$0xff]
      %v3074 = vld [vmem:[#allocation3 + $0xe0] sm:$0xff]
      %v3075 = vld [vmem:[#allocation3 + $0xe8] sm:$0xff]
      %v3076 = vld [vmem:[#allocation3 + $0xf0] sm:$0xff]
      %v3077 = vld [vmem:[#allocation3 + $0xf8] sm:$0xff]
      %v3078 = vpack.c.bf16 %v3015, %v3014
      %v3079 = vpack.c.bf16 %v3017, %v3016
      %v3080 = vpack.c.bf16 %v3019, %v3018
      %v3081 = vpack.c.bf16 %v3021, %v3020
      %v3082 = vpack.c.bf16 %v3023, %v3022
      %v3083 = vpack.c.bf16 %v3025, %v3024
      %v3084 = vpack.c.bf16 %v3027, %v3026
      %v3085 = vpack.c.bf16 %v3029, %v3028
      %v3086 = vpack.c.bf16 %v3031, %v3030
      %v3087 = vpack.c.bf16 %v3033, %v3032
      %v3088 = vpack.c.bf16 %v3035, %v3034
      %v3089 = vpack.c.bf16 %v3037, %v3036
      %v3090 = vpack.c.bf16 %v3039, %v3038
      %v3091 = vpack.c.bf16 %v3041, %v3040
      %v3092 = vpack.c.bf16 %v3043, %v3042
      %v3093 = vpack.c.bf16 %v3045, %v3044
      %s3094 = scalar_lea.vmem %s3, 6
      %v3095 = vld [vmem:[%s3094] sm:$0x1]
      %v3097 = vsel %vm744, %v3078, 0
      %v3100 = vsel %vm744, %v3079, 0
      %v3103 = vsel %vm744, %v3080, 0
      %v3106 = vsel %vm744, %v3081, 0
      %v3109 = vsel %vm744, %v3082, 0
      %v3112 = vsel %vm744, %v3083, 0
      %v3115 = vsel %vm744, %v3084, 0
      %v3118 = vsel %vm744, %v3085, 0
      %v3121 = vsel %vm744, %v3086, 0
      %v3124 = vsel %vm744, %v3087, 0
      %v3127 = vsel %vm744, %v3088, 0
      %v3130 = vsel %vm744, %v3089, 0
      %v3133 = vsel %vm744, %v3090, 0
      %v3136 = vsel %vm744, %v3091, 0
      %v3139 = vsel %vm744, %v3092, 0
      %v3142 = vsel %vm744, %v3093, 0
      %v3145 = vsel %vm994, %v3095, 0
      %3147 = vmatprep.subr.bf16.mxu0 0
      %3148 = vmatpush1.bf16.msra.mxu0 %v3145
      %3149 = vmatprep.subr.bf16.mxu0 0
      %3150 = vmatpush1.bf16.msra.mxu0 0
      %3151 = vmatprep.subr.bf16.mxu0 0
      %3152 = vmatpush1.bf16.msra.mxu0 0
      %3153 = vmatprep.subr.bf16.mxu0 0
      %3154 = vmatpush1.bf16.msra.mxu0 0
      %3155 = vmatprep.subr.bf16.mxu0 0
      %3156 = vmatpush1.bf16.msra.mxu0 0
      %3157 = vmatprep.subr.bf16.mxu0 0
      %3158 = vmatpush1.bf16.msra.mxu0 0
      %3159 = vmatprep.subr.bf16.mxu0 0
      %3160 = vmatpush1.bf16.msra.mxu0 0
      %3161 = vmatprep.subr.bf16.mxu0 0
      %3162 = vmatpush1.bf16.msra.mxu0 0
      %3163 = vmatprep.subr.bf16.mxu0 0
      %3164 = vmatpush1.bf16.msra.mxu0 0
      %3165 = vmatprep.subr.bf16.mxu0 0
      %3166 = vmatpush1.bf16.msra.mxu0 0
      %3167 = vmatprep.subr.bf16.mxu0 0
      %3168 = vmatpush1.bf16.msra.mxu0 0
      %3169 = vmatprep.subr.bf16.mxu0 0
      %3170 = vmatpush1.bf16.msra.mxu0 0
      %3171 = vmatprep.subr.bf16.mxu0 0
      %3172 = vmatpush1.bf16.msra.mxu0 0
      %3173 = vmatprep.subr.bf16.mxu0 0
      %3174 = vmatpush1.bf16.msra.mxu0 0
      %3175 = vmatprep.subr.bf16.mxu0 0
      %3176 = vmatpush1.bf16.msra.mxu0 0
      %3177 = vmatprep.subr.bf16.mxu0 0
      %3178 = vmatpush1.bf16.msra.mxu0 0
      %3179 = vmatprep.mubr.bf16.mxu0 0
      %3180 = vmatmul.mubr.bf16.gmra.mrb[0].mxu0 %v3097
      %v3181 = vpop.f32.mrb[0].mxu0
      %v3182 = vadd.f32 0.0, %v3181
      %v3183 = vpop.f32.mrb[0].mxu0
      %v3184 = vpop.f32.mrb[0].mxu0
      %v3185 = vadd.f32 0.0, %v3184
      %v3186 = vpop.f32.mrb[0].mxu0
      %3187 = vmatprep.mubr.bf16.mxu0 0
      %3188 = vmatmul.mubr.bf16.gmra.mrb[0].mxu0 %v3100
      %v3189 = vpop.f32.mrb[0].mxu0
      %v3190 = vadd.f32 0.0, %v3189
      %v3191 = vpop.f32.mrb[0].mxu0
      %v3192 = vpop.f32.mrb[0].mxu0
      %v3193 = vadd.f32 0.0, %v3192
      %v3194 = vpop.f32.mrb[0].mxu0
      %3195 = vmatprep.mubr.bf16.mxu0 0
      %3196 = vmatmul.mubr.bf16.gmra.mrb[0].mxu0 %v3103
      %v3197 = vpop.f32.mrb[0].mxu0
      %v3198 = vadd.f32 0.0, %v3197
      %v3199 = vpop.f32.mrb[0].mxu0
      %v3200 = vpop.f32.mrb[0].mxu0
      %v3201 = vadd.f32 0.0, %v3200
      %v3202 = vpop.f32.mrb[0].mxu0
      %3203 = vmatprep.mubr.bf16.mxu0 0
      %3204 = vmatmul.mubr.bf16.gmra.mrb[0].mxu0 %v3106
      %v3205 = vpop.f32.mrb[0].mxu0
      %v3206 = vadd.f32 0.0, %v3205
      %v3207 = vpop.f32.mrb[0].mxu0
      %v3208 = vpop.f32.mrb[0].mxu0
      %v3209 = vadd.f32 0.0, %v3208
      %v3210 = vpop.f32.mrb[0].mxu0
      %3211 = vmatprep.mubr.bf16.mxu0 0
      %3212 = vmatmul.mubr.bf16.gmra.mrb[0].mxu0 %v3109
      %v3213 = vpop.f32.mrb[0].mxu0
      %v3214 = vadd.f32 0.0, %v3213
      %v3215 = vpop.f32.mrb[0].mxu0
      %v3216 = vpop.f32.mrb[0].mxu0
      %v3217 = vadd.f32 0.0, %v3216
      %v3218 = vpop.f32.mrb[0].mxu0
      %3219 = vmatprep.mubr.bf16.mxu0 0
      %3220 = vmatmul.mubr.bf16.gmra.mrb[0].mxu0 %v3112
      %v3221 = vpop.f32.mrb[0].mxu0
      %v3222 = vadd.f32 0.0, %v3221
      %v3223 = vpop.f32.mrb[0].mxu0
      %v3224 = vpop.f32.mrb[0].mxu0
      %v3225 = vadd.f32 0.0, %v3224
      %v3226 = vpop.f32.mrb[0].mxu0
      %3227 = vmatprep.mubr.bf16.mxu0 0
      %3228 = vmatmul.mubr.bf16.gmra.mrb[0].mxu0 %v3115
      %v3229 = vpop.f32.mrb[0].mxu0
      %v3230 = vadd.f32 0.0, %v3229
      %v3231 = vpop.f32.mrb[0].mxu0
      %v3232 = vpop.f32.mrb[0].mxu0
      %v3233 = vadd.f32 0.0, %v3232
      %v3234 = vpop.f32.mrb[0].mxu0
      %3235 = vmatprep.mubr.bf16.mxu0 0
      %3236 = vmatmul.mubr.bf16.gmra.mrb[0].mxu0 %v3118
      %v3237 = vpop.f32.mrb[0].mxu0
      %v3238 = vadd.f32 0.0, %v3237
      %v3239 = vpop.f32.mrb[0].mxu0
      %v3240 = vpop.f32.mrb[0].mxu0
      %v3241 = vadd.f32 0.0, %v3240
      %v3242 = vpop.f32.mrb[0].mxu0
      %3243 = vmatprep.mubr.bf16.mxu0 0
      %3244 = vmatmul.mubr.bf16.gmra.mrb[0].mxu0 %v3121
      %v3245 = vpop.f32.mrb[0].mxu0
      %v3246 = vadd.f32 0.0, %v3245
      %v3247 = vpop.f32.mrb[0].mxu0
      %v3248 = vpop.f32.mrb[0].mxu0
      %v3249 = vadd.f32 0.0, %v3248
      %v3250 = vpop.f32.mrb[0].mxu0
      %3251 = vmatprep.mubr.bf16.mxu0 0
      %3252 = vmatmul.mubr.bf16.gmra.mrb[0].mxu0 %v3124
      %v3253 = vpop.f32.mrb[0].mxu0
      %v3254 = vadd.f32 0.0, %v3253
      %v3255 = vpop.f32.mrb[0].mxu0
      %v3256 = vpop.f32.mrb[0].mxu0
      %v3257 = vadd.f32 0.0, %v3256
      %v3258 = vpop.f32.mrb[0].mxu0
      %3259 = vmatprep.mubr.bf16.mxu0 0
      %3260 = vmatmul.mubr.bf16.gmra.mrb[0].mxu0 %v3127
      %v3261 = vpop.f32.mrb[0].mxu0
      %v3262 = vadd.f32 0.0, %v3261
      %v3263 = vpop.f32.mrb[0].mxu0
      %v3264 = vpop.f32.mrb[0].mxu0
      %v3265 = vadd.f32 0.0, %v3264
      %v3266 = vpop.f32.mrb[0].mxu0
      %3267 = vmatprep.mubr.bf16.mxu0 0
      %3268 = vmatmul.mubr.bf16.gmra.mrb[0].mxu0 %v3130
      %v3269 = vpop.f32.mrb[0].mxu0
      %v3270 = vadd.f32 0.0, %v3269
      %v3271 = vpop.f32.mrb[0].mxu0
      %v3272 = vpop.f32.mrb[0].mxu0
      %v3273 = vadd.f32 0.0, %v3272
      %v3274 = vpop.f32.mrb[0].mxu0
      %3275 = vmatprep.mubr.bf16.mxu0 0
      %3276 = vmatmul.mubr.bf16.gmra.mrb[0].mxu0 %v3133
      %v3277 = vpop.f32.mrb[0].mxu0
      %v3278 = vadd.f32 0.0, %v3277
      %v3279 = vpop.f32.mrb[0].mxu0
      %v3280 = vpop.f32.mrb[0].mxu0
      %v3281 = vadd.f32 0.0, %v3280
      %v3282 = vpop.f32.mrb[0].mxu0
      %3283 = vmatprep.mubr.bf16.mxu0 0
      %3284 = vmatmul.mubr.bf16.gmra.mrb[0].mxu0 %v3136
      %v3285 = vpop.f32.mrb[0].mxu0
      %v3286 = vadd.f32 0.0, %v3285
      %v3287 = vpop.f32.mrb[0].mxu0
      %v3288 = vpop.f32.mrb[0].mxu0
      %v3289 = vadd.f32 0.0, %v3288
      %v3290 = vpop.f32.mrb[0].mxu0
      %3291 = vmatprep.mubr.bf16.mxu0 0
      %3292 = vmatmul.mubr.bf16.gmra.mrb[0].mxu0 %v3139
      %v3293 = vpop.f32.mrb[0].mxu0
      %v3294 = vadd.f32 0.0, %v3293
      %v3295 = vpop.f32.mrb[0].mxu0
      %v3296 = vpop.f32.mrb[0].mxu0
      %v3297 = vadd.f32 0.0, %v3296
      %v3298 = vpop.f32.mrb[0].mxu0
      %3299 = vmatprep.mubr.bf16.mxu0 0
      %3300 = vmatmul.mubr.bf16.gmra.mrb[0].mxu0 %v3142
      %v3301 = vpop.f32.mrb[0].mxu0
      %v3302 = vadd.f32 0.0, %v3301
      %v3303 = vpop.f32.mrb[0].mxu0
      %v3304 = vpop.f32.mrb[0].mxu0
      %v3305 = vadd.f32 0.0, %v3304
      %v3306 = vpop.f32.mrb[0].mxu0
      %3307 = vdwg.mxu0
      %v3308 = vadd.f32 %v3046, %v3182
      %v3309 = vadd.f32 %v3047, %v3185
      %v3310 = vadd.f32 %v3048, %v3190
      %v3311 = vadd.f32 %v3049, %v3193
      %v3312 = vadd.f32 %v3050, %v3198
      %v3313 = vadd.f32 %v3051, %v3201
      %v3314 = vadd.f32 %v3052, %v3206
      %v3315 = vadd.f32 %v3053, %v3209
      %v3316 = vadd.f32 %v3054, %v3214
      %v3317 = vadd.f32 %v3055, %v3217
      %v3318 = vadd.f32 %v3056, %v3222
      %v3319 = vadd.f32 %v3057, %v3225
      %v3320 = vadd.f32 %v3058, %v3230
      %v3321 = vadd.f32 %v3059, %v3233
      %v3322 = vadd.f32 %v3060, %v3238
      %v3323 = vadd.f32 %v3061, %v3241
      %v3324 = vadd.f32 %v3062, %v3246
      %v3325 = vadd.f32 %v3063, %v3249
      %v3326 = vadd.f32 %v3064, %v3254
      %v3327 = vadd.f32 %v3065, %v3257
      %v3328 = vadd.f32 %v3066, %v3262
      %v3329 = vadd.f32 %v3067, %v3265
      %v3330 = vadd.f32 %v3068, %v3270
      %v3331 = vadd.f32 %v3069, %v3273
      %v3332 = vadd.f32 %v3070, %v3278
      %v3333 = vadd.f32 %v3071, %v3281
      %v3334 = vadd.f32 %v3072, %v3286
      %v3335 = vadd.f32 %v3073, %v3289
      %v3336 = vadd.f32 %v3074, %v3294
      %v3337 = vadd.f32 %v3075, %v3297
      %v3338 = vadd.f32 %v3076, %v3302
      %v3339 = vadd.f32 %v3077, %v3305
      %3340 = vst.msk [vmem:[#allocation3] sm:$0xff] %vm744, %v3308
      %3341 = vst.msk [vmem:[#allocation3 + $0x8] sm:$0xff] %vm744, %v3309
      %3342 = vst.msk [vmem:[#allocation3 + $0x10] sm:$0xff] %vm744, %v3310
      %3343 = vst.msk [vmem:[#allocation3 + $0x18] sm:$0xff] %vm744, %v3311
      %3344 = vst.msk [vmem:[#allocation3 + $0x20] sm:$0xff] %vm744, %v3312
      %3345 = vst.msk [vmem:[#allocation3 + $0x28] sm:$0xff] %vm744, %v3313
      %3346 = vst.msk [vmem:[#allocation3 + $0x30] sm:$0xff] %vm744, %v3314
      %3347 = vst.msk [vmem:[#allocation3 + $0x38] sm:$0xff] %vm744, %v3315
      %3348 = vst.msk [vmem:[#allocation3 + $0x40] sm:$0xff] %vm744, %v3316
      %3349 = vst.msk [vmem:[#allocation3 + $0x48] sm:$0xff] %vm744, %v3317
      %3350 = vst.msk [vmem:[#allocation3 + $0x50] sm:$0xff] %vm744, %v3318
      %3351 = vst.msk [vmem:[#allocation3 + $0x58] sm:$0xff] %vm744, %v3319
      %3352 = vst.msk [vmem:[#allocation3 + $0x60] sm:$0xff] %vm744, %v3320
      %3353 = vst.msk [vmem:[#allocation3 + $0x68] sm:$0xff] %vm744, %v3321
      %3354 = vst.msk [vmem:[#allocation3 + $0x70] sm:$0xff] %vm744, %v3322
      %3355 = vst.msk [vmem:[#allocation3 + $0x78] sm:$0xff] %vm744, %v3323
      %3356 = vst.msk [vmem:[#allocation3 + $0x80] sm:$0xff] %vm744, %v3324
      %3357 = vst.msk [vmem:[#allocation3 + $0x88] sm:$0xff] %vm744, %v3325
      %3358 = vst.msk [vmem:[#allocation3 + $0x90] sm:$0xff] %vm744, %v3326
      %3359 = vst.msk [vmem:[#allocation3 + $0x98] sm:$0xff] %vm744, %v3327
      %3360 = vst.msk [vmem:[#allocation3 + $0xa0] sm:$0xff] %vm744, %v3328
      %3361 = vst.msk [vmem:[#allocation3 + $0xa8] sm:$0xff] %vm744, %v3329
      %3362 = vst.msk [vmem:[#allocation3 + $0xb0] sm:$0xff] %vm744, %v3330
      %3363 = vst.msk [vmem:[#allocation3 + $0xb8] sm:$0xff] %vm744, %v3331
      %3364 = vst.msk [vmem:[#allocation3 + $0xc0] sm:$0xff] %vm744, %v3332
      %3365 = vst.msk [vmem:[#allocation3 + $0xc8] sm:$0xff] %vm744, %v3333
      %3366 = vst.msk [vmem:[#allocation3 + $0xd0] sm:$0xff] %vm744, %v3334
      %3367 = vst.msk [vmem:[#allocation3 + $0xd8] sm:$0xff] %vm744, %v3335
      %3368 = vst.msk [vmem:[#allocation3 + $0xe0] sm:$0xff] %vm744, %v3336
      %3369 = vst.msk [vmem:[#allocation3 + $0xe8] sm:$0xff] %vm744, %v3337
      %3370 = vst.msk [vmem:[#allocation3 + $0xf0] sm:$0xff] %vm744, %v3338
      %3371 = vst.msk [vmem:[#allocation3 + $0xf8] sm:$0xff] %vm744, %v3339
      %v3372 = vld [vmem:[%s3013 + $0x1] sm:$0xff]
      %v3373 = vld [vmem:[%s3013 + $0x9] sm:$0xff]
      %v3374 = vld [vmem:[%s3013 + $0x19] sm:$0xff]
      %v3375 = vld [vmem:[%s3013 + $0x21] sm:$0xff]
      %v3376 = vld [vmem:[%s3013 + $0x31] sm:$0xff]
      %v3377 = vld [vmem:[%s3013 + $0x39] sm:$0xff]
      %v3378 = vld [vmem:[%s3013 + $0x49] sm:$0xff]
      %v3379 = vld [vmem:[%s3013 + $0x51] sm:$0xff]
      %v3380 = vld [vmem:[%s3013 + $0x61] sm:$0xff]
      %v3381 = vld [vmem:[%s3013 + $0x69] sm:$0xff]
      %v3382 = vld [vmem:[%s3013 + $0x79] sm:$0xff]
      %v3383 = vld [vmem:[%s3013 + $0x81] sm:$0xff]
      %v3384 = vld [vmem:[%s3013 + $0x91] sm:$0xff]
      %v3385 = vld [vmem:[%s3013 + $0x99] sm:$0xff]
      %v3386 = vld [vmem:[%s3013 + $0xa9] sm:$0xff]
      %v3387 = vld [vmem:[%s3013 + $0xb1] sm:$0xff]
      %v3388 = vld [vmem:[%s3013 + $0xc1] sm:$0xff]
      %v3389 = vld [vmem:[%s3013 + $0xc9] sm:$0xff]
      %v3390 = vld [vmem:[%s3013 + $0xd9] sm:$0xff]
      %v3391 = vld [vmem:[%s3013 + $0xe1] sm:$0xff]
      %v3392 = vld [vmem:[%s3013 + $0xf1] sm:$0xff]
      %v3393 = vld [vmem:[%s3013 + $0xf9] sm:$0xff]
      %v3394 = vld [vmem:[%s3013 + $0x109] sm:$0xff]
      %v3395 = vld [vmem:[%s3013 + $0x111] sm:$0xff]
      %v3396 = vld [vmem:[%s3013 + $0x121] sm:$0xff]
      %v3397 = vld [vmem:[%s3013 + $0x129] sm:$0xff]
      %v3398 = vld [vmem:[%s3013 + $0x139] sm:$0xff]
      %v3399 = vld [vmem:[%s3013 + $0x141] sm:$0xff]
      %v3400 = vld [vmem:[%s3013 + $0x151] sm:$0xff]
      %v3401 = vld [vmem:[%s3013 + $0x159] sm:$0xff]
      %v3402 = vld [vmem:[%s3013 + $0x169] sm:$0xff]
      %v3403 = vld [vmem:[%s3013 + $0x171] sm:$0xff]
      %v3404 = vld [vmem:[#allocation3] sm:$0xff]
      %v3405 = vld [vmem:[#allocation3 + $0x8] sm:$0xff]
      %v3406 = vld [vmem:[#allocation3 + $0x10] sm:$0xff]
      %v3407 = vld [vmem:[#allocation3 + $0x18] sm:$0xff]
      %v3408 = vld [vmem:[#allocation3 + $0x20] sm:$0xff]
      %v3409 = vld [vmem:[#allocation3 + $0x28] sm:$0xff]
      %v3410 = vld [vmem:[#allocation3 + $0x30] sm:$0xff]
      %v3411 = vld [vmem:[#allocation3 + $0x38] sm:$0xff]
      %v3412 = vld [vmem:[#allocation3 + $0x40] sm:$0xff]
      %v3413 = vld [vmem:[#allocation3 + $0x48] sm:$0xff]
      %v3414 = vld [vmem:[#allocation3 + $0x50] sm:$0xff]
      %v3415 = vld [vmem:[#allocation3 + $0x58] sm:$0xff]
      %v3416 = vld [vmem:[#allocation3 + $0x60] sm:$0xff]
      %v3417 = vld [vmem:[#allocation3 + $0x68] sm:$0xff]
      %v3418 = vld [vmem:[#allocation3 + $0x70] sm:$0xff]
      %v3419 = vld [vmem:[#allocation3 + $0x78] sm:$0xff]
      %v3420 = vld [vmem:[#allocation3 + $0x80] sm:$0xff]
      %v3421 = vld [vmem:[#allocation3 + $0x88] sm:$0xff]
      %v3422 = vld [vmem:[#allocation3 + $0x90] sm:$0xff]
      %v3423 = vld [vmem:[#allocation3 + $0x98] sm:$0xff]
      %v3424 = vld [vmem:[#allocation3 + $0xa0] sm:$0xff]
      %v3425 = vld [vmem:[#allocation3 + $0xa8] sm:$0xff]
      %v3426 = vld [vmem:[#allocation3 + $0xb0] sm:$0xff]
      %v3427 = vld [vmem:[#allocation3 + $0xb8] sm:$0xff]
      %v3428 = vld [vmem:[#allocation3 + $0xc0] sm:$0xff]
      %v3429 = vld [vmem:[#allocation3 + $0xc8] sm:$0xff]
      %v3430 = vld [vmem:[#allocation3 + $0xd0] sm:$0xff]
      %v3431 = vld [vmem:[#allocation3 + $0xd8] sm:$0xff]
      %v3432 = vld [vmem:[#allocation3 + $0xe0] sm:$0xff]
      %v3433 = vld [vmem:[#allocation3 + $0xe8] sm:$0xff]
      %v3434 = vld [vmem:[#allocation3 + $0xf0] sm:$0xff]
      %v3435 = vld [vmem:[#allocation3 + $0xf8] sm:$0xff]
      %v3436 = vpack.c.bf16 %v3373, %v3372
      %v3437 = vpack.c.bf16 %v3375, %v3374
      %v3438 = vpack.c.bf16 %v3377, %v3376
      %v3439 = vpack.c.bf16 %v3379, %v3378
      %v3440 = vpack.c.bf16 %v3381, %v3380
      %v3441 = vpack.c.bf16 %v3383, %v3382
      %v3442 = vpack.c.bf16 %v3385, %v3384
      %v3443 = vpack.c.bf16 %v3387, %v3386
      %v3444 = vpack.c.bf16 %v3389, %v3388
      %v3445 = vpack.c.bf16 %v3391, %v3390
      %v3446 = vpack.c.bf16 %v3393, %v3392
      %v3447 = vpack.c.bf16 %v3395, %v3394
      %v3448 = vpack.c.bf16 %v3397, %v3396
      %v3449 = vpack.c.bf16 %v3399, %v3398
      %v3450 = vpack.c.bf16 %v3401, %v3400
      %v3451 = vpack.c.bf16 %v3403, %v3402
      %s3452 = scalar_lea.vmem %s3, 7
      %v3453 = vld [vmem:[%s3452] sm:$0x1]
      %v3455 = vsel %vm744, %v3436, 0
      %v3458 = vsel %vm744, %v3437, 0
      %v3461 = vsel %vm744, %v3438, 0
      %v3464 = vsel %vm744, %v3439, 0
      %v3467 = vsel %vm744, %v3440, 0
      %v3470 = vsel %vm744, %v3441, 0
      %v3473 = vsel %vm744, %v3442, 0
      %v3476 = vsel %vm744, %v3443, 0
      %v3479 = vsel %vm744, %v3444, 0
      %v3482 = vsel %vm744, %v3445, 0
      %v3485 = vsel %vm744, %v3446, 0
      %v3488 = vsel %vm744, %v3447, 0
      %v3491 = vsel %vm744, %v3448, 0
      %v3494 = vsel %vm744, %v3449, 0
      %v3497 = vsel %vm744, %v3450, 0
      %v3500 = vsel %vm744, %v3451, 0
      %v3503 = vsel %vm994, %v3453, 0
      %3505 = vmatprep.subr.bf16.mxu0 0
      %3506 = vmatpush1.bf16.msra.mxu0 %v3503
      %3507 = vmatprep.subr.bf16.mxu0 0
      %3508 = vmatpush1.bf16.msra.mxu0 0
      %3509 = vmatprep.subr.bf16.mxu0 0
      %3510 = vmatpush1.bf16.msra.mxu0 0
      %3511 = vmatprep.subr.bf16.mxu0 0
      %3512 = vmatpush1.bf16.msra.mxu0 0
      %3513 = vmatprep.subr.bf16.mxu0 0
      %3514 = vmatpush1.bf16.msra.mxu0 0
      %3515 = vmatprep.subr.bf16.mxu0 0
      %3516 = vmatpush1.bf16.msra.mxu0 0
      %3517 = vmatprep.subr.bf16.mxu0 0
      %3518 = vmatpush1.bf16.msra.mxu0 0
      %3519 = vmatprep.subr.bf16.mxu0 0
      %3520 = vmatpush1.bf16.msra.mxu0 0
      %3521 = vmatprep.subr.bf16.mxu0 0
      %3522 = vmatpush1.bf16.msra.mxu0 0
      %3523 = vmatprep.subr.bf16.mxu0 0
      %3524 = vmatpush1.bf16.msra.mxu0 0
      %3525 = vmatprep.subr.bf16.mxu0 0
      %3526 = vmatpush1.bf16.msra.mxu0 0
      %3527 = vmatprep.subr.bf16.mxu0 0
      %3528 = vmatpush1.bf16.msra.mxu0 0
      %3529 = vmatprep.subr.bf16.mxu0 0
      %3530 = vmatpush1.bf16.msra.mxu0 0
      %3531 = vmatprep.subr.bf16.mxu0 0
      %3532 = vmatpush1.bf16.msra.mxu0 0
      %3533 = vmatprep.subr.bf16.mxu0 0
      %3534 = vmatpush1.bf16.msra.mxu0 0
      %3535 = vmatprep.subr.bf16.mxu0 0
      %3536 = vmatpush1.bf16.msra.mxu0 0
      %3537 = vmatprep.mubr.bf16.mxu0 0
      %3538 = vmatmul.mubr.bf16.gmra.mrb[0].mxu0 %v3455
      %v3539 = vpop.f32.mrb[0].mxu0
      %v3540 = vadd.f32 0.0, %v3539
      %v3541 = vpop.f32.mrb[0].mxu0
      %v3542 = vpop.f32.mrb[0].mxu0
      %v3543 = vadd.f32 0.0, %v3542
      %v3544 = vpop.f32.mrb[0].mxu0
      %3545 = vmatprep.mubr.bf16.mxu0 0
      %3546 = vmatmul.mubr.bf16.gmra.mrb[0].mxu0 %v3458
      %v3547 = vpop.f32.mrb[0].mxu0
      %v3548 = vadd.f32 0.0, %v3547
      %v3549 = vpop.f32.mrb[0].mxu0
      %v3550 = vpop.f32.mrb[0].mxu0
      %v3551 = vadd.f32 0.0, %v3550
      %v3552 = vpop.f32.mrb[0].mxu0
      %3553 = vmatprep.mubr.bf16.mxu0 0
      %3554 = vmatmul.mubr.bf16.gmra.mrb[0].mxu0 %v3461
      %v3555 = vpop.f32.mrb[0].mxu0
      %v3556 = vadd.f32 0.0, %v3555
      %v3557 = vpop.f32.mrb[0].mxu0
      %v3558 = vpop.f32.mrb[0].mxu0
      %v3559 = vadd.f32 0.0, %v3558
      %v3560 = vpop.f32.mrb[0].mxu0
      %3561 = vmatprep.mubr.bf16.mxu0 0
      %3562 = vmatmul.mubr.bf16.gmra.mrb[0].mxu0 %v3464
      %v3563 = vpop.f32.mrb[0].mxu0
      %v3564 = vadd.f32 0.0, %v3563
      %v3565 = vpop.f32.mrb[0].mxu0
      %v3566 = vpop.f32.mrb[0].mxu0
      %v3567 = vadd.f32 0.0, %v3566
      %v3568 = vpop.f32.mrb[0].mxu0
      %3569 = vmatprep.mubr.bf16.mxu0 0
      %3570 = vmatmul.mubr.bf16.gmra.mrb[0].mxu0 %v3467
      %v3571 = vpop.f32.mrb[0].mxu0
      %v3572 = vadd.f32 0.0, %v3571
      %v3573 = vpop.f32.mrb[0].mxu0
      %v3574 = vpop.f32.mrb[0].mxu0
      %v3575 = vadd.f32 0.0, %v3574
      %v3576 = vpop.f32.mrb[0].mxu0
      %3577 = vmatprep.mubr.bf16.mxu0 0
      %3578 = vmatmul.mubr.bf16.gmra.mrb[0].mxu0 %v3470
      %v3579 = vpop.f32.mrb[0].mxu0
      %v3580 = vadd.f32 0.0, %v3579
      %v3581 = vpop.f32.mrb[0].mxu0
      %v3582 = vpop.f32.mrb[0].mxu0
      %v3583 = vadd.f32 0.0, %v3582
      %v3584 = vpop.f32.mrb[0].mxu0
      %3585 = vmatprep.mubr.bf16.mxu0 0
      %3586 = vmatmul.mubr.bf16.gmra.mrb[0].mxu0 %v3473
      %v3587 = vpop.f32.mrb[0].mxu0
      %v3588 = vadd.f32 0.0, %v3587
      %v3589 = vpop.f32.mrb[0].mxu0
      %v3590 = vpop.f32.mrb[0].mxu0
      %v3591 = vadd.f32 0.0, %v3590
      %v3592 = vpop.f32.mrb[0].mxu0
      %3593 = vmatprep.mubr.bf16.mxu0 0
      %3594 = vmatmul.mubr.bf16.gmra.mrb[0].mxu0 %v3476
      %v3595 = vpop.f32.mrb[0].mxu0
      %v3596 = vadd.f32 0.0, %v3595
      %v3597 = vpop.f32.mrb[0].mxu0
      %v3598 = vpop.f32.mrb[0].mxu0
      %v3599 = vadd.f32 0.0, %v3598
      %v3600 = vpop.f32.mrb[0].mxu0
      %3601 = vmatprep.mubr.bf16.mxu0 0
      %3602 = vmatmul.mubr.bf16.gmra.mrb[0].mxu0 %v3479
      %v3603 = vpop.f32.mrb[0].mxu0
      %v3604 = vadd.f32 0.0, %v3603
      %v3605 = vpop.f32.mrb[0].mxu0
      %v3606 = vpop.f32.mrb[0].mxu0
      %v3607 = vadd.f32 0.0, %v3606
      %v3608 = vpop.f32.mrb[0].mxu0
      %3609 = vmatprep.mubr.bf16.mxu0 0
      %3610 = vmatmul.mubr.bf16.gmra.mrb[0].mxu0 %v3482
      %v3611 = vpop.f32.mrb[0].mxu0
      %v3612 = vadd.f32 0.0, %v3611
      %v3613 = vpop.f32.mrb[0].mxu0
      %v3614 = vpop.f32.mrb[0].mxu0
      %v3615 = vadd.f32 0.0, %v3614
      %v3616 = vpop.f32.mrb[0].mxu0
      %3617 = vmatprep.mubr.bf16.mxu0 0
      %3618 = vmatmul.mubr.bf16.gmra.mrb[0].mxu0 %v3485
      %v3619 = vpop.f32.mrb[0].mxu0
      %v3620 = vadd.f32 0.0, %v3619
      %v3621 = vpop.f32.mrb[0].mxu0
      %v3622 = vpop.f32.mrb[0].mxu0
      %v3623 = vadd.f32 0.0, %v3622
      %v3624 = vpop.f32.mrb[0].mxu0
      %3625 = vmatprep.mubr.bf16.mxu0 0
      %3626 = vmatmul.mubr.bf16.gmra.mrb[0].mxu0 %v3488
      %v3627 = vpop.f32.mrb[0].mxu0
      %v3628 = vadd.f32 0.0, %v3627
      %v3629 = vpop.f32.mrb[0].mxu0
      %v3630 = vpop.f32.mrb[0].mxu0
      %v3631 = vadd.f32 0.0, %v3630
      %v3632 = vpop.f32.mrb[0].mxu0
      %3633 = vmatprep.mubr.bf16.mxu0 0
      %3634 = vmatmul.mubr.bf16.gmra.mrb[0].mxu0 %v3491
      %v3635 = vpop.f32.mrb[0].mxu0
      %v3636 = vadd.f32 0.0, %v3635
      %v3637 = vpop.f32.mrb[0].mxu0
      %v3638 = vpop.f32.mrb[0].mxu0
      %v3639 = vadd.f32 0.0, %v3638
      %v3640 = vpop.f32.mrb[0].mxu0
      %3641 = vmatprep.mubr.bf16.mxu0 0
      %3642 = vmatmul.mubr.bf16.gmra.mrb[0].mxu0 %v3494
      %v3643 = vpop.f32.mrb[0].mxu0
      %v3644 = vadd.f32 0.0, %v3643
      %v3645 = vpop.f32.mrb[0].mxu0
      %v3646 = vpop.f32.mrb[0].mxu0
      %v3647 = vadd.f32 0.0, %v3646
      %v3648 = vpop.f32.mrb[0].mxu0
      %3649 = vmatprep.mubr.bf16.mxu0 0
      %3650 = vmatmul.mubr.bf16.gmra.mrb[0].mxu0 %v3497
      %v3651 = vpop.f32.mrb[0].mxu0
      %v3652 = vadd.f32 0.0, %v3651
      %v3653 = vpop.f32.mrb[0].mxu0
      %v3654 = vpop.f32.mrb[0].mxu0
      %v3655 = vadd.f32 0.0, %v3654
      %v3656 = vpop.f32.mrb[0].mxu0
      %3657 = vmatprep.mubr.bf16.mxu0 0
      %3658 = vmatmul.mubr.bf16.gmra.mrb[0].mxu0 %v3500
      %v3659 = vpop.f32.mrb[0].mxu0
      %v3660 = vadd.f32 0.0, %v3659
      %v3661 = vpop.f32.mrb[0].mxu0
      %v3662 = vpop.f32.mrb[0].mxu0
      %v3663 = vadd.f32 0.0, %v3662
      %v3664 = vpop.f32.mrb[0].mxu0
      %3665 = vdwg.mxu0
      %v3666 = vadd.f32 %v3404, %v3540
      %v3667 = vadd.f32 %v3405, %v3543
      %v3668 = vadd.f32 %v3406, %v3548
      %v3669 = vadd.f32 %v3407, %v3551
      %v3670 = vadd.f32 %v3408, %v3556
      %v3671 = vadd.f32 %v3409, %v3559
      %v3672 = vadd.f32 %v3410, %v3564
      %v3673 = vadd.f32 %v3411, %v3567
      %v3674 = vadd.f32 %v3412, %v3572
      %v3675 = vadd.f32 %v3413, %v3575
      %v3676 = vadd.f32 %v3414, %v3580
      %v3677 = vadd.f32 %v3415, %v3583
      %v3678 = vadd.f32 %v3416, %v3588
      %v3679 = vadd.f32 %v3417, %v3591
      %v3680 = vadd.f32 %v3418, %v3596
      %v3681 = vadd.f32 %v3419, %v3599
      %v3682 = vadd.f32 %v3420, %v3604
      %v3683 = vadd.f32 %v3421, %v3607
      %v3684 = vadd.f32 %v3422, %v3612
      %v3685 = vadd.f32 %v3423, %v3615
      %v3686 = vadd.f32 %v3424, %v3620
      %v3687 = vadd.f32 %v3425, %v3623
      %v3688 = vadd.f32 %v3426, %v3628
      %v3689 = vadd.f32 %v3427, %v3631
      %v3690 = vadd.f32 %v3428, %v3636
      %v3691 = vadd.f32 %v3429, %v3639
      %v3692 = vadd.f32 %v3430, %v3644
      %v3693 = vadd.f32 %v3431, %v3647
      %v3694 = vadd.f32 %v3432, %v3652
      %v3695 = vadd.f32 %v3433, %v3655
      %v3696 = vadd.f32 %v3434, %v3660
      %v3697 = vadd.f32 %v3435, %v3663
      %3698 = vst.msk [vmem:[#allocation3] sm:$0xff] %vm744, %v3666
      %3699 = vst.msk [vmem:[#allocation3 + $0x8] sm:$0xff] %vm744, %v3667
      %3700 = vst.msk [vmem:[#allocation3 + $0x10] sm:$0xff] %vm744, %v3668
      %3701 = vst.msk [vmem:[#allocation3 + $0x18] sm:$0xff] %vm744, %v3669
      %3702 = vst.msk [vmem:[#allocation3 + $0x20] sm:$0xff] %vm744, %v3670
      %3703 = vst.msk [vmem:[#allocation3 + $0x28] sm:$0xff] %vm744, %v3671
      %3704 = vst.msk [vmem:[#allocation3 + $0x30] sm:$0xff] %vm744, %v3672
      %3705 = vst.msk [vmem:[#allocation3 + $0x38] sm:$0xff] %vm744, %v3673
      %3706 = vst.msk [vmem:[#allocation3 + $0x40] sm:$0xff] %vm744, %v3674
      %3707 = vst.msk [vmem:[#allocation3 + $0x48] sm:$0xff] %vm744, %v3675
      %3708 = vst.msk [vmem:[#allocation3 + $0x50] sm:$0xff] %vm744, %v3676
      %3709 = vst.msk [vmem:[#allocation3 + $0x58] sm:$0xff] %vm744, %v3677
      %3710 = vst.msk [vmem:[#allocation3 + $0x60] sm:$0xff] %vm744, %v3678
      %3711 = vst.msk [vmem:[#allocation3 + $0x68] sm:$0xff] %vm744, %v3679
      %3712 = vst.msk [vmem:[#allocation3 + $0x70] sm:$0xff] %vm744, %v3680
      %3713 = vst.msk [vmem:[#allocation3 + $0x78] sm:$0xff] %vm744, %v3681
      %3714 = vst.msk [vmem:[#allocation3 + $0x80] sm:$0xff] %vm744, %v3682
      %3715 = vst.msk [vmem:[#allocation3 + $0x88] sm:$0xff] %vm744, %v3683
      %3716 = vst.msk [vmem:[#allocation3 + $0x90] sm:$0xff] %vm744, %v3684
      %3717 = vst.msk [vmem:[#allocation3 + $0x98] sm:$0xff] %vm744, %v3685
      %3718 = vst.msk [vmem:[#allocation3 + $0xa0] sm:$0xff] %vm744, %v3686
      %3719 = vst.msk [vmem:[#allocation3 + $0xa8] sm:$0xff] %vm744, %v3687
      %3720 = vst.msk [vmem:[#allocation3 + $0xb0] sm:$0xff] %vm744, %v3688
      %3721 = vst.msk [vmem:[#allocation3 + $0xb8] sm:$0xff] %vm744, %v3689
      %3722 = vst.msk [vmem:[#allocation3 + $0xc0] sm:$0xff] %vm744, %v3690
      %3723 = vst.msk [vmem:[#allocation3 + $0xc8] sm:$0xff] %vm744, %v3691
      %3724 = vst.msk [vmem:[#allocation3 + $0xd0] sm:$0xff] %vm744, %v3692
      %3725 = vst.msk [vmem:[#allocation3 + $0xd8] sm:$0xff] %vm744, %v3693
      %3726 = vst.msk [vmem:[#allocation3 + $0xe0] sm:$0xff] %vm744, %v3694
      %3727 = vst.msk [vmem:[#allocation3 + $0xe8] sm:$0xff] %vm744, %v3695
      %3728 = vst.msk [vmem:[#allocation3 + $0xf0] sm:$0xff] %vm744, %v3696
      %3729 = vst.msk [vmem:[#allocation3 + $0xf8] sm:$0xff] %vm744, %v3697
      %v3730 = vld [vmem:[%s3013 + $0x2] sm:$0xff]
      %v3731 = vld [vmem:[%s3013 + $0xa] sm:$0xff]
      %v3732 = vld [vmem:[%s3013 + $0x1a] sm:$0xff]
      %v3733 = vld [vmem:[%s3013 + $0x22] sm:$0xff]
      %v3734 = vld [vmem:[%s3013 + $0x32] sm:$0xff]
      %v3735 = vld [vmem:[%s3013 + $0x3a] sm:$0xff]
      %v3736 = vld [vmem:[%s3013 + $0x4a] sm:$0xff]
      %v3737 = vld [vmem:[%s3013 + $0x52] sm:$0xff]
      %v3738 = vld [vmem:[%s3013 + $0x62] sm:$0xff]
      %v3739 = vld [vmem:[%s3013 + $0x6a] sm:$0xff]
      %v3740 = vld [vmem:[%s3013 + $0x7a] sm:$0xff]
      %v3741 = vld [vmem:[%s3013 + $0x82] sm:$0xff]
      %v3742 = vld [vmem:[%s3013 + $0x92] sm:$0xff]
      %v3743 = vld [vmem:[%s3013 + $0x9a] sm:$0xff]
      %v3744 = vld [vmem:[%s3013 + $0xaa] sm:$0xff]
      %v3745 = vld [vmem:[%s3013 + $0xb2] sm:$0xff]
      %v3746 = vld [vmem:[%s3013 + $0xc2] sm:$0xff]
      %v3747 = vld [vmem:[%s3013 + $0xca] sm:$0xff]
      %v3748 = vld [vmem:[%s3013 + $0xda] sm:$0xff]
      %v3749 = vld [vmem:[%s3013 + $0xe2] sm:$0xff]
      %v3750 = vld [vmem:[%s3013 + $0xf2] sm:$0xff]
      %v3751 = vld [vmem:[%s3013 + $0xfa] sm:$0xff]
      %v3752 = vld [vmem:[%s3013 + $0x10a] sm:$0xff]
      %v3753 = vld [vmem:[%s3013 + $0x112] sm:$0xff]
      %v3754 = vld [vmem:[%s3013 + $0x122] sm:$0xff]
      %v3755 = vld [vmem:[%s3013 + $0x12a] sm:$0xff]
      %v3756 = vld [vmem:[%s3013 + $0x13a] sm:$0xff]
      %v3757 = vld [vmem:[%s3013 + $0x142] sm:$0xff]
      %v3758 = vld [vmem:[%s3013 + $0x152] sm:$0xff]
      %v3759 = vld [vmem:[%s3013 + $0x15a] sm:$0xff]
      %v3760 = vld [vmem:[%s3013 + $0x16a] sm:$0xff]
      %v3761 = vld [vmem:[%s3013 + $0x172] sm:$0xff]
      %v3762 = vld [vmem:[#allocation3] sm:$0xff]
      %v3763 = vld [vmem:[#allocation3 + $0x8] sm:$0xff]
      %v3764 = vld [vmem:[#allocation3 + $0x10] sm:$0xff]
      %v3765 = vld [vmem:[#allocation3 + $0x18] sm:$0xff]
      %v3766 = vld [vmem:[#allocation3 + $0x20] sm:$0xff]
      %v3767 = vld [vmem:[#allocation3 + $0x28] sm:$0xff]
      %v3768 = vld [vmem:[#allocation3 + $0x30] sm:$0xff]
      %v3769 = vld [vmem:[#allocation3 + $0x38] sm:$0xff]
      %v3770 = vld [vmem:[#allocation3 + $0x40] sm:$0xff]
      %v3771 = vld [vmem:[#allocation3 + $0x48] sm:$0xff]
      %v3772 = vld [vmem:[#allocation3 + $0x50] sm:$0xff]
      %v3773 = vld [vmem:[#allocation3 + $0x58] sm:$0xff]
      %v3774 = vld [vmem:[#allocation3 + $0x60] sm:$0xff]
      %v3775 = vld [vmem:[#allocation3 + $0x68] sm:$0xff]
      %v3776 = vld [vmem:[#allocation3 + $0x70] sm:$0xff]
      %v3777 = vld [vmem:[#allocation3 + $0x78] sm:$0xff]
      %v3778 = vld [vmem:[#allocation3 + $0x80] sm:$0xff]
      %v3779 = vld [vmem:[#allocation3 + $0x88] sm:$0xff]
      %v3780 = vld [vmem:[#allocation3 + $0x90] sm:$0xff]
      %v3781 = vld [vmem:[#allocation3 + $0x98] sm:$0xff]
      %v3782 = vld [vmem:[#allocation3 + $0xa0] sm:$0xff]
      %v3783 = vld [vmem:[#allocation3 + $0xa8] sm:$0xff]
      %v3784 = vld [vmem:[#allocation3 + $0xb0] sm:$0xff]
      %v3785 = vld [vmem:[#allocation3 + $0xb8] sm:$0xff]
      %v3786 = vld [vmem:[#allocation3 + $0xc0] sm:$0xff]
      %v3787 = vld [vmem:[#allocation3 + $0xc8] sm:$0xff]
      %v3788 = vld [vmem:[#allocation3 + $0xd0] sm:$0xff]
      %v3789 = vld [vmem:[#allocation3 + $0xd8] sm:$0xff]
      %v3790 = vld [vmem:[#allocation3 + $0xe0] sm:$0xff]
      %v3791 = vld [vmem:[#allocation3 + $0xe8] sm:$0xff]
      %v3792 = vld [vmem:[#allocation3 + $0xf0] sm:$0xff]
      %v3793 = vld [vmem:[#allocation3 + $0xf8] sm:$0xff]
      %v3794 = vpack.c.bf16 %v3731, %v3730
      %v3795 = vpack.c.bf16 %v3733, %v3732
      %v3796 = vpack.c.bf16 %v3735, %v3734
      %v3797 = vpack.c.bf16 %v3737, %v3736
      %v3798 = vpack.c.bf16 %v3739, %v3738
      %v3799 = vpack.c.bf16 %v3741, %v3740
      %v3800 = vpack.c.bf16 %v3743, %v3742
      %v3801 = vpack.c.bf16 %v3745, %v3744
      %v3802 = vpack.c.bf16 %v3747, %v3746
      %v3803 = vpack.c.bf16 %v3749, %v3748
      %v3804 = vpack.c.bf16 %v3751, %v3750
      %v3805 = vpack.c.bf16 %v3753, %v3752
      %v3806 = vpack.c.bf16 %v3755, %v3754
      %v3807 = vpack.c.bf16 %v3757, %v3756
      %v3808 = vpack.c.bf16 %v3759, %v3758
      %v3809 = vpack.c.bf16 %v3761, %v3760
      %s3810 = scalar_lea.vmem %s3, 8
      %v3811 = vld [vmem:[%s3810] sm:$0x1]
      %v3813 = vsel %vm744, %v3794, 0
      %v3816 = vsel %vm744, %v3795, 0
      %v3819 = vsel %vm744, %v3796, 0
      %v3822 = vsel %vm744, %v3797, 0
      %v3825 = vsel %vm744, %v3798, 0
      %v3828 = vsel %vm744, %v3799, 0
      %v3831 = vsel %vm744, %v3800, 0
      %v3834 = vsel %vm744, %v3801, 0
      %v3837 = vsel %vm744, %v3802, 0
      %v3840 = vsel %vm744, %v3803, 0
      %v3843 = vsel %vm744, %v3804, 0
      %v3846 = vsel %vm744, %v3805, 0
      %v3849 = vsel %vm744, %v3806, 0
      %v3852 = vsel %vm744, %v3807, 0
      %v3855 = vsel %vm744, %v3808, 0
      %v3858 = vsel %vm744, %v3809, 0
      %v3861 = vsel %vm994, %v3811, 0
      %3863 = vmatprep.subr.bf16.mxu0 0
      %3864 = vmatpush1.bf16.msra.mxu0 %v3861
      %3865 = vmatprep.subr.bf16.mxu0 0
      %3866 = vmatpush1.bf16.msra.mxu0 0
      %3867 = vmatprep.subr.bf16.mxu0 0
      %3868 = vmatpush1.bf16.msra.mxu0 0
      %3869 = vmatprep.subr.bf16.mxu0 0
      %3870 = vmatpush1.bf16.msra.mxu0 0
      %3871 = vmatprep.subr.bf16.mxu0 0
      %3872 = vmatpush1.bf16.msra.mxu0 0
      %3873 = vmatprep.subr.bf16.mxu0 0
      %3874 = vmatpush1.bf16.msra.mxu0 0
      %3875 = vmatprep.subr.bf16.mxu0 0
      %3876 = vmatpush1.bf16.msra.mxu0 0
      %3877 = vmatprep.subr.bf16.mxu0 0
      %3878 = vmatpush1.bf16.msra.mxu0 0
      %3879 = vmatprep.subr.bf16.mxu0 0
      %3880 = vmatpush1.bf16.msra.mxu0 0
      %3881 = vmatprep.subr.bf16.mxu0 0
      %3882 = vmatpush1.bf16.msra.mxu0 0
      %3883 = vmatprep.subr.bf16.mxu0 0
      %3884 = vmatpush1.bf16.msra.mxu0 0
      %3885 = vmatprep.subr.bf16.mxu0 0
      %3886 = vmatpush1.bf16.msra.mxu0 0
      %3887 = vmatprep.subr.bf16.mxu0 0
      %3888 = vmatpush1.bf16.msra.mxu0 0
      %3889 = vmatprep.subr.bf16.mxu0 0
      %3890 = vmatpush1.bf16.msra.mxu0 0
      %3891 = vmatprep.subr.bf16.mxu0 0
      %3892 = vmatpush1.bf16.msra.mxu0 0
      %3893 = vmatprep.subr.bf16.mxu0 0
      %3894 = vmatpush1.bf16.msra.mxu0 0
      %3895 = vmatprep.mubr.bf16.mxu0 0
      %3896 = vmatmul.mubr.bf16.gmra.mrb[0].mxu0 %v3813
      %v3897 = vpop.f32.mrb[0].mxu0
      %v3898 = vadd.f32 0.0, %v3897
      %v3899 = vpop.f32.mrb[0].mxu0
      %v3900 = vpop.f32.mrb[0].mxu0
      %v3901 = vadd.f32 0.0, %v3900
      %v3902 = vpop.f32.mrb[0].mxu0
      %3903 = vmatprep.mubr.bf16.mxu0 0
      %3904 = vmatmul.mubr.bf16.gmra.mrb[0].mxu0 %v3816
      %v3905 = vpop.f32.mrb[0].mxu0
      %v3906 = vadd.f32 0.0, %v3905
      %v3907 = vpop.f32.mrb[0].mxu0
      %v3908 = vpop.f32.mrb[0].mxu0
      %v3909 = vadd.f32 0.0, %v3908
      %v3910 = vpop.f32.mrb[0].mxu0
      %3911 = vmatprep.mubr.bf16.mxu0 0
      %3912 = vmatmul.mubr.bf16.gmra.mrb[0].mxu0 %v3819
      %v3913 = vpop.f32.mrb[0].mxu0
      %v3914 = vadd.f32 0.0, %v3913
      %v3915 = vpop.f32.mrb[0].mxu0
      %v3916 = vpop.f32.mrb[0].mxu0
      %v3917 = vadd.f32 0.0, %v3916
      %v3918 = vpop.f32.mrb[0].mxu0
      %3919 = vmatprep.mubr.bf16.mxu0 0
      %3920 = vmatmul.mubr.bf16.gmra.mrb[0].mxu0 %v3822
      %v3921 = vpop.f32.mrb[0].mxu0
      %v3922 = vadd.f32 0.0, %v3921
      %v3923 = vpop.f32.mrb[0].mxu0
      %v3924 = vpop.f32.mrb[0].mxu0
      %v3925 = vadd.f32 0.0, %v3924
      %v3926 = vpop.f32.mrb[0].mxu0
      %3927 = vmatprep.mubr.bf16.mxu0 0
      %3928 = vmatmul.mubr.bf16.gmra.mrb[0].mxu0 %v3825
      %v3929 = vpop.f32.mrb[0].mxu0
      %v3930 = vadd.f32 0.0, %v3929
      %v3931 = vpop.f32.mrb[0].mxu0
      %v3932 = vpop.f32.mrb[0].mxu0
      %v3933 = vadd.f32 0.0, %v3932
      %v3934 = vpop.f32.mrb[0].mxu0
      %3935 = vmatprep.mubr.bf16.mxu0 0
      %3936 = vmatmul.mubr.bf16.gmra.mrb[0].mxu0 %v3828
      %v3937 = vpop.f32.mrb[0].mxu0
      %v3938 = vadd.f32 0.0, %v3937
      %v3939 = vpop.f32.mrb[0].mxu0
      %v3940 = vpop.f32.mrb[0].mxu0
      %v3941 = vadd.f32 0.0, %v3940
      %v3942 = vpop.f32.mrb[0].mxu0
      %3943 = vmatprep.mubr.bf16.mxu0 0
      %3944 = vmatmul.mubr.bf16.gmra.mrb[0].mxu0 %v3831
      %v3945 = vpop.f32.mrb[0].mxu0
      %v3946 = vadd.f32 0.0, %v3945
      %v3947 = vpop.f32.mrb[0].mxu0
      %v3948 = vpop.f32.mrb[0].mxu0
      %v3949 = vadd.f32 0.0, %v3948
      %v3950 = vpop.f32.mrb[0].mxu0
      %3951 = vmatprep.mubr.bf16.mxu0 0
      %3952 = vmatmul.mubr.bf16.gmra.mrb[0].mxu0 %v3834
      %v3953 = vpop.f32.mrb[0].mxu0
      %v3954 = vadd.f32 0.0, %v3953
      %v3955 = vpop.f32.mrb[0].mxu0
      %v3956 = vpop.f32.mrb[0].mxu0
      %v3957 = vadd.f32 0.0, %v3956
      %v3958 = vpop.f32.mrb[0].mxu0
      %3959 = vmatprep.mubr.bf16.mxu0 0
      %3960 = vmatmul.mubr.bf16.gmra.mrb[0].mxu0 %v3837
      %v3961 = vpop.f32.mrb[0].mxu0
      %v3962 = vadd.f32 0.0, %v3961
      %v3963 = vpop.f32.mrb[0].mxu0
      %v3964 = vpop.f32.mrb[0].mxu0
      %v3965 = vadd.f32 0.0, %v3964
      %v3966 = vpop.f32.mrb[0].mxu0
      %3967 = vmatprep.mubr.bf16.mxu0 0
      %3968 = vmatmul.mubr.bf16.gmra.mrb[0].mxu0 %v3840
      %v3969 = vpop.f32.mrb[0].mxu0
      %v3970 = vadd.f32 0.0, %v3969
      %v3971 = vpop.f32.mrb[0].mxu0
      %v3972 = vpop.f32.mrb[0].mxu0
      %v3973 = vadd.f32 0.0, %v3972
      %v3974 = vpop.f32.mrb[0].mxu0
      %3975 = vmatprep.mubr.bf16.mxu0 0
      %3976 = vmatmul.mubr.bf16.gmra.mrb[0].mxu0 %v3843
      %v3977 = vpop.f32.mrb[0].mxu0
      %v3978 = vadd.f32 0.0, %v3977
      %v3979 = vpop.f32.mrb[0].mxu0
      %v3980 = vpop.f32.mrb[0].mxu0
      %v3981 = vadd.f32 0.0, %v3980
      %v3982 = vpop.f32.mrb[0].mxu0
      %3983 = vmatprep.mubr.bf16.mxu0 0
      %3984 = vmatmul.mubr.bf16.gmra.mrb[0].mxu0 %v3846
      %v3985 = vpop.f32.mrb[0].mxu0
      %v3986 = vadd.f32 0.0, %v3985
      %v3987 = vpop.f32.mrb[0].mxu0
      %v3988 = vpop.f32.mrb[0].mxu0
      %v3989 = vadd.f32 0.0, %v3988
      %v3990 = vpop.f32.mrb[0].mxu0
      %3991 = vmatprep.mubr.bf16.mxu0 0
      %3992 = vmatmul.mubr.bf16.gmra.mrb[0].mxu0 %v3849
      %v3993 = vpop.f32.mrb[0].mxu0
      %v3994 = vadd.f32 0.0, %v3993
      %v3995 = vpop.f32.mrb[0].mxu0
      %v3996 = vpop.f32.mrb[0].mxu0
      %v3997 = vadd.f32 0.0, %v3996
      %v3998 = vpop.f32.mrb[0].mxu0
      %3999 = vmatprep.mubr.bf16.mxu0 0
      %4000 = vmatmul.mubr.bf16.gmra.mrb[0].mxu0 %v3852
      %v4001 = vpop.f32.mrb[0].mxu0
      %v4002 = vadd.f32 0.0, %v4001
      %v4003 = vpop.f32.mrb[0].mxu0
      %v4004 = vpop.f32.mrb[0].mxu0
      %v4005 = vadd.f32 0.0, %v4004
      %v4006 = vpop.f32.mrb[0].mxu0
      %4007 = vmatprep.mubr.bf16.mxu0 0
      %4008 = vmatmul.mubr.bf16.gmra.mrb[0].mxu0 %v3855
      %v4009 = vpop.f32.mrb[0].mxu0
      %v4010 = vadd.f32 0.0, %v4009
      %v4011 = vpop.f32.mrb[0].mxu0
      %v4012 = vpop.f32.mrb[0].mxu0
      %v4013 = vadd.f32 0.0, %v4012
      %v4014 = vpop.f32.mrb[0].mxu0
      %4015 = vmatprep.mubr.bf16.mxu0 0
      %4016 = vmatmul.mubr.bf16.gmra.mrb[0].mxu0 %v3858
      %v4017 = vpop.f32.mrb[0].mxu0
      %v4018 = vadd.f32 0.0, %v4017
      %v4019 = vpop.f32.mrb[0].mxu0
      %v4020 = vpop.f32.mrb[0].mxu0
      %v4021 = vadd.f32 0.0, %v4020
      %v4022 = vpop.f32.mrb[0].mxu0
      %4023 = vdwg.mxu0
      %v4024 = vadd.f32 %v3762, %v3898
      %v4025 = vadd.f32 %v3763, %v3901
      %v4026 = vadd.f32 %v3764, %v3906
      %v4027 = vadd.f32 %v3765, %v3909
      %v4028 = vadd.f32 %v3766, %v3914
      %v4029 = vadd.f32 %v3767, %v3917
      %v4030 = vadd.f32 %v3768, %v3922
      %v4031 = vadd.f32 %v3769, %v3925
      %v4032 = vadd.f32 %v3770, %v3930
      %v4033 = vadd.f32 %v3771, %v3933
      %v4034 = vadd.f32 %v3772, %v3938
      %v4035 = vadd.f32 %v3773, %v3941
      %v4036 = vadd.f32 %v3774, %v3946
      %v4037 = vadd.f32 %v3775, %v3949
      %v4038 = vadd.f32 %v3776, %v3954
      %v4039 = vadd.f32 %v3777, %v3957
      %v4040 = vadd.f32 %v3778, %v3962
      %v4041 = vadd.f32 %v3779, %v3965
      %v4042 = vadd.f32 %v3780, %v3970
      %v4043 = vadd.f32 %v3781, %v3973
      %v4044 = vadd.f32 %v3782, %v3978
      %v4045 = vadd.f32 %v3783, %v3981
      %v4046 = vadd.f32 %v3784, %v3986
      %v4047 = vadd.f32 %v3785, %v3989
      %v4048 = vadd.f32 %v3786, %v3994
      %v4049 = vadd.f32 %v3787, %v3997
      %v4050 = vadd.f32 %v3788, %v4002
      %v4051 = vadd.f32 %v3789, %v4005
      %v4052 = vadd.f32 %v3790, %v4010
      %v4053 = vadd.f32 %v3791, %v4013
      %v4054 = vadd.f32 %v3792, %v4018
      %v4055 = vadd.f32 %v3793, %v4021
      %4056 = vst.msk [vmem:[#allocation3] sm:$0xff] %vm744, %v4024
      %4057 = vst.msk [vmem:[#allocation3 + $0x8] sm:$0xff] %vm744, %v4025
      %4058 = vst.msk [vmem:[#allocation3 + $0x10] sm:$0xff] %vm744, %v4026
      %4059 = vst.msk [vmem:[#allocation3 + $0x18] sm:$0xff] %vm744, %v4027
      %4060 = vst.msk [vmem:[#allocation3 + $0x20] sm:$0xff] %vm744, %v4028
      %4061 = vst.msk [vmem:[#allocation3 + $0x28] sm:$0xff] %vm744, %v4029
      %4062 = vst.msk [vmem:[#allocation3 + $0x30] sm:$0xff] %vm744, %v4030
      %4063 = vst.msk [vmem:[#allocation3 + $0x38] sm:$0xff] %vm744, %v4031
      %4064 = vst.msk [vmem:[#allocation3 + $0x40] sm:$0xff] %vm744, %v4032
      %4065 = vst.msk [vmem:[#allocation3 + $0x48] sm:$0xff] %vm744, %v4033
      %4066 = vst.msk [vmem:[#allocation3 + $0x50] sm:$0xff] %vm744, %v4034
      %4067 = vst.msk [vmem:[#allocation3 + $0x58] sm:$0xff] %vm744, %v4035
      %4068 = vst.msk [vmem:[#allocation3 + $0x60] sm:$0xff] %vm744, %v4036
      %4069 = vst.msk [vmem:[#allocation3 + $0x68] sm:$0xff] %vm744, %v4037
      %4070 = vst.msk [vmem:[#allocation3 + $0x70] sm:$0xff] %vm744, %v4038
      %4071 = vst.msk [vmem:[#allocation3 + $0x78] sm:$0xff] %vm744, %v4039
      %4072 = vst.msk [vmem:[#allocation3 + $0x80] sm:$0xff] %vm744, %v4040
      %4073 = vst.msk [vmem:[#allocation3 + $0x88] sm:$0xff] %vm744, %v4041
      %4074 = vst.msk [vmem:[#allocation3 + $0x90] sm:$0xff] %vm744, %v4042
      %4075 = vst.msk [vmem:[#allocation3 + $0x98] sm:$0xff] %vm744, %v4043
      %4076 = vst.msk [vmem:[#allocation3 + $0xa0] sm:$0xff] %vm744, %v4044
      %4077 = vst.msk [vmem:[#allocation3 + $0xa8] sm:$0xff] %vm744, %v4045
      %4078 = vst.msk [vmem:[#allocation3 + $0xb0] sm:$0xff] %vm744, %v4046
      %4079 = vst.msk [vmem:[#allocation3 + $0xb8] sm:$0xff] %vm744, %v4047
      %4080 = vst.msk [vmem:[#allocation3 + $0xc0] sm:$0xff] %vm744, %v4048
      %4081 = vst.msk [vmem:[#allocation3 + $0xc8] sm:$0xff] %vm744, %v4049
      %4082 = vst.msk [vmem:[#allocation3 + $0xd0] sm:$0xff] %vm744, %v4050
      %4083 = vst.msk [vmem:[#allocation3 + $0xd8] sm:$0xff] %vm744, %v4051
      %4084 = vst.msk [vmem:[#allocation3 + $0xe0] sm:$0xff] %vm744, %v4052
      %4085 = vst.msk [vmem:[#allocation3 + $0xe8] sm:$0xff] %vm744, %v4053
      %4086 = vst.msk [vmem:[#allocation3 + $0xf0] sm:$0xff] %vm744, %v4054
      %4087 = vst.msk [vmem:[#allocation3 + $0xf8] sm:$0xff] %vm744, %v4055
      %v4088 = vld [vmem:[#allocation3] sm:$0xff]
      %v4089 = vld [vmem:[#allocation3 + $0x8] sm:$0xff]
      %v4090 = vld [vmem:[#allocation3 + $0x10] sm:$0xff]
      %v4091 = vld [vmem:[#allocation3 + $0x18] sm:$0xff]
      %v4092 = vld [vmem:[#allocation3 + $0x20] sm:$0xff]
      %v4093 = vld [vmem:[#allocation3 + $0x28] sm:$0xff]
      %v4094 = vld [vmem:[#allocation3 + $0x30] sm:$0xff]
      %v4095 = vld [vmem:[#allocation3 + $0x38] sm:$0xff]
      %v4096 = vld [vmem:[#allocation3 + $0x40] sm:$0xff]
      %v4097 = vld [vmem:[#allocation3 + $0x48] sm:$0xff]
      %v4098 = vld [vmem:[#allocation3 + $0x50] sm:$0xff]
      %v4099 = vld [vmem:[#allocation3 + $0x58] sm:$0xff]
      %v4100 = vld [vmem:[#allocation3 + $0x60] sm:$0xff]
      %v4101 = vld [vmem:[#allocation3 + $0x68] sm:$0xff]
      %v4102 = vld [vmem:[#allocation3 + $0x70] sm:$0xff]
      %v4103 = vld [vmem:[#allocation3 + $0x78] sm:$0xff]
      %v4104 = vld [vmem:[#allocation3 + $0x80] sm:$0xff]
      %v4105 = vld [vmem:[#allocation3 + $0x88] sm:$0xff]
      %v4106 = vld [vmem:[#allocation3 + $0x90] sm:$0xff]
      %v4107 = vld [vmem:[#allocation3 + $0x98] sm:$0xff]
      %v4108 = vld [vmem:[#allocation3 + $0xa0] sm:$0xff]
      %v4109 = vld [vmem:[#allocation3 + $0xa8] sm:$0xff]
      %v4110 = vld [vmem:[#allocation3 + $0xb0] sm:$0xff]
      %v4111 = vld [vmem:[#allocation3 + $0xb8] sm:$0xff]
      %v4112 = vld [vmem:[#allocation3 + $0xc0] sm:$0xff]
      %v4113 = vld [vmem:[#allocation3 + $0xc8] sm:$0xff]
      %v4114 = vld [vmem:[#allocation3 + $0xd0] sm:$0xff]
      %v4115 = vld [vmem:[#allocation3 + $0xd8] sm:$0xff]
      %v4116 = vld [vmem:[#allocation3 + $0xe0] sm:$0xff]
      %v4117 = vld [vmem:[#allocation3 + $0xe8] sm:$0xff]
      %v4118 = vld [vmem:[#allocation3 + $0xf0] sm:$0xff]
      %v4119 = vld [vmem:[#allocation3 + $0xf8] sm:$0xff]
      %v4120 = vld [vmem:[%s4] sm:$0x1]
      %v4122 = vlaneseq
      %v4123 = vshrl.u32 %v4122, 7
      %v4124 = vsub.s32 0, %v4123
      %v4125 = vrot.slane %v4120, %v4124
      %v4127 = vadd.f32 %v4088, %v4125
      %v4128 = vadd.f32 %v4089, %v4125
      %v4129 = vadd.f32 %v4090, %v4125
      %v4130 = vadd.f32 %v4091, %v4125
      %v4131 = vadd.f32 %v4092, %v4125
      %v4132 = vadd.f32 %v4093, %v4125
      %v4133 = vadd.f32 %v4094, %v4125
      %v4134 = vadd.f32 %v4095, %v4125
      %v4135 = vadd.f32 %v4096, %v4125
      %v4136 = vadd.f32 %v4097, %v4125
      %v4137 = vadd.f32 %v4098, %v4125
      %v4138 = vadd.f32 %v4099, %v4125
      %v4139 = vadd.f32 %v4100, %v4125
      %v4140 = vadd.f32 %v4101, %v4125
      %v4141 = vadd.f32 %v4102, %v4125
      %v4142 = vadd.f32 %v4103, %v4125
      %v4143 = vadd.f32 %v4104, %v4125
      %v4144 = vadd.f32 %v4105, %v4125
      %v4145 = vadd.f32 %v4106, %v4125
      %v4146 = vadd.f32 %v4107, %v4125
      %v4147 = vadd.f32 %v4108, %v4125
      %v4148 = vadd.f32 %v4109, %v4125
      %v4149 = vadd.f32 %v4110, %v4125
      %v4150 = vadd.f32 %v4111, %v4125
      %v4151 = vadd.f32 %v4112, %v4125
      %v4152 = vadd.f32 %v4113, %v4125
      %v4153 = vadd.f32 %v4114, %v4125
      %v4154 = vadd.f32 %v4115, %v4125
      %v4155 = vadd.f32 %v4116, %v4125
      %v4156 = vadd.f32 %v4117, %v4125
      %v4157 = vadd.f32 %v4118, %v4125
      %v4158 = vadd.f32 %v4119, %v4125
      %v4159 = vmax.f32 %v4127, 0.0
      %v4160 = vmax.f32 %v4128, 0.0
      %v4161 = vmax.f32 %v4129, 0.0
      %v4162 = vmax.f32 %v4130, 0.0
      %v4163 = vmax.f32 %v4131, 0.0
      %v4164 = vmax.f32 %v4132, 0.0
      %v4165 = vmax.f32 %v4133, 0.0
      %v4166 = vmax.f32 %v4134, 0.0
      %v4167 = vmax.f32 %v4135, 0.0
      %v4168 = vmax.f32 %v4136, 0.0
      %v4169 = vmax.f32 %v4137, 0.0
      %v4170 = vmax.f32 %v4138, 0.0
      %v4171 = vmax.f32 %v4139, 0.0
      %v4172 = vmax.f32 %v4140, 0.0
      %v4173 = vmax.f32 %v4141, 0.0
      %v4174 = vmax.f32 %v4142, 0.0
      %v4175 = vmax.f32 %v4143, 0.0
      %v4176 = vmax.f32 %v4144, 0.0
      %v4177 = vmax.f32 %v4145, 0.0
      %v4178 = vmax.f32 %v4146, 0.0
      %v4179 = vmax.f32 %v4147, 0.0
      %v4180 = vmax.f32 %v4148, 0.0
      %v4181 = vmax.f32 %v4149, 0.0
      %v4182 = vmax.f32 %v4150, 0.0
      %v4183 = vmax.f32 %v4151, 0.0
      %v4184 = vmax.f32 %v4152, 0.0
      %v4185 = vmax.f32 %v4153, 0.0
      %v4186 = vmax.f32 %v4154, 0.0
      %v4187 = vmax.f32 %v4155, 0.0
      %v4188 = vmax.f32 %v4156, 0.0
      %v4189 = vmax.f32 %v4157, 0.0
      %v4190 = vmax.f32 %v4158, 0.0
      %v4191 = vpack.c.bf16 %v4160, %v4159
      %v4192 = vpack.c.bf16 %v4162, %v4161
      %v4193 = vpack.c.bf16 %v4164, %v4163
      %v4194 = vpack.c.bf16 %v4166, %v4165
      %v4195 = vpack.c.bf16 %v4168, %v4167
      %v4196 = vpack.c.bf16 %v4170, %v4169
      %v4197 = vpack.c.bf16 %v4172, %v4171
      %v4198 = vpack.c.bf16 %v4174, %v4173
      %v4199 = vpack.c.bf16 %v4176, %v4175
      %v4200 = vpack.c.bf16 %v4178, %v4177
      %v4201 = vpack.c.bf16 %v4180, %v4179
      %v4202 = vpack.c.bf16 %v4182, %v4181
      %v4203 = vpack.c.bf16 %v4184, %v4183
      %v4204 = vpack.c.bf16 %v4186, %v4185
      %v4205 = vpack.c.bf16 %v4188, %v4187
      %v4206 = vpack.c.bf16 %v4190, %v4189
      %v4207 = vld [vmem:[%s5] sm:$0x1]
      %v4208 = vld [vmem:[%s6] sm:$0x1]
      %v4210 = vlaneseq
      %v4211 = vshrl.u32 %v4210, 7
      %v4212 = vsub.s32 0, %v4211
      %v4213 = vrot.slane %v4208, %v4212
      %v4216 = vsel %vm744, %v4191, 0
      %v4219 = vsel %vm744, %v4192, 0
      %v4222 = vsel %vm744, %v4193, 0
      %v4225 = vsel %vm744, %v4194, 0
      %v4228 = vsel %vm744, %v4195, 0
      %v4231 = vsel %vm744, %v4196, 0
      %v4234 = vsel %vm744, %v4197, 0
      %v4237 = vsel %vm744, %v4198, 0
      %v4240 = vsel %vm744, %v4199, 0
      %v4243 = vsel %vm744, %v4200, 0
      %v4246 = vsel %vm744, %v4201, 0
      %v4249 = vsel %vm744, %v4202, 0
      %v4252 = vsel %vm744, %v4203, 0
      %v4255 = vsel %vm744, %v4204, 0
      %v4258 = vsel %vm744, %v4205, 0
      %v4261 = vsel %vm744, %v4206, 0
      %v4264 = vsel %vm994, %v4207, 0
      %4266 = vmatprep.subr.bf16.mxu0 0
      %4267 = vmatpush1.bf16.msra.mxu0 %v4264
      %4268 = vmatprep.subr.bf16.mxu0 0
      %4269 = vmatpush1.bf16.msra.mxu0 0
      %4270 = vmatprep.subr.bf16.mxu0 0
      %4271 = vmatpush1.bf16.msra.mxu0 0
      %4272 = vmatprep.subr.bf16.mxu0 0
      %4273 = vmatpush1.bf16.msra.mxu0 0
      %4274 = vmatprep.subr.bf16.mxu0 0
      %4275 = vmatpush1.bf16.msra.mxu0 0
      %4276 = vmatprep.subr.bf16.mxu0 0
      %4277 = vmatpush1.bf16.msra.mxu0 0
      %4278 = vmatprep.subr.bf16.mxu0 0
      %4279 = vmatpush1.bf16.msra.mxu0 0
      %4280 = vmatprep.subr.bf16.mxu0 0
      %4281 = vmatpush1.bf16.msra.mxu0 0
      %4282 = vmatprep.subr.bf16.mxu0 0
      %4283 = vmatpush1.bf16.msra.mxu0 0
      %4284 = vmatprep.subr.bf16.mxu0 0
      %4285 = vmatpush1.bf16.msra.mxu0 0
      %4286 = vmatprep.subr.bf16.mxu0 0
      %4287 = vmatpush1.bf16.msra.mxu0 0
      %4288 = vmatprep.subr.bf16.mxu0 0
      %4289 = vmatpush1.bf16.msra.mxu0 0
      %4290 = vmatprep.subr.bf16.mxu0 0
      %4291 = vmatpush1.bf16.msra.mxu0 0
      %4292 = vmatprep.subr.bf16.mxu0 0
      %4293 = vmatpush1.bf16.msra.mxu0 0
      %4294 = vmatprep.subr.bf16.mxu0 0
      %4295 = vmatpush1.bf16.msra.mxu0 0
      %4296 = vmatprep.subr.bf16.mxu0 0
      %4297 = vmatpush1.bf16.msra.mxu0 0
      %4298 = vmatprep.mubr.bf16.mxu0 0
      %4299 = vmatmul.mubr.bf16.gmra.mrb[0].mxu0 %v4216
      %v4300 = vpop.f32.mrb[0].mxu0
      %v4301 = vadd.f32 %v4213, %v4300
      %v4302 = vpop.f32.mrb[0].mxu0
      %v4303 = vpop.f32.mrb[0].mxu0
      %v4304 = vadd.f32 %v4213, %v4303
      %v4305 = vpop.f32.mrb[0].mxu0
      %4306 = vmatprep.mubr.bf16.mxu0 0
      %4307 = vmatmul.mubr.bf16.gmra.mrb[0].mxu0 %v4219
      %v4308 = vpop.f32.mrb[0].mxu0
      %v4309 = vadd.f32 %v4213, %v4308
      %v4310 = vpop.f32.mrb[0].mxu0
      %v4311 = vpop.f32.mrb[0].mxu0
      %v4312 = vadd.f32 %v4213, %v4311
      %v4313 = vpop.f32.mrb[0].mxu0
      %4314 = vmatprep.mubr.bf16.mxu0 0
      %4315 = vmatmul.mubr.bf16.gmra.mrb[0].mxu0 %v4222
      %v4316 = vpop.f32.mrb[0].mxu0
      %v4317 = vadd.f32 %v4213, %v4316
      %v4318 = vpop.f32.mrb[0].mxu0
      %v4319 = vpop.f32.mrb[0].mxu0
      %v4320 = vadd.f32 %v4213, %v4319
      %v4321 = vpop.f32.mrb[0].mxu0
      %4322 = vmatprep.mubr.bf16.mxu0 0
      %4323 = vmatmul.mubr.bf16.gmra.mrb[0].mxu0 %v4225
      %v4324 = vpop.f32.mrb[0].mxu0
      %v4325 = vadd.f32 %v4213, %v4324
      %v4326 = vpop.f32.mrb[0].mxu0
      %v4327 = vpop.f32.mrb[0].mxu0
      %v4328 = vadd.f32 %v4213, %v4327
      %v4329 = vpop.f32.mrb[0].mxu0
      %4330 = vmatprep.mubr.bf16.mxu0 0
      %4331 = vmatmul.mubr.bf16.gmra.mrb[0].mxu0 %v4228
      %v4332 = vpop.f32.mrb[0].mxu0
      %v4333 = vadd.f32 %v4213, %v4332
      %v4334 = vpop.f32.mrb[0].mxu0
      %v4335 = vpop.f32.mrb[0].mxu0
      %v4336 = vadd.f32 %v4213, %v4335
      %v4337 = vpop.f32.mrb[0].mxu0
      %4338 = vmatprep.mubr.bf16.mxu0 0
      %4339 = vmatmul.mubr.bf16.gmra.mrb[0].mxu0 %v4231
      %v4340 = vpop.f32.mrb[0].mxu0
      %v4341 = vadd.f32 %v4213, %v4340
      %v4342 = vpop.f32.mrb[0].mxu0
      %v4343 = vpop.f32.mrb[0].mxu0
      %v4344 = vadd.f32 %v4213, %v4343
      %v4345 = vpop.f32.mrb[0].mxu0
      %4346 = vmatprep.mubr.bf16.mxu0 0
      %4347 = vmatmul.mubr.bf16.gmra.mrb[0].mxu0 %v4234
      %v4348 = vpop.f32.mrb[0].mxu0
      %v4349 = vadd.f32 %v4213, %v4348
      %v4350 = vpop.f32.mrb[0].mxu0
      %v4351 = vpop.f32.mrb[0].mxu0
      %v4352 = vadd.f32 %v4213, %v4351
      %v4353 = vpop.f32.mrb[0].mxu0
      %4354 = vmatprep.mubr.bf16.mxu0 0
      %4355 = vmatmul.mubr.bf16.gmra.mrb[0].mxu0 %v4237
      %v4356 = vpop.f32.mrb[0].mxu0
      %v4357 = vadd.f32 %v4213, %v4356
      %v4358 = vpop.f32.mrb[0].mxu0
      %v4359 = vpop.f32.mrb[0].mxu0
      %v4360 = vadd.f32 %v4213, %v4359
      %v4361 = vpop.f32.mrb[0].mxu0
      %4362 = vmatprep.mubr.bf16.mxu0 0
      %4363 = vmatmul.mubr.bf16.gmra.mrb[0].mxu0 %v4240
      %v4364 = vpop.f32.mrb[0].mxu0
      %v4365 = vadd.f32 %v4213, %v4364
      %v4366 = vpop.f32.mrb[0].mxu0
      %v4367 = vpop.f32.mrb[0].mxu0
      %v4368 = vadd.f32 %v4213, %v4367
      %v4369 = vpop.f32.mrb[0].mxu0
      %4370 = vmatprep.mubr.bf16.mxu0 0
      %4371 = vmatmul.mubr.bf16.gmra.mrb[0].mxu0 %v4243
      %v4372 = vpop.f32.mrb[0].mxu0
      %v4373 = vadd.f32 %v4213, %v4372
      %v4374 = vpop.f32.mrb[0].mxu0
      %v4375 = vpop.f32.mrb[0].mxu0
      %v4376 = vadd.f32 %v4213, %v4375
      %v4377 = vpop.f32.mrb[0].mxu0
      %4378 = vmatprep.mubr.bf16.mxu0 0
      %4379 = vmatmul.mubr.bf16.gmra.mrb[0].mxu0 %v4246
      %v4380 = vpop.f32.mrb[0].mxu0
      %v4381 = vadd.f32 %v4213, %v4380
      %v4382 = vpop.f32.mrb[0].mxu0
      %v4383 = vpop.f32.mrb[0].mxu0
      %v4384 = vadd.f32 %v4213, %v4383
      %v4385 = vpop.f32.mrb[0].mxu0
      %4386 = vmatprep.mubr.bf16.mxu0 0
      %4387 = vmatmul.mubr.bf16.gmra.mrb[0].mxu0 %v4249
      %v4388 = vpop.f32.mrb[0].mxu0
      %v4389 = vadd.f32 %v4213, %v4388
      %v4390 = vpop.f32.mrb[0].mxu0
      %v4391 = vpop.f32.mrb[0].mxu0
      %v4392 = vadd.f32 %v4213, %v4391
      %v4393 = vpop.f32.mrb[0].mxu0
      %4394 = vmatprep.mubr.bf16.mxu0 0
      %4395 = vmatmul.mubr.bf16.gmra.mrb[0].mxu0 %v4252
      %v4396 = vpop.f32.mrb[0].mxu0
      %v4397 = vadd.f32 %v4213, %v4396
      %v4398 = vpop.f32.mrb[0].mxu0
      %v4399 = vpop.f32.mrb[0].mxu0
      %v4400 = vadd.f32 %v4213, %v4399
      %v4401 = vpop.f32.mrb[0].mxu0
      %4402 = vmatprep.mubr.bf16.mxu0 0
      %4403 = vmatmul.mubr.bf16.gmra.mrb[0].mxu0 %v4255
      %v4404 = vpop.f32.mrb[0].mxu0
      %v4405 = vadd.f32 %v4213, %v4404
      %v4406 = vpop.f32.mrb[0].mxu0
      %v4407 = vpop.f32.mrb[0].mxu0
      %v4408 = vadd.f32 %v4213, %v4407
      %v4409 = vpop.f32.mrb[0].mxu0
      %4410 = vmatprep.mubr.bf16.mxu0 0
      %4411 = vmatmul.mubr.bf16.gmra.mrb[0].mxu0 %v4258
      %v4412 = vpop.f32.mrb[0].mxu0
      %v4413 = vadd.f32 %v4213, %v4412
      %v4414 = vpop.f32.mrb[0].mxu0
      %v4415 = vpop.f32.mrb[0].mxu0
      %v4416 = vadd.f32 %v4213, %v4415
      %v4417 = vpop.f32.mrb[0].mxu0
      %4418 = vmatprep.mubr.bf16.mxu0 0
      %4419 = vmatmul.mubr.bf16.gmra.mrb[0].mxu0 %v4261
      %v4420 = vpop.f32.mrb[0].mxu0
      %v4421 = vadd.f32 %v4213, %v4420
      %v4422 = vpop.f32.mrb[0].mxu0
      %v4423 = vpop.f32.mrb[0].mxu0
      %v4424 = vadd.f32 %v4213, %v4423
      %v4425 = vpop.f32.mrb[0].mxu0
      %4426 = vdwg.mxu0
      %vm4427 = vcmask 64512
      %v4428 = vsel %vm4427, %v4301, 0.0
      %v4429 = vsel %vm4427, %v4304, 0.0
      %v4430 = vadd.f32 %v4428, %v4429
      %v4431 = vsel %vm4427, %v4309, 0.0
      %v4432 = vadd.f32 %v4430, %v4431
      %v4433 = vsel %vm4427, %v4312, 0.0
      %v4434 = vadd.f32 %v4432, %v4433
      %v4435 = vsel %vm4427, %v4317, 0.0
      %v4436 = vadd.f32 %v4434, %v4435
      %v4437 = vsel %vm4427, %v4320, 0.0
      %v4438 = vadd.f32 %v4436, %v4437
      %v4439 = vsel %vm4427, %v4325, 0.0
      %v4440 = vadd.f32 %v4438, %v4439
      %v4441 = vsel %vm4427, %v4328, 0.0
      %v4442 = vadd.f32 %v4440, %v4441
      %v4443 = vsel %vm4427, %v4333, 0.0
      %v4444 = vadd.f32 %v4442, %v4443
      %v4445 = vsel %vm4427, %v4336, 0.0
      %v4446 = vadd.f32 %v4444, %v4445
      %v4447 = vsel %vm4427, %v4341, 0.0
      %v4448 = vadd.f32 %v4446, %v4447
      %v4449 = vsel %vm4427, %v4344, 0.0
      %v4450 = vadd.f32 %v4448, %v4449
      %v4451 = vsel %vm4427, %v4349, 0.0
      %v4452 = vadd.f32 %v4450, %v4451
      %v4453 = vsel %vm4427, %v4352, 0.0
      %v4454 = vadd.f32 %v4452, %v4453
      %v4455 = vsel %vm4427, %v4357, 0.0
      %v4456 = vadd.f32 %v4454, %v4455
      %v4457 = vsel %vm4427, %v4360, 0.0
      %v4458 = vadd.f32 %v4456, %v4457
      %v4459 = vsel %vm4427, %v4365, 0.0
      %v4460 = vadd.f32 %v4458, %v4459
      %v4461 = vsel %vm4427, %v4368, 0.0
      %v4462 = vadd.f32 %v4460, %v4461
      %v4463 = vsel %vm4427, %v4373, 0.0
      %v4464 = vadd.f32 %v4462, %v4463
      %v4465 = vsel %vm4427, %v4376, 0.0
      %v4466 = vadd.f32 %v4464, %v4465
      %v4467 = vsel %vm4427, %v4381, 0.0
      %v4468 = vadd.f32 %v4466, %v4467
      %v4469 = vsel %vm4427, %v4384, 0.0
      %v4470 = vadd.f32 %v4468, %v4469
      %v4471 = vsel %vm4427, %v4389, 0.0
      %v4472 = vadd.f32 %v4470, %v4471
      %v4473 = vsel %vm4427, %v4392, 0.0
      %v4474 = vadd.f32 %v4472, %v4473
      %v4475 = vsel %vm4427, %v4397, 0.0
      %v4476 = vadd.f32 %v4474, %v4475
      %v4477 = vsel %vm4427, %v4400, 0.0
      %v4478 = vadd.f32 %v4476, %v4477
      %v4479 = vsel %vm4427, %v4405, 0.0
      %v4480 = vadd.f32 %v4478, %v4479
      %v4481 = vsel %vm4427, %v4408, 0.0
      %v4482 = vadd.f32 %v4480, %v4481
      %v4483 = vsel %vm4427, %v4413, 0.0
      %v4484 = vadd.f32 %v4482, %v4483
      %v4485 = vsel %vm4427, %v4416, 0.0
      %v4486 = vadd.f32 %v4484, %v4485
      %v4487 = vsel %vm4427, %v4421, 0.0
      %v4488 = vadd.f32 %v4486, %v4487
      %v4489 = vsel %vm4427, %v4424, 0.0
      %v4490 = vadd.f32 %v4488, %v4489
      %v4491 = vrot.slane %v4490, 4
      %v4492 = vadd.f32 %v4490, %v4491
      %v4493 = vrot.slane %v4492, 2
      %v4494 = vadd.f32 %v4492, %v4493
      %v4495 = vrot.slane %v4494, 1
      %v4496 = vadd.f32 %v4494, %v4495
      %v4497 = vmul.f32 %v4496, 0.00390625
      %v4498 = vpack.c.bf16 %v4497, %v4497
      %v4499 = vld [vmem:[%s9] sm:$0xf]
      %v4500 = vld [vmem:[%s10] sm:$0x1]
      %v4502 = vsel %vm4427, %v4498, 0
      %vm4504 = vcmask 1043456
      %v4506 = vsel %vm4504, %v4499, 0
      %4508 = vmatprep.subr.bf16.mxu0 0
      %4509 = vmatpush1.bf16.msra.mxu0 %v4506
      %4510 = vmatprep.subr.bf16.mxu0 0
      %4511 = vmatpush1.bf16.msra.mxu0 0
      %4512 = vmatprep.subr.bf16.mxu0 0
      %4513 = vmatpush1.bf16.msra.mxu0 0
      %4514 = vmatprep.subr.bf16.mxu0 0
      %4515 = vmatpush1.bf16.msra.mxu0 0
      %4516 = vmatprep.subr.bf16.mxu0 0
      %4517 = vmatpush1.bf16.msra.mxu0 0
      %4518 = vmatprep.subr.bf16.mxu0 0
      %4519 = vmatpush1.bf16.msra.mxu0 0
      %4520 = vmatprep.subr.bf16.mxu0 0
      %4521 = vmatpush1.bf16.msra.mxu0 0
      %4522 = vmatprep.subr.bf16.mxu0 0
      %4523 = vmatpush1.bf16.msra.mxu0 0
      %4524 = vmatprep.subr.bf16.mxu0 0
      %4525 = vmatpush1.bf16.msra.mxu0 0
      %4526 = vmatprep.subr.bf16.mxu0 0
      %4527 = vmatpush1.bf16.msra.mxu0 0
      %4528 = vmatprep.subr.bf16.mxu0 0
      %4529 = vmatpush1.bf16.msra.mxu0 0
      %4530 = vmatprep.subr.bf16.mxu0 0
      %4531 = vmatpush1.bf16.msra.mxu0 0
      %4532 = vmatprep.subr.bf16.mxu0 0
      %4533 = vmatpush1.bf16.msra.mxu0 0
      %4534 = vmatprep.subr.bf16.mxu0 0
      %4535 = vmatpush1.bf16.msra.mxu0 0
      %4536 = vmatprep.subr.bf16.mxu0 0
      %4537 = vmatpush1.bf16.msra.mxu0 0
      %4538 = vmatprep.subr.bf16.mxu0 0
      %4539 = vmatpush1.bf16.msra.mxu0 0
      %4540 = vmatprep.mubr.bf16.mxu0 0
      %4541 = vmatmul.mubr.bf16.gmra.mrb[0].mxu0 %v4502
      %v4542 = vpop.f32.mrb[0].mxu0
      %v4543 = vadd.f32 %v4500, %v4542
      %v4544 = vpop.f32.mrb[0].mxu0
      %v4545 = vpop.f32.mrb[0].mxu0
      %v4546 = vpop.f32.mrb[0].mxu0
      %4547 = vdwg.mxu0
      %v4548 = vmax.f32 %v4543, 0.0
      %v4549 = vpack.c.bf16 %v4548, %v4548
      %v4550 = vld [vmem:[%s11] sm:$0x1]
      %v4551 = vld [vmem:[%s12] sm:$0x1]
      %v4553 = vsel %vm744, %v4549, 0
      %v4556 = vsel %vm994, %v4550, 0
      %4558 = vmatprep.subr.bf16.mxu0 0
      %4559 = vmatpush1.bf16.msra.mxu0 %v4556
      %4560 = vmatprep.subr.bf16.mxu0 0
      %4561 = vmatpush1.bf16.msra.mxu0 0
      %4562 = vmatprep.subr.bf16.mxu0 0
      %4563 = vmatpush1.bf16.msra.mxu0 0
      %4564 = vmatprep.subr.bf16.mxu0 0
      %4565 = vmatpush1.bf16.msra.mxu0 0
      %4566 = vmatprep.subr.bf16.mxu0 0
      %4567 = vmatpush1.bf16.msra.mxu0 0
      %4568 = vmatprep.subr.bf16.mxu0 0
      %4569 = vmatpush1.bf16.msra.mxu0 0
      %4570 = vmatprep.subr.bf16.mxu0 0
      %4571 = vmatpush1.bf16.msra.mxu0 0
      %4572 = vmatprep.subr.bf16.mxu0 0
      %4573 = vmatpush1.bf16.msra.mxu0 0
      %4574 = vmatprep.subr.bf16.mxu0 0
      %4575 = vmatpush1.bf16.msra.mxu0 0
      %4576 = vmatprep.subr.bf16.mxu0 0
      %4577 = vmatpush1.bf16.msra.mxu0 0
      %4578 = vmatprep.subr.bf16.mxu0 0
      %4579 = vmatpush1.bf16.msra.mxu0 0
      %4580 = vmatprep.subr.bf16.mxu0 0
      %4581 = vmatpush1.bf16.msra.mxu0 0
      %4582 = vmatprep.subr.bf16.mxu0 0
      %4583 = vmatpush1.bf16.msra.mxu0 0
      %4584 = vmatprep.subr.bf16.mxu0 0
      %4585 = vmatpush1.bf16.msra.mxu0 0
      %4586 = vmatprep.subr.bf16.mxu0 0
      %4587 = vmatpush1.bf16.msra.mxu0 0
      %4588 = vmatprep.subr.bf16.mxu0 0
      %4589 = vmatpush1.bf16.msra.mxu0 0
      %4590 = vmatprep.mubr.bf16.mxu0 0
      %4591 = vmatmul.mubr.bf16.gmra.mrb[0].mxu0 %v4553
      %v4592 = vpop.f32.mrb[0].mxu0
      %v4593 = vadd.f32 %v4551, %v4592
      %v4594 = vpop.f32.mrb[0].mxu0
      %v4595 = vpop.f32.mrb[0].mxu0
      %v4596 = vpop.f32.mrb[0].mxu0
      %4597 = vdwg.mxu0
      %v4598 = vsub.f32 0.0, %v4593
      %v4599 = vmul.f32 %v4598, 1.442695
      %v4600 = vpow.pop %v4599
      %v4601 = vadd.f32 %v4600, 1.0
      %v4602 = vrcp.pop %v4601
      %v4603 = vmul.f32 1.0, %v4602
      %v4604 = vld [vmem:[%s7] sm:$0x3]
      %v4605 = vld [vmem:[%s8] sm:$0x1]
      %v4607 = vlaneseq
      %v4608 = vshrl.u32 %v4607, 7
      %v4609 = vsub.s32 0, %v4608
      %v4610 = vrot.slane %v4605, %v4609
      %v4613 = vsel %vm547, %v4604, 0
      %4615 = vmatprep.subr.bf16.mxu0 0
      %4616 = vmatpush1.bf16.msra.mxu0 %v4613
      %4617 = vmatprep.subr.bf16.mxu0 0
      %4618 = vmatpush1.bf16.msra.mxu0 0
      %4619 = vmatprep.subr.bf16.mxu0 0
      %4620 = vmatpush1.bf16.msra.mxu0 0
      %4621 = vmatprep.subr.bf16.mxu0 0
      %4622 = vmatpush1.bf16.msra.mxu0 0
      %4623 = vmatprep.subr.bf16.mxu0 0
      %4624 = vmatpush1.bf16.msra.mxu0 0
      %4625 = vmatprep.subr.bf16.mxu0 0
      %4626 = vmatpush1.bf16.msra.mxu0 0
      %4627 = vmatprep.subr.bf16.mxu0 0
      %4628 = vmatpush1.bf16.msra.mxu0 0
      %4629 = vmatprep.subr.bf16.mxu0 0
      %4630 = vmatpush1.bf16.msra.mxu0 0
      %4631 = vmatprep.subr.bf16.mxu0 0
      %4632 = vmatpush1.bf16.msra.mxu0 0
      %4633 = vmatprep.subr.bf16.mxu0 0
      %4634 = vmatpush1.bf16.msra.mxu0 0
      %4635 = vmatprep.subr.bf16.mxu0 0
      %4636 = vmatpush1.bf16.msra.mxu0 0
      %4637 = vmatprep.subr.bf16.mxu0 0
      %4638 = vmatpush1.bf16.msra.mxu0 0
      %4639 = vmatprep.subr.bf16.mxu0 0
      %4640 = vmatpush1.bf16.msra.mxu0 0
      %4641 = vmatprep.subr.bf16.mxu0 0
      %4642 = vmatpush1.bf16.msra.mxu0 0
      %4643 = vmatprep.subr.bf16.mxu0 0
      %4644 = vmatpush1.bf16.msra.mxu0 0
      %4645 = vmatprep.subr.bf16.mxu0 0
      %4646 = vmatpush1.bf16.msra.mxu0 0
      %4647 = vmatprep.mubr.bf16.mxu0 0
      %4648 = vmatmul.mubr.bf16.gmra.mrb[0].mxu0 %v500
      %v4649 = vpop.f32.mrb[0].mxu0
      %v4650 = vadd.f32 %v4610, %v4649
      %v4651 = vpop.f32.mrb[0].mxu0
      %v4652 = vpop.f32.mrb[0].mxu0
      %v4653 = vadd.f32 %v4610, %v4652
      %v4654 = vpop.f32.mrb[0].mxu0
      %4655 = vmatprep.mubr.bf16.mxu0 0
      %4656 = vmatmul.mubr.bf16.gmra.mrb[0].mxu0 %v503
      %v4657 = vpop.f32.mrb[0].mxu0
      %v4658 = vadd.f32 %v4610, %v4657
      %v4659 = vpop.f32.mrb[0].mxu0
      %v4660 = vpop.f32.mrb[0].mxu0
      %v4661 = vadd.f32 %v4610, %v4660
      %v4662 = vpop.f32.mrb[0].mxu0
      %4663 = vmatprep.mubr.bf16.mxu0 0
      %4664 = vmatmul.mubr.bf16.gmra.mrb[0].mxu0 %v506
      %v4665 = vpop.f32.mrb[0].mxu0
      %v4666 = vadd.f32 %v4610, %v4665
      %v4667 = vpop.f32.mrb[0].mxu0
      %v4668 = vpop.f32.mrb[0].mxu0
      %v4669 = vadd.f32 %v4610, %v4668
      %v4670 = vpop.f32.mrb[0].mxu0
      %4671 = vmatprep.mubr.bf16.mxu0 0
      %4672 = vmatmul.mubr.bf16.gmra.mrb[0].mxu0 %v509
      %v4673 = vpop.f32.mrb[0].mxu0
      %v4674 = vadd.f32 %v4610, %v4673
      %v4675 = vpop.f32.mrb[0].mxu0
      %v4676 = vpop.f32.mrb[0].mxu0
      %v4677 = vadd.f32 %v4610, %v4676
      %v4678 = vpop.f32.mrb[0].mxu0
      %4679 = vmatprep.mubr.bf16.mxu0 0
      %4680 = vmatmul.mubr.bf16.gmra.mrb[0].mxu0 %v512
      %v4681 = vpop.f32.mrb[0].mxu0
      %v4682 = vadd.f32 %v4610, %v4681
      %v4683 = vpop.f32.mrb[0].mxu0
      %v4684 = vpop.f32.mrb[0].mxu0
      %v4685 = vadd.f32 %v4610, %v4684
      %v4686 = vpop.f32.mrb[0].mxu0
      %4687 = vmatprep.mubr.bf16.mxu0 0
      %4688 = vmatmul.mubr.bf16.gmra.mrb[0].mxu0 %v515
      %v4689 = vpop.f32.mrb[0].mxu0
      %v4690 = vadd.f32 %v4610, %v4689
      %v4691 = vpop.f32.mrb[0].mxu0
      %v4692 = vpop.f32.mrb[0].mxu0
      %v4693 = vadd.f32 %v4610, %v4692
      %v4694 = vpop.f32.mrb[0].mxu0
      %4695 = vmatprep.mubr.bf16.mxu0 0
      %4696 = vmatmul.mubr.bf16.gmra.mrb[0].mxu0 %v518
      %v4697 = vpop.f32.mrb[0].mxu0
      %v4698 = vadd.f32 %v4610, %v4697
      %v4699 = vpop.f32.mrb[0].mxu0
      %v4700 = vpop.f32.mrb[0].mxu0
      %v4701 = vadd.f32 %v4610, %v4700
      %v4702 = vpop.f32.mrb[0].mxu0
      %4703 = vmatprep.mubr.bf16.mxu0 0
      %4704 = vmatmul.mubr.bf16.gmra.mrb[0].mxu0 %v521
      %v4705 = vpop.f32.mrb[0].mxu0
      %v4706 = vadd.f32 %v4610, %v4705
      %v4707 = vpop.f32.mrb[0].mxu0
      %v4708 = vpop.f32.mrb[0].mxu0
      %v4709 = vadd.f32 %v4610, %v4708
      %v4710 = vpop.f32.mrb[0].mxu0
      %4711 = vmatprep.mubr.bf16.mxu0 0
      %4712 = vmatmul.mubr.bf16.gmra.mrb[0].mxu0 %v524
      %v4713 = vpop.f32.mrb[0].mxu0
      %v4714 = vadd.f32 %v4610, %v4713
      %v4715 = vpop.f32.mrb[0].mxu0
      %v4716 = vpop.f32.mrb[0].mxu0
      %v4717 = vadd.f32 %v4610, %v4716
      %v4718 = vpop.f32.mrb[0].mxu0
      %4719 = vmatprep.mubr.bf16.mxu0 0
      %4720 = vmatmul.mubr.bf16.gmra.mrb[0].mxu0 %v527
      %v4721 = vpop.f32.mrb[0].mxu0
      %v4722 = vadd.f32 %v4610, %v4721
      %v4723 = vpop.f32.mrb[0].mxu0
      %v4724 = vpop.f32.mrb[0].mxu0
      %v4725 = vadd.f32 %v4610, %v4724
      %v4726 = vpop.f32.mrb[0].mxu0
      %4727 = vmatprep.mubr.bf16.mxu0 0
      %4728 = vmatmul.mubr.bf16.gmra.mrb[0].mxu0 %v530
      %v4729 = vpop.f32.mrb[0].mxu0
      %v4730 = vadd.f32 %v4610, %v4729
      %v4731 = vpop.f32.mrb[0].mxu0
      %v4732 = vpop.f32.mrb[0].mxu0
      %v4733 = vadd.f32 %v4610, %v4732
      %v4734 = vpop.f32.mrb[0].mxu0
      %4735 = vmatprep.mubr.bf16.mxu0 0
      %4736 = vmatmul.mubr.bf16.gmra.mrb[0].mxu0 %v533
      %v4737 = vpop.f32.mrb[0].mxu0
      %v4738 = vadd.f32 %v4610, %v4737
      %v4739 = vpop.f32.mrb[0].mxu0
      %v4740 = vpop.f32.mrb[0].mxu0
      %v4741 = vadd.f32 %v4610, %v4740
      %v4742 = vpop.f32.mrb[0].mxu0
      %4743 = vmatprep.mubr.bf16.mxu0 0
      %4744 = vmatmul.mubr.bf16.gmra.mrb[0].mxu0 %v536
      %v4745 = vpop.f32.mrb[0].mxu0
      %v4746 = vadd.f32 %v4610, %v4745
      %v4747 = vpop.f32.mrb[0].mxu0
      %v4748 = vpop.f32.mrb[0].mxu0
      %v4749 = vadd.f32 %v4610, %v4748
      %v4750 = vpop.f32.mrb[0].mxu0
      %4751 = vmatprep.mubr.bf16.mxu0 0
      %4752 = vmatmul.mubr.bf16.gmra.mrb[0].mxu0 %v539
      %v4753 = vpop.f32.mrb[0].mxu0
      %v4754 = vadd.f32 %v4610, %v4753
      %v4755 = vpop.f32.mrb[0].mxu0
      %v4756 = vpop.f32.mrb[0].mxu0
      %v4757 = vadd.f32 %v4610, %v4756
      %v4758 = vpop.f32.mrb[0].mxu0
      %4759 = vmatprep.mubr.bf16.mxu0 0
      %4760 = vmatmul.mubr.bf16.gmra.mrb[0].mxu0 %v542
      %v4761 = vpop.f32.mrb[0].mxu0
      %v4762 = vadd.f32 %v4610, %v4761
      %v4763 = vpop.f32.mrb[0].mxu0
      %v4764 = vpop.f32.mrb[0].mxu0
      %v4765 = vadd.f32 %v4610, %v4764
      %v4766 = vpop.f32.mrb[0].mxu0
      %4767 = vmatprep.mubr.bf16.mxu0 0
      %4768 = vmatmul.mubr.bf16.gmra.mrb[0].mxu0 %v545
      %v4769 = vpop.f32.mrb[0].mxu0
      %v4770 = vadd.f32 %v4610, %v4769
      %v4771 = vpop.f32.mrb[0].mxu0
      %v4772 = vpop.f32.mrb[0].mxu0
      %v4773 = vadd.f32 %v4610, %v4772
      %v4774 = vpop.f32.mrb[0].mxu0
      %4775 = vdwg.mxu0
      %v4776 = vlaneseq
      %v4777 = vshrl.u32 %v4776, 7
      %v4778 = vsub.s32 0, %v4777
      %v4779 = vrot.slane %v4603, %v4778
      %v4780 = vmul.f32 %v4301, %v4779
      %v4781 = vmul.f32 %v4304, %v4779
      %v4782 = vmul.f32 %v4309, %v4779
      %v4783 = vmul.f32 %v4312, %v4779
      %v4784 = vmul.f32 %v4317, %v4779
      %v4785 = vmul.f32 %v4320, %v4779
      %v4786 = vmul.f32 %v4325, %v4779
      %v4787 = vmul.f32 %v4328, %v4779
      %v4788 = vmul.f32 %v4333, %v4779
      %v4789 = vmul.f32 %v4336, %v4779
      %v4790 = vmul.f32 %v4341, %v4779
      %v4791 = vmul.f32 %v4344, %v4779
      %v4792 = vmul.f32 %v4349, %v4779
      %v4793 = vmul.f32 %v4352, %v4779
      %v4794 = vmul.f32 %v4357, %v4779
      %v4795 = vmul.f32 %v4360, %v4779
      %v4796 = vmul.f32 %v4365, %v4779
      %v4797 = vmul.f32 %v4368, %v4779
      %v4798 = vmul.f32 %v4373, %v4779
      %v4799 = vmul.f32 %v4376, %v4779
      %v4800 = vmul.f32 %v4381, %v4779
      %v4801 = vmul.f32 %v4384, %v4779
      %v4802 = vmul.f32 %v4389, %v4779
      %v4803 = vmul.f32 %v4392, %v4779
      %v4804 = vmul.f32 %v4397, %v4779
      %v4805 = vmul.f32 %v4400, %v4779
      %v4806 = vmul.f32 %v4405, %v4779
      %v4807 = vmul.f32 %v4408, %v4779
      %v4808 = vmul.f32 %v4413, %v4779
      %v4809 = vmul.f32 %v4416, %v4779
      %v4810 = vmul.f32 %v4421, %v4779
      %v4811 = vmul.f32 %v4424, %v4779
      %v4812 = vadd.f32 %v4780, %v4650
      %v4813 = vadd.f32 %v4781, %v4653
      %v4814 = vadd.f32 %v4782, %v4658
      %v4815 = vadd.f32 %v4783, %v4661
      %v4816 = vadd.f32 %v4784, %v4666
      %v4817 = vadd.f32 %v4785, %v4669
      %v4818 = vadd.f32 %v4786, %v4674
      %v4819 = vadd.f32 %v4787, %v4677
      %v4820 = vadd.f32 %v4788, %v4682
      %v4821 = vadd.f32 %v4789, %v4685
      %v4822 = vadd.f32 %v4790, %v4690
      %v4823 = vadd.f32 %v4791, %v4693
      %v4824 = vadd.f32 %v4792, %v4698
      %v4825 = vadd.f32 %v4793, %v4701
      %v4826 = vadd.f32 %v4794, %v4706
      %v4827 = vadd.f32 %v4795, %v4709
      %v4828 = vadd.f32 %v4796, %v4714
      %v4829 = vadd.f32 %v4797, %v4717
      %v4830 = vadd.f32 %v4798, %v4722
      %v4831 = vadd.f32 %v4799, %v4725
      %v4832 = vadd.f32 %v4800, %v4730
      %v4833 = vadd.f32 %v4801, %v4733
      %v4834 = vadd.f32 %v4802, %v4738
      %v4835 = vadd.f32 %v4803, %v4741
      %v4836 = vadd.f32 %v4804, %v4746
      %v4837 = vadd.f32 %v4805, %v4749
      %v4838 = vadd.f32 %v4806, %v4754
      %v4839 = vadd.f32 %v4807, %v4757
      %v4840 = vadd.f32 %v4808, %v4762
      %v4841 = vadd.f32 %v4809, %v4765
      %v4842 = vadd.f32 %v4810, %v4770
      %v4843 = vadd.f32 %v4811, %v4773
      %v4844 = vmax.f32 %v4812, 0.0
      %v4845 = vmax.f32 %v4813, 0.0
      %v4846 = vmax.f32 %v4814, 0.0
      %v4847 = vmax.f32 %v4815, 0.0
      %v4848 = vmax.f32 %v4816, 0.0
      %v4849 = vmax.f32 %v4817, 0.0
      %v4850 = vmax.f32 %v4818, 0.0
      %v4851 = vmax.f32 %v4819, 0.0
      %v4852 = vmax.f32 %v4820, 0.0
      %v4853 = vmax.f32 %v4821, 0.0
      %v4854 = vmax.f32 %v4822, 0.0
      %v4855 = vmax.f32 %v4823, 0.0
      %v4856 = vmax.f32 %v4824, 0.0
      %v4857 = vmax.f32 %v4825, 0.0
      %v4858 = vmax.f32 %v4826, 0.0
      %v4859 = vmax.f32 %v4827, 0.0
      %v4860 = vmax.f32 %v4828, 0.0
      %v4861 = vmax.f32 %v4829, 0.0
      %v4862 = vmax.f32 %v4830, 0.0
      %v4863 = vmax.f32 %v4831, 0.0
      %v4864 = vmax.f32 %v4832, 0.0
      %v4865 = vmax.f32 %v4833, 0.0
      %v4866 = vmax.f32 %v4834, 0.0
      %v4867 = vmax.f32 %v4835, 0.0
      %v4868 = vmax.f32 %v4836, 0.0
      %v4869 = vmax.f32 %v4837, 0.0
      %v4870 = vmax.f32 %v4838, 0.0
      %v4871 = vmax.f32 %v4839, 0.0
      %v4872 = vmax.f32 %v4840, 0.0
      %v4873 = vmax.f32 %v4841, 0.0
      %v4874 = vmax.f32 %v4842, 0.0
      %v4875 = vmax.f32 %v4843, 0.0
      %4876 = vst.msk [vmem:[%s440] sm:$0xff] %vm4427, %v4844
      %4877 = vst.msk [vmem:[%s440 + $0x8] sm:$0xff] %vm4427, %v4845
      %4878 = vst.msk [vmem:[%s440 + $0x10] sm:$0xff] %vm4427, %v4846
      %4879 = vst.msk [vmem:[%s440 + $0x18] sm:$0xff] %vm4427, %v4847
      %4880 = vst.msk [vmem:[%s440 + $0x20] sm:$0xff] %vm4427, %v4848
      %4881 = vst.msk [vmem:[%s440 + $0x28] sm:$0xff] %vm4427, %v4849
      %4882 = vst.msk [vmem:[%s440 + $0x30] sm:$0xff] %vm4427, %v4850
      %4883 = vst.msk [vmem:[%s440 + $0x38] sm:$0xff] %vm4427, %v4851
      %4884 = vst.msk [vmem:[%s440 + $0x40] sm:$0xff] %vm4427, %v4852
      %4885 = vst.msk [vmem:[%s440 + $0x48] sm:$0xff] %vm4427, %v4853
      %4886 = vst.msk [vmem:[%s440 + $0x50] sm:$0xff] %vm4427, %v4854
      %4887 = vst.msk [vmem:[%s440 + $0x58] sm:$0xff] %vm4427, %v4855
      %4888 = vst.msk [vmem:[%s440 + $0x60] sm:$0xff] %vm4427, %v4856
      %4889 = vst.msk [vmem:[%s440 + $0x68] sm:$0xff] %vm4427, %v4857
      %4890 = vst.msk [vmem:[%s440 + $0x70] sm:$0xff] %vm4427, %v4858
      %4891 = vst.msk [vmem:[%s440 + $0x78] sm:$0xff] %vm4427, %v4859
      %4892 = vst.msk [vmem:[%s440 + $0x80] sm:$0xff] %vm4427, %v4860
      %4893 = vst.msk [vmem:[%s440 + $0x88] sm:$0xff] %vm4427, %v4861
      %4894 = vst.msk [vmem:[%s440 + $0x90] sm:$0xff] %vm4427, %v4862
      %4895 = vst.msk [vmem:[%s440 + $0x98] sm:$0xff] %vm4427, %v4863
      %4896 = vst.msk [vmem:[%s440 + $0xa0] sm:$0xff] %vm4427, %v4864
      %4897 = vst.msk [vmem:[%s440 + $0xa8] sm:$0xff] %vm4427, %v4865
      %4898 = vst.msk [vmem:[%s440 + $0xb0] sm:$0xff] %vm4427, %v4866
      %4899 = vst.msk [vmem:[%s440 + $0xb8] sm:$0xff] %vm4427, %v4867
      %4900 = vst.msk [vmem:[%s440 + $0xc0] sm:$0xff] %vm4427, %v4868
      %4901 = vst.msk [vmem:[%s440 + $0xc8] sm:$0xff] %vm4427, %v4869
      %4902 = vst.msk [vmem:[%s440 + $0xd0] sm:$0xff] %vm4427, %v4870
      %4903 = vst.msk [vmem:[%s440 + $0xd8] sm:$0xff] %vm4427, %v4871
      %4904 = vst.msk [vmem:[%s440 + $0xe0] sm:$0xff] %vm4427, %v4872
      %4905 = vst.msk [vmem:[%s440 + $0xe8] sm:$0xff] %vm4427, %v4873
      %4906 = vst.msk [vmem:[%s440 + $0xf0] sm:$0xff] %vm4427, %v4874
      %4907 = vst.msk [vmem:[%s440 + $0xf8] sm:$0xff] %vm4427, %v4875
      %p4908 = scmp.lt.s32.totalorder %s24, 1
      %s4909 = scalar_select %p4908, %s24, 1
      %s4910 = smul.addr %s4909, 32
      %s4911 = smul.addr %s4910, 8
      %s4912 = scalar_lea.vmem %s13, %s4911
      // Predicated region
      $region73: #{tpu_custom_call.1} parent=71 // pred_check
        %p4913 = pneg %p320
      $region74: #{tpu_custom_call.1} parent=71 // pred_check_branch
        %4915 = sbr.rel (%p4913) target = $region76
      $region75: #{tpu_custom_call.1} parent=71 // pred_region
        _
      $region76: #{tpu_custom_call.1} parent=71 // pred_fallthru
        _
    $region72: #{tpu_custom_call.1} parent=5 // pred_fallthru
      _
    %p4916 = scmp.le.s32.totalorder 2, %s19
    // Predicated region
    $region77: #{tpu_custom_call.1} parent=5 // pred_check
      %p4917 = pneg %p4916
    $region78: #{tpu_custom_call.1} parent=5 // pred_check_branch
      %4919 = sbr.rel (%p4917) target = $region80
    $region79: #{tpu_custom_call.1} parent=5 // pred_region
      %s4920 = ssub.s32 %s19, 2
      // Predicated region
      $region81: #{tpu_custom_call.1} parent=79 // pred_check
        %p4921 = pneg %p326
      $region82: #{tpu_custom_call.1} parent=79 // pred_check_branch
        %4923 = sbr.rel (%p4921) target = $region84
      $region83: #{tpu_custom_call.1} parent=79 // pred_region
        %p4924 = scmp.lt.s32.totalorder %s25, 1
        %s4925 = scalar_select %p4924, %s25, 1
        %s4926 = smul.addr %s4925, 32
        %s4927 = smul.addr %s4926, 8
        %s4928 = scalar_lea.vmem %s13, %s4927
      $region84: #{tpu_custom_call.1} parent=79 // pred_fallthru
        _
    $region80: #{tpu_custom_call.1} parent=5 // pred_fallthru
      _
  $region6: #{tpu_custom_call.1} parent=0 // loop_footer
    %s23 = sadd.s32 1, %s19
  $region7: #{tpu_custom_call.1} parent=0 // loop_footer_branch
    %18 = sbr.rel target = $region3
  $region8: #{tpu_custom_call.1} parent=0 // loop_exit
    _

</llo_original>
